<compile_context>
chip_gen: v7x
topology: tpu7x:2x2x1
jax: 0.10.0
libtpu: 0.0.40
codegen_flags: <defaults>
</compile_context>

<pallas_src>
import functools

import jax
import jax.numpy as jnp
from jax.experimental import pallas as pl
from jax.experimental.pallas import tpu as pltpu

CP = 128  # channel padding = TPU lane width


# -----------------------------------------------------------------------------
# Fused TCN kernel: all layers for one batch element, activations stay in VMEM.
# -----------------------------------------------------------------------------
def _tcn_fused_kernel(dilations, alphas, has_proj, T, maxpad,
                      x_ref, w1_ref, w2_ref, s1_ref, s2_ref,
                      rw_ref, rb_ref, o_ref, xp_ref):
    # x_ref : (1, T, CP)      f32  input, channels zero-padded to CP
    # w1_ref: (L, 3, CP, CP)  bf16 conv1 weights, tap-major, BN scale folded in
    # w2_ref: (L, 3, CP, CP)  bf16 conv2 weights
    # s1_ref: (L, 1, CP)      f32  per-channel shift (conv bias + BN folded)
    # s2_ref: (L, 1, CP)      f32
    # rw_ref: (CP, CP)        bf16 1x1 residual projection (layer 0 only)
    # rb_ref: (1, CP)         f32
    # o_ref : (1, T, CP)      f32
    # xp_ref: (T + 2*maxpad, CP) f32 scratch; boundary rows stay zero and act as
    #         the temporal zero-padding for every dilated conv.
    xp_ref[...] = jnp.zeros(xp_ref.shape, xp_ref.dtype)
    act = x_ref[0]                                # (T, CP) f32

    def dilated_conv(a_f32, w_ref, l, d):
        # write the activation into the middle rows of the pre-zeroed scratch;
        # rows [maxpad-d, maxpad) and [maxpad+T, maxpad+T+d) are always zero.
        xp_ref[pl.ds(maxpad, T), :] = a_f32
        acc = jnp.zeros((T, CP), jnp.float32)
        for k in range(3):                        # static unrolled taps
            off = maxpad + (k - 1) * d            # static offset
            xk = xp_ref[pl.ds(off, T), :].astype(jnp.bfloat16)
            acc = acc + jnp.dot(xk, w_ref[l, k],
                                preferred_element_type=jnp.float32)
        return acc

    for l, d in enumerate(dilations):             # static unroll over layers
        a1, a2, a3 = alphas[l]
        # Conv1d -> BN(folded) -> PReLU
        h = dilated_conv(act, w1_ref, l, d) + s1_ref[l]
        h = jnp.where(h > 0, h, a1 * h)
        # Conv1d -> BN(folded) -> PReLU -> (Dropout = id) -> PReLU
        # (the final PReLU sits inside conv_block in the spec, before the
        #  residual add — intentionally kept here, not after the add)
        h = dilated_conv(h, w2_ref, l, d) + s2_ref[l]
        h = jnp.where(h > 0, h, a2 * h)
        h = jnp.where(h > 0, h, a3 * h)
        # residual: 1x1 conv projection when C_in != C_out (layer 0), else id.
        if has_proj[l]:
            res = jnp.dot(act.astype(jnp.bfloat16), rw_ref[...],
                          preferred_element_type=jnp.float32) + rb_ref[...]
        else:
            res = act
        act = res + h

    o_ref[0] = act.astype(o_ref.dtype)


def tcn_forward(x, params, dilations, alphas, hidden_dim):
    """x: (B, S, E) exactly like the PyTorch module input.
    Returns (B, hidden_dim, S) to match the PyTorch output (channels-first)."""
    B, T, E = x.shape
    L = len(dilations)
    maxpad = max(dilations)
    has_proj = tuple((l == 0) and (E != hidden_dim) for l in range(L))

    # one tiny host-side channel pad to the lane width (16 KB total)
    xp = jnp.zeros((B, T, CP), jnp.float32).at[:, :, :E].set(x)

    kernel = functools.partial(_tcn_fused_kernel, tuple(dilations),
                               tuple(alphas), has_proj, T, maxpad)
    out = pl.pallas_call(
        kernel,
        out_shape=jax.ShapeDtypeStruct((B, T, CP), jnp.float32),
        grid=(B,),
        in_specs=[
            pl.BlockSpec((1, T, CP), lambda b: (b, 0, 0)),         # x
            pl.BlockSpec((L, 3, CP, CP), lambda b: (0, 0, 0, 0)),  # w1 (all layers)
            pl.BlockSpec((L, 3, CP, CP), lambda b: (0, 0, 0, 0)),  # w2 (all layers)
            pl.BlockSpec((L, 1, CP), lambda b: (0, 0, 0)),         # shift1
            pl.BlockSpec((L, 1, CP), lambda b: (0, 0, 0)),         # shift2
            pl.BlockSpec((CP, CP), lambda b: (0, 0)),              # res proj W
            pl.BlockSpec((1, CP), lambda b: (0, 0)),               # res proj b
        ],
        out_specs=pl.BlockSpec((1, T, CP), lambda b: (b, 0, 0)),
        scratch_shapes=[pltpu.VMEM((T + 2 * maxpad, CP), jnp.float32)],
        compiler_params=pltpu.CompilerParams(
            dimension_semantics=("parallel",)),    # v7x: one batch elem per TC
    )(xp, params["w1"], params["w2"], params["s1"], params["s2"],
      params["res_w"], params["res_b"])

    # drop the channel padding, back to PyTorch channels-first (B, C, T)
    return jnp.transpose(out[:, :, :hidden_dim], (0, 2, 1))
    # TODO(synk): TCN.avg_pool (AdaptiveAvgPool1d) is defined in __init__ but
    # never used in TCN.forward, so it is intentionally not implemented.


# -----------------------------------------------------------------------------
# Parameter construction (deterministic, synthetic; BN folded, padded, stacked)
# -----------------------------------------------------------------------------
def make_tcn_params(key, input_dim, hidden_dim, num_layers):
    eps = 1e-5
    dilations = [2 ** l for l in range(num_layers)]
    layer_keys = jax.random.split(key, num_layers)

    def conv_init(kw, kb, cin, cout, ksz):
        bound = 1.0 / float(cin * ksz) ** 0.5
        w = jax.random.uniform(kw, (cout, cin, ksz), jnp.float32, -bound, bound)
        b = jax.random.uniform(kb, (cout,), jnp.float32, -bound, bound)
        return w, b

    def bn_stats(kg, kb, km, kv, cout):
        gamma = 1.0 + 0.1 * jax.random.normal(kg, (cout,), jnp.float32)
        beta = 0.1 * jax.random.normal(kb, (cout,), jnp.float32)
        mean = 0.1 * jax.random.normal(km, (cout,), jnp.float32)
        var = 1.0 + 0.1 * jax.random.uniform(kv, (cout,), jnp.float32)
        scale = gamma / jnp.sqrt(var + eps)
        return scale, beta, mean

    def fold_pad_conv(w, b, scale, beta, mean, cin, cout):
        # (cout, cin, 3) -> (3, cin, cout); fold BN(eval) scale into weight
        # columns; zero-pad channels to CP; cast weights to bf16.
        wt = jnp.transpose(w, (2, 1, 0)) * scale[None, None, :]
        wp = jnp.zeros((3, CP, CP), jnp.float32).at[:, :cin, :cout].set(wt)
        shift = (b - mean) * scale + beta
        sp = jnp.zeros((1, CP), jnp.float32).at[0, :cout].set(shift)
        return wp.astype(jnp.bfloat16), sp

    w1s, w2s, s1s, s2s = [], [], [], []
    res_w = jnp.zeros((CP, CP), jnp.float32)
    res_b = jnp.zeros((1, CP), jnp.float32)
    for l in range(num_layers):
        cin = input_dim if l == 0 else hidden_dim
        ks = jax.random.split(layer_keys[l], 14)
        w1, b1 = conv_init(ks[0], ks[1], cin, hidden_dim, 3)
        w2, b2 = conv_init(ks[2], ks[3], hidden_dim, hidden_dim, 3)
        sc1, be1, mu1 = bn_stats(ks[4], ks[5], ks[6], ks[7], hidden_dim)
        sc2, be2, mu2 = bn_stats(ks[8], ks[9], ks[10], ks[11], hidden_dim)
        w1p, s1p = fold_pad_conv(w1, b1, sc1, be1, mu1, cin, hidden_dim)
        w2p, s2p = fold_pad_conv(w2, b2, sc2, be2, mu2, hidden_dim, hidden_dim)
        w1s.append(w1p); w2s.append(w2p); s1s.append(s1p); s2s.append(s2p)
        if l == 0 and cin != hidden_dim:   # Conv1d(cin, hidden, 1) residual proj
            wr, br = conv_init(ks[12], ks[13], cin, hidden_dim, 1)
            res_w = res_w.at[:cin, :hidden_dim].set(
                jnp.transpose(wr[:, :, 0], (1, 0)))
            res_b = res_b.at[0, :hidden_dim].set(br)

    alphas = tuple((0.25, 0.25, 0.25) for _ in range(num_layers))  # nn.PReLU() init
    params = dict(
        w1=jnp.stack(w1s),                 # (L, 3, CP, CP) bf16
        w2=jnp.stack(w2s),                 # (L, 3, CP, CP) bf16
        s1=jnp.stack(s1s),                 # (L, 1, CP)     f32
        s2=jnp.stack(s2s),                 # (L, 1, CP)     f32
        res_w=res_w.astype(jnp.bfloat16),  # (CP, CP)       bf16
        res_b=res_b,                       # (1, CP)        f32
    )
    return params, dilations, alphas


# -----------------------------------------------------------------------------
if __name__ == "__main__":
    B, S = 2, 16
    input_dim, hidden_dim, num_layers = 96, 112, 4

    key = jax.random.PRNGKey(0)
    kx, kp = jax.random.split(key)
    x = jax.random.normal(kx, (B, S, input_dim), jnp.float32)

    params, dilations, alphas = make_tcn_params(kp, input_dim, hidden_dim,
                                                num_layers)
    out = tcn_forward(x, params, dilations, alphas, hidden_dim)
    out = jax.block_until_ready(out)
    assert out.shape == (B, hidden_dim, S), out.shape
    assert bool(jnp.all(jnp.isfinite(out)))
    print("KERNEL_OK")
</pallas_src>

<mosaic_0001>
module attributes {stable_mosaic.version = 11 : i64} {
  func.func @_tcn_fused_kernel(%arg0: i32, %arg1: memref<1x16x128xf32, #tpu.memory_space<vmem>>, %arg2: memref<4x3x128x128xbf16, #tpu.memory_space<vmem>>, %arg3: memref<4x3x128x128xbf16, #tpu.memory_space<vmem>>, %arg4: memref<4x1x128xf32, #tpu.memory_space<vmem>>, %arg5: memref<4x1x128xf32, #tpu.memory_space<vmem>>, %arg6: memref<128x128xbf16, #tpu.memory_space<vmem>>, %arg7: memref<1x128xf32, #tpu.memory_space<vmem>>, %arg8: memref<1x16x128xf32, #tpu.memory_space<vmem>>, %arg9: memref<32x128xf32, #tpu.memory_space<vmem>>) attributes {dimension_semantics = [#tpu.dimension_semantics<parallel>], iteration_bounds = array<i64: 2>, scalar_prefetch = 0 : i64, scratch_operands = 1 : i64, tpu.core_type = #tpu.core_type<tc>, window_params = [{transform_indices = @transform_0, window_bounds = array<i64: 1, 16, 128>}, {pipeline_mode = #tpu.pipeline_mode<synchronous>, transform_indices = @transform_1, window_bounds = array<i64: 4, 3, 128, 128>}, {pipeline_mode = #tpu.pipeline_mode<synchronous>, transform_indices = @transform_2, window_bounds = array<i64: 4, 3, 128, 128>}, {pipeline_mode = #tpu.pipeline_mode<synchronous>, transform_indices = @transform_3, window_bounds = array<i64: 4, 1, 128>}, {pipeline_mode = #tpu.pipeline_mode<synchronous>, transform_indices = @transform_4, window_bounds = array<i64: 4, 1, 128>}, {pipeline_mode = #tpu.pipeline_mode<synchronous>, transform_indices = @transform_5, window_bounds = array<i64: 128, 128>}, {pipeline_mode = #tpu.pipeline_mode<synchronous>, transform_indices = @transform_6, window_bounds = array<i64: 1, 128>}, {transform_indices = @transform_7, window_bounds = array<i64: 1, 16, 128>}]} {
    %cst = arith.constant 0.000000e+00 : f32
    %0 = vector.broadcast %cst : f32 to vector<32x128xf32>
    %c0 = arith.constant 0 : index
    %c0_0 = arith.constant 0 : index
    %1 = vector.load %arg9[%c0, %c0_0] : memref<32x128xf32, #tpu.memory_space<vmem>>, vector<32x128xf32>
    tpu.vector_store %arg9[%c0, %c0_0], %0 {strides = array<i32>} : memref<32x128xf32, #tpu.memory_space<vmem>>, vector<32x128xf32>,
    %c0_1 = arith.constant 0 : index
    %c0_2 = arith.constant 0 : index
    %c0_3 = arith.constant 0 : index
    %2 = vector.load %arg1[%c0_1, %c0_2, %c0_3] : memref<1x16x128xf32, #tpu.memory_space<vmem>>, vector<1x16x128xf32>
    %3 = vector.shape_cast %2 : vector<1x16x128xf32> to vector<16x128xf32>
    %c8 = arith.constant 8 : index
    %c0_4 = arith.constant 0 : index
    %4 = vector.load %arg9[%c8, %c0_4] : memref<32x128xf32, #tpu.memory_space<vmem>>, vector<16x128xf32>
    tpu.vector_store %arg9[%c8, %c0_4], %3 {strides = array<i32>} : memref<32x128xf32, #tpu.memory_space<vmem>>, vector<16x128xf32>,
    %cst_5 = arith.constant 0.000000e+00 : f32
    %5 = vector.broadcast %cst_5 : f32 to vector<16x128xf32>
    %c7 = arith.constant 7 : index
    %c0_6 = arith.constant 0 : index
    %6 = vector.load %arg9[%c7, %c0_6] : memref<32x128xf32, #tpu.memory_space<vmem>>, vector<16x128xf32>
    %7 = arith.truncf %6 : vector<16x128xf32> to vector<16x128xbf16>
    %c0_7 = arith.constant 0 : index
    %c0_8 = arith.constant 0 : index
    %c0_9 = arith.constant 0 : index
    %c0_10 = arith.constant 0 : index
    %8 = vector.load %arg2[%c0_7, %c0_8, %c0_9, %c0_10] : memref<4x3x128x128xbf16, #tpu.memory_space<vmem>>, vector<1x1x128x128xbf16>
    %9 = vector.shape_cast %8 : vector<1x1x128x128xbf16> to vector<128x128xbf16>
    %cst_11 = arith.constant dense<0.000000e+00> : vector<16x128xf32>
    %10 = tpu.matmul %7, %9, %cst_11 {dimension_numbers = #tpu.dot_dimension_numbers<[1], [0], [0], [1], [0, 0, 1, 1], [], []>} : vector<16x128xbf16>, vector<128x128xbf16>, vector<16x128xf32> -> vector<16x128xf32>
    %11 = arith.addf %5, %10 : vector<16x128xf32>
    %c8_12 = arith.constant 8 : index
    %c0_13 = arith.constant 0 : index
    %12 = vector.load %arg9[%c8_12, %c0_13] : memref<32x128xf32, #tpu.memory_space<vmem>>, vector<16x128xf32>
    %13 = arith.truncf %12 : vector<16x128xf32> to vector<16x128xbf16>
    %c0_14 = arith.constant 0 : index
    %c1 = arith.constant 1 : index
    %c0_15 = arith.constant 0 : index
    %c0_16 = arith.constant 0 : index
    %14 = vector.load %arg2[%c0_14, %c1, %c0_15, %c0_16] : memref<4x3x128x128xbf16, #tpu.memory_space<vmem>>, vector<1x1x128x128xbf16>
    %15 = vector.shape_cast %14 : vector<1x1x128x128xbf16> to vector<128x128xbf16>
    %cst_17 = arith.constant dense<0.000000e+00> : vector<16x128xf32>
    %16 = tpu.matmul %13, %15, %cst_17 {dimension_numbers = #tpu.dot_dimension_numbers<[1], [0], [0], [1], [0, 0, 1, 1], [], []>} : vector<16x128xbf16>, vector<128x128xbf16>, vector<16x128xf32> -> vector<16x128xf32>
    %17 = arith.addf %11, %16 : vector<16x128xf32>
    %c9 = arith.constant 9 : index
    %c0_18 = arith.constant 0 : index
    %18 = vector.load %arg9[%c9, %c0_18] : memref<32x128xf32, #tpu.memory_space<vmem>>, vector<16x128xf32>
    %19 = arith.truncf %18 : vector<16x128xf32> to vector<16x128xbf16>
    %c0_19 = arith.constant 0 : index
    %c2 = arith.constant 2 : index
    %c0_20 = arith.constant 0 : index
    %c0_21 = arith.constant 0 : index
    %20 = vector.load %arg2[%c0_19, %c2, %c0_20, %c0_21] : memref<4x3x128x128xbf16, #tpu.memory_space<vmem>>, vector<1x1x128x128xbf16>
    %21 = vector.shape_cast %20 : vector<1x1x128x128xbf16> to vector<128x128xbf16>
    %cst_22 = arith.constant dense<0.000000e+00> : vector<16x128xf32>
    %22 = tpu.matmul %19, %21, %cst_22 {dimension_numbers = #tpu.dot_dimension_numbers<[1], [0], [0], [1], [0, 0, 1, 1], [], []>} : vector<16x128xbf16>, vector<128x128xbf16>, vector<16x128xf32> -> vector<16x128xf32>
    %23 = arith.addf %17, %22 : vector<16x128xf32>
    %c0_23 = arith.constant 0 : index
    %c0_24 = arith.constant 0 : index
    %c0_25 = arith.constant 0 : index
    %24 = vector.load %arg4[%c0_23, %c0_24, %c0_25] : memref<4x1x128xf32, #tpu.memory_space<vmem>>, vector<1x1x128xf32>
    %25 = vector.shape_cast %24 : vector<1x1x128xf32> to vector<1x128xf32>
    %26 = vector.broadcast %25 : vector<1x128xf32> to vector<16x128xf32>
    %27 = arith.addf %23, %26 : vector<16x128xf32>
    %cst_26 = arith.constant 0.000000e+00 : f32
    %28 = vector.broadcast %cst_26 : f32 to vector<16x128xf32>
    %29 = arith.cmpf ogt, %27, %28 : vector<16x128xf32>
    %cst_27 = arith.constant 2.500000e-01 : f32
    %30 = vector.broadcast %cst_27 : f32 to vector<16x128xf32>
    %31 = arith.mulf %30, %27 : vector<16x128xf32>
    %32 = arith.select %29, %27, %31 : vector<16x128xi1>, vector<16x128xf32>
    %c8_28 = arith.constant 8 : index
    %c0_29 = arith.constant 0 : index
    %33 = vector.load %arg9[%c8_28, %c0_29] : memref<32x128xf32, #tpu.memory_space<vmem>>, vector<16x128xf32>
    tpu.vector_store %arg9[%c8_28, %c0_29], %32 {strides = array<i32>} : memref<32x128xf32, #tpu.memory_space<vmem>>, vector<16x128xf32>,
    %cst_30 = arith.constant 0.000000e+00 : f32
    %34 = vector.broadcast %cst_30 : f32 to vector<16x128xf32>
    %c7_31 = arith.constant 7 : index
    %c0_32 = arith.constant 0 : index
    %35 = vector.load %arg9[%c7_31, %c0_32] : memref<32x128xf32, #tpu.memory_space<vmem>>, vector<16x128xf32>
    %36 = arith.truncf %35 : vector<16x128xf32> to vector<16x128xbf16>
    %c0_33 = arith.constant 0 : index
    %c0_34 = arith.constant 0 : index
    %c0_35 = arith.constant 0 : index
    %c0_36 = arith.constant 0 : index
    %37 = vector.load %arg3[%c0_33, %c0_34, %c0_35, %c0_36] : memref<4x3x128x128xbf16, #tpu.memory_space<vmem>>, vector<1x1x128x128xbf16>
    %38 = vector.shape_cast %37 : vector<1x1x128x128xbf16> to vector<128x128xbf16>
    %cst_37 = arith.constant dense<0.000000e+00> : vector<16x128xf32>
    %39 = tpu.matmul %36, %38, %cst_37 {dimension_numbers = #tpu.dot_dimension_numbers<[1], [0], [0], [1], [0, 0, 1, 1], [], []>} : vector<16x128xbf16>, vector<128x128xbf16>, vector<16x128xf32> -> vector<16x128xf32>
    %40 = arith.addf %34, %39 : vector<16x128xf32>
    %c8_38 = arith.constant 8 : index
    %c0_39 = arith.constant 0 : index
    %41 = vector.load %arg9[%c8_38, %c0_39] : memref<32x128xf32, #tpu.memory_space<vmem>>, vector<16x128xf32>
    %42 = arith.truncf %41 : vector<16x128xf32> to vector<16x128xbf16>
    %c0_40 = arith.constant 0 : index
    %c1_41 = arith.constant 1 : index
    %c0_42 = arith.constant 0 : index
    %c0_43 = arith.constant 0 : index
    %43 = vector.load %arg3[%c0_40, %c1_41, %c0_42, %c0_43] : memref<4x3x128x128xbf16, #tpu.memory_space<vmem>>, vector<1x1x128x128xbf16>
    %44 = vector.shape_cast %43 : vector<1x1x128x128xbf16> to vector<128x128xbf16>
    %cst_44 = arith.constant dense<0.000000e+00> : vector<16x128xf32>
    %45 = tpu.matmul %42, %44, %cst_44 {dimension_numbers = #tpu.dot_dimension_numbers<[1], [0], [0], [1], [0, 0, 1, 1], [], []>} : vector<16x128xbf16>, vector<128x128xbf16>, vector<16x128xf32> -> vector<16x128xf32>
    %46 = arith.addf %40, %45 : vector<16x128xf32>
    %c9_45 = arith.constant 9 : index
    %c0_46 = arith.constant 0 : index
    %47 = vector.load %arg9[%c9_45, %c0_46] : memref<32x128xf32, #tpu.memory_space<vmem>>, vector<16x128xf32>
    %48 = arith.truncf %47 : vector<16x128xf32> to vector<16x128xbf16>
    %c0_47 = arith.constant 0 : index
    %c2_48 = arith.constant 2 : index
    %c0_49 = arith.constant 0 : index
    %c0_50 = arith.constant 0 : index
    %49 = vector.load %arg3[%c0_47, %c2_48, %c0_49, %c0_50] : memref<4x3x128x128xbf16, #tpu.memory_space<vmem>>, vector<1x1x128x128xbf16>
    %50 = vector.shape_cast %49 : vector<1x1x128x128xbf16> to vector<128x128xbf16>
    %cst_51 = arith.constant dense<0.000000e+00> : vector<16x128xf32>
    %51 = tpu.matmul %48, %50, %cst_51 {dimension_numbers = #tpu.dot_dimension_numbers<[1], [0], [0], [1], [0, 0, 1, 1], [], []>} : vector<16x128xbf16>, vector<128x128xbf16>, vector<16x128xf32> -> vector<16x128xf32>
    %52 = arith.addf %46, %51 : vector<16x128xf32>
    %c0_52 = arith.constant 0 : index
    %c0_53 = arith.constant 0 : index
    %c0_54 = arith.constant 0 : index
    %53 = vector.load %arg5[%c0_52, %c0_53, %c0_54] : memref<4x1x128xf32, #tpu.memory_space<vmem>>, vector<1x1x128xf32>
    %54 = vector.shape_cast %53 : vector<1x1x128xf32> to vector<1x128xf32>
    %55 = vector.broadcast %54 : vector<1x128xf32> to vector<16x128xf32>
    %56 = arith.addf %52, %55 : vector<16x128xf32>
    %cst_55 = arith.constant 0.000000e+00 : f32
    %57 = vector.broadcast %cst_55 : f32 to vector<16x128xf32>
    %58 = arith.cmpf ogt, %56, %57 : vector<16x128xf32>
    %cst_56 = arith.constant 2.500000e-01 : f32
    %59 = vector.broadcast %cst_56 : f32 to vector<16x128xf32>
    %60 = arith.mulf %59, %56 : vector<16x128xf32>
    %61 = arith.select %58, %56, %60 : vector<16x128xi1>, vector<16x128xf32>
    %cst_57 = arith.constant 0.000000e+00 : f32
    %62 = vector.broadcast %cst_57 : f32 to vector<16x128xf32>
    %63 = arith.cmpf ogt, %61, %62 : vector<16x128xf32>
    %cst_58 = arith.constant 2.500000e-01 : f32
    %64 = vector.broadcast %cst_58 : f32 to vector<16x128xf32>
    %65 = arith.mulf %64, %61 : vector<16x128xf32>
    %66 = arith.select %63, %61, %65 : vector<16x128xi1>, vector<16x128xf32>
    %67 = arith.truncf %3 : vector<16x128xf32> to vector<16x128xbf16>
    %c0_59 = arith.constant 0 : index
    %c0_60 = arith.constant 0 : index
    %68 = vector.load %arg6[%c0_59, %c0_60] : memref<128x128xbf16, #tpu.memory_space<vmem>>, vector<128x128xbf16>
    %cst_61 = arith.constant dense<0.000000e+00> : vector<16x128xf32>
    %69 = tpu.matmul %67, %68, %cst_61 {dimension_numbers = #tpu.dot_dimension_numbers<[1], [0], [0], [1], [0, 0, 1, 1], [], []>} : vector<16x128xbf16>, vector<128x128xbf16>, vector<16x128xf32> -> vector<16x128xf32>
    %c0_62 = arith.constant 0 : index
    %c0_63 = arith.constant 0 : index
    %70 = vector.load %arg7[%c0_62, %c0_63] : memref<1x128xf32, #tpu.memory_space<vmem>>, vector<1x128xf32>
    %71 = vector.broadcast %70 : vector<1x128xf32> to vector<16x128xf32>
    %72 = arith.addf %69, %71 : vector<16x128xf32>
    %73 = arith.addf %72, %66 : vector<16x128xf32>
    %c8_64 = arith.constant 8 : index
    %c0_65 = arith.constant 0 : index
    %74 = vector.load %arg9[%c8_64, %c0_65] : memref<32x128xf32, #tpu.memory_space<vmem>>, vector<16x128xf32>
    tpu.vector_store %arg9[%c8_64, %c0_65], %73 {strides = array<i32>} : memref<32x128xf32, #tpu.memory_space<vmem>>, vector<16x128xf32>,
    %cst_66 = arith.constant 0.000000e+00 : f32
    %75 = vector.broadcast %cst_66 : f32 to vector<16x128xf32>
    %c6 = arith.constant 6 : index
    %c0_67 = arith.constant 0 : index
    %76 = vector.load %arg9[%c6, %c0_67] : memref<32x128xf32, #tpu.memory_space<vmem>>, vector<16x128xf32>
    %77 = arith.truncf %76 : vector<16x128xf32> to vector<16x128xbf16>
    %c1_68 = arith.constant 1 : index
    %c0_69 = arith.constant 0 : index
    %c0_70 = arith.constant 0 : index
    %c0_71 = arith.constant 0 : index
    %78 = vector.load %arg2[%c1_68, %c0_69, %c0_70, %c0_71] : memref<4x3x128x128xbf16, #tpu.memory_space<vmem>>, vector<1x1x128x128xbf16>
    %79 = vector.shape_cast %78 : vector<1x1x128x128xbf16> to vector<128x128xbf16>
    %cst_72 = arith.constant dense<0.000000e+00> : vector<16x128xf32>
    %80 = tpu.matmul %77, %79, %cst_72 {dimension_numbers = #tpu.dot_dimension_numbers<[1], [0], [0], [1], [0, 0, 1, 1], [], []>} : vector<16x128xbf16>, vector<128x128xbf16>, vector<16x128xf32> -> vector<16x128xf32>
    %81 = arith.addf %75, %80 : vector<16x128xf32>
    %c8_73 = arith.constant 8 : index
    %c0_74 = arith.constant 0 : index
    %82 = vector.load %arg9[%c8_73, %c0_74] : memref<32x128xf32, #tpu.memory_space<vmem>>, vector<16x128xf32>
    %83 = arith.truncf %82 : vector<16x128xf32> to vector<16x128xbf16>
    %c1_75 = arith.constant 1 : index
    %c1_76 = arith.constant 1 : index
    %c0_77 = arith.constant 0 : index
    %c0_78 = arith.constant 0 : index
    %84 = vector.load %arg2[%c1_75, %c1_76, %c0_77, %c0_78] : memref<4x3x128x128xbf16, #tpu.memory_space<vmem>>, vector<1x1x128x128xbf16>
    %85 = vector.shape_cast %84 : vector<1x1x128x128xbf16> to vector<128x128xbf16>
    %cst_79 = arith.constant dense<0.000000e+00> : vector<16x128xf32>
    %86 = tpu.matmul %83, %85, %cst_79 {dimension_numbers = #tpu.dot_dimension_numbers<[1], [0], [0], [1], [0, 0, 1, 1], [], []>} : vector<16x128xbf16>, vector<128x128xbf16>, vector<16x128xf32> -> vector<16x128xf32>
    %87 = arith.addf %81, %86 : vector<16x128xf32>
    %c10 = arith.constant 10 : index
    %c0_80 = arith.constant 0 : index
    %88 = vector.load %arg9[%c10, %c0_80] : memref<32x128xf32, #tpu.memory_space<vmem>>, vector<16x128xf32>
    %89 = arith.truncf %88 : vector<16x128xf32> to vector<16x128xbf16>
    %c1_81 = arith.constant 1 : index
    %c2_82 = arith.constant 2 : index
    %c0_83 = arith.constant 0 : index
    %c0_84 = arith.constant 0 : index
    %90 = vector.load %arg2[%c1_81, %c2_82, %c0_83, %c0_84] : memref<4x3x128x128xbf16, #tpu.memory_space<vmem>>, vector<1x1x128x128xbf16>
    %91 = vector.shape_cast %90 : vector<1x1x128x128xbf16> to vector<128x128xbf16>
    %cst_85 = arith.constant dense<0.000000e+00> : vector<16x128xf32>
    %92 = tpu.matmul %89, %91, %cst_85 {dimension_numbers = #tpu.dot_dimension_numbers<[1], [0], [0], [1], [0, 0, 1, 1], [], []>} : vector<16x128xbf16>, vector<128x128xbf16>, vector<16x128xf32> -> vector<16x128xf32>
    %93 = arith.addf %87, %92 : vector<16x128xf32>
    %c1_86 = arith.constant 1 : index
    %c0_87 = arith.constant 0 : index
    %c0_88 = arith.constant 0 : index
    %94 = vector.load %arg4[%c1_86, %c0_87, %c0_88] : memref<4x1x128xf32, #tpu.memory_space<vmem>>, vector<1x1x128xf32>
    %95 = vector.shape_cast %94 : vector<1x1x128xf32> to vector<1x128xf32>
    %96 = vector.broadcast %95 : vector<1x128xf32> to vector<16x128xf32>
    %97 = arith.addf %93, %96 : vector<16x128xf32>
    %cst_89 = arith.constant 0.000000e+00 : f32
    %98 = vector.broadcast %cst_89 : f32 to vector<16x128xf32>
    %99 = arith.cmpf ogt, %97, %98 : vector<16x128xf32>
    %cst_90 = arith.constant 2.500000e-01 : f32
    %100 = vector.broadcast %cst_90 : f32 to vector<16x128xf32>
    %101 = arith.mulf %100, %97 : vector<16x128xf32>
    %102 = arith.select %99, %97, %101 : vector<16x128xi1>, vector<16x128xf32>
    %c8_91 = arith.constant 8 : index
    %c0_92 = arith.constant 0 : index
    %103 = vector.load %arg9[%c8_91, %c0_92] : memref<32x128xf32, #tpu.memory_space<vmem>>, vector<16x128xf32>
    tpu.vector_store %arg9[%c8_91, %c0_92], %102 {strides = array<i32>} : memref<32x128xf32, #tpu.memory_space<vmem>>, vector<16x128xf32>,
    %cst_93 = arith.constant 0.000000e+00 : f32
    %104 = vector.broadcast %cst_93 : f32 to vector<16x128xf32>
    %c6_94 = arith.constant 6 : index
    %c0_95 = arith.constant 0 : index
    %105 = vector.load %arg9[%c6_94, %c0_95] : memref<32x128xf32, #tpu.memory_space<vmem>>, vector<16x128xf32>
    %106 = arith.truncf %105 : vector<16x128xf32> to vector<16x128xbf16>
    %c1_96 = arith.constant 1 : index
    %c0_97 = arith.constant 0 : index
    %c0_98 = arith.constant 0 : index
    %c0_99 = arith.constant 0 : index
    %107 = vector.load %arg3[%c1_96, %c0_97, %c0_98, %c0_99] : memref<4x3x128x128xbf16, #tpu.memory_space<vmem>>, vector<1x1x128x128xbf16>
    %108 = vector.shape_cast %107 : vector<1x1x128x128xbf16> to vector<128x128xbf16>
    %cst_100 = arith.constant dense<0.000000e+00> : vector<16x128xf32>
    %109 = tpu.matmul %106, %108, %cst_100 {dimension_numbers = #tpu.dot_dimension_numbers<[1], [0], [0], [1], [0, 0, 1, 1], [], []>} : vector<16x128xbf16>, vector<128x128xbf16>, vector<16x128xf32> -> vector<16x128xf32>
    %110 = arith.addf %104, %109 : vector<16x128xf32>
    %c8_101 = arith.constant 8 : index
    %c0_102 = arith.constant 0 : index
    %111 = vector.load %arg9[%c8_101, %c0_102] : memref<32x128xf32, #tpu.memory_space<vmem>>, vector<16x128xf32>
    %112 = arith.truncf %111 : vector<16x128xf32> to vector<16x128xbf16>
    %c1_103 = arith.constant 1 : index
    %c1_104 = arith.constant 1 : index
    %c0_105 = arith.constant 0 : index
    %c0_106 = arith.constant 0 : index
    %113 = vector.load %arg3[%c1_103, %c1_104, %c0_105, %c0_106] : memref<4x3x128x128xbf16, #tpu.memory_space<vmem>>, vector<1x1x128x128xbf16>
    %114 = vector.shape_cast %113 : vector<1x1x128x128xbf16> to vector<128x128xbf16>
    %cst_107 = arith.constant dense<0.000000e+00> : vector<16x128xf32>
    %115 = tpu.matmul %112, %114, %cst_107 {dimension_numbers = #tpu.dot_dimension_numbers<[1], [0], [0], [1], [0, 0, 1, 1], [], []>} : vector<16x128xbf16>, vector<128x128xbf16>, vector<16x128xf32> -> vector<16x128xf32>
    %116 = arith.addf %110, %115 : vector<16x128xf32>
    %c10_108 = arith.constant 10 : index
    %c0_109 = arith.constant 0 : index
    %117 = vector.load %arg9[%c10_108, %c0_109] : memref<32x128xf32, #tpu.memory_space<vmem>>, vector<16x128xf32>
    %118 = arith.truncf %117 : vector<16x128xf32> to vector<16x128xbf16>
    %c1_110 = arith.constant 1 : index
    %c2_111 = arith.constant 2 : index
    %c0_112 = arith.constant 0 : index
    %c0_113 = arith.constant 0 : index
    %119 = vector.load %arg3[%c1_110, %c2_111, %c0_112, %c0_113] : memref<4x3x128x128xbf16, #tpu.memory_space<vmem>>, vector<1x1x128x128xbf16>
    %120 = vector.shape_cast %119 : vector<1x1x128x128xbf16> to vector<128x128xbf16>
    %cst_114 = arith.constant dense<0.000000e+00> : vector<16x128xf32>
    %121 = tpu.matmul %118, %120, %cst_114 {dimension_numbers = #tpu.dot_dimension_numbers<[1], [0], [0], [1], [0, 0, 1, 1], [], []>} : vector<16x128xbf16>, vector<128x128xbf16>, vector<16x128xf32> -> vector<16x128xf32>
    %122 = arith.addf %116, %121 : vector<16x128xf32>
    %c1_115 = arith.constant 1 : index
    %c0_116 = arith.constant 0 : index
    %c0_117 = arith.constant 0 : index
    %123 = vector.load %arg5[%c1_115, %c0_116, %c0_117] : memref<4x1x128xf32, #tpu.memory_space<vmem>>, vector<1x1x128xf32>
    %124 = vector.shape_cast %123 : vector<1x1x128xf32> to vector<1x128xf32>
    %125 = vector.broadcast %124 : vector<1x128xf32> to vector<16x128xf32>
    %126 = arith.addf %122, %125 : vector<16x128xf32>
    %cst_118 = arith.constant 0.000000e+00 : f32
    %127 = vector.broadcast %cst_118 : f32 to vector<16x128xf32>
    %128 = arith.cmpf ogt, %126, %127 : vector<16x128xf32>
    %cst_119 = arith.constant 2.500000e-01 : f32
    %129 = vector.broadcast %cst_119 : f32 to vector<16x128xf32>
    %130 = arith.mulf %129, %126 : vector<16x128xf32>
    %131 = arith.select %128, %126, %130 : vector<16x128xi1>, vector<16x128xf32>
    %cst_120 = arith.constant 0.000000e+00 : f32
    %132 = vector.broadcast %cst_120 : f32 to vector<16x128xf32>
    %133 = arith.cmpf ogt, %131, %132 : vector<16x128xf32>
    %cst_121 = arith.constant 2.500000e-01 : f32
    %134 = vector.broadcast %cst_121 : f32 to vector<16x128xf32>
    %135 = arith.mulf %134, %131 : vector<16x128xf32>
    %136 = arith.select %133, %131, %135 : vector<16x128xi1>, vector<16x128xf32>
    %137 = arith.addf %73, %136 : vector<16x128xf32>
    %c8_122 = arith.constant 8 : index
    %c0_123 = arith.constant 0 : index
    %138 = vector.load %arg9[%c8_122, %c0_123] : memref<32x128xf32, #tpu.memory_space<vmem>>, vector<16x128xf32>
    tpu.vector_store %arg9[%c8_122, %c0_123], %137 {strides = array<i32>} : memref<32x128xf32, #tpu.memory_space<vmem>>, vector<16x128xf32>,
    %cst_124 = arith.constant 0.000000e+00 : f32
    %139 = vector.broadcast %cst_124 : f32 to vector<16x128xf32>
    %c4 = arith.constant 4 : index
    %c0_125 = arith.constant 0 : index
    %140 = vector.load %arg9[%c4, %c0_125] : memref<32x128xf32, #tpu.memory_space<vmem>>, vector<16x128xf32>
    %141 = arith.truncf %140 : vector<16x128xf32> to vector<16x128xbf16>
    %c2_126 = arith.constant 2 : index
    %c0_127 = arith.constant 0 : index
    %c0_128 = arith.constant 0 : index
    %c0_129 = arith.constant 0 : index
    %142 = vector.load %arg2[%c2_126, %c0_127, %c0_128, %c0_129] : memref<4x3x128x128xbf16, #tpu.memory_space<vmem>>, vector<1x1x128x128xbf16>
    %143 = vector.shape_cast %142 : vector<1x1x128x128xbf16> to vector<128x128xbf16>
    %cst_130 = arith.constant dense<0.000000e+00> : vector<16x128xf32>
    %144 = tpu.matmul %141, %143, %cst_130 {dimension_numbers = #tpu.dot_dimension_numbers<[1], [0], [0], [1], [0, 0, 1, 1], [], []>} : vector<16x128xbf16>, vector<128x128xbf16>, vector<16x128xf32> -> vector<16x128xf32>
    %145 = arith.addf %139, %144 : vector<16x128xf32>
    %c8_131 = arith.constant 8 : index
    %c0_132 = arith.constant 0 : index
    %146 = vector.load %arg9[%c8_131, %c0_132] : memref<32x128xf32, #tpu.memory_space<vmem>>, vector<16x128xf32>
    %147 = arith.truncf %146 : vector<16x128xf32> to vector<16x128xbf16>
    %c2_133 = arith.constant 2 : index
    %c1_134 = arith.constant 1 : index
    %c0_135 = arith.constant 0 : index
    %c0_136 = arith.constant 0 : index
    %148 = vector.load %arg2[%c2_133, %c1_134, %c0_135, %c0_136] : memref<4x3x128x128xbf16, #tpu.memory_space<vmem>>, vector<1x1x128x128xbf16>
    %149 = vector.shape_cast %148 : vector<1x1x128x128xbf16> to vector<128x128xbf16>
    %cst_137 = arith.constant dense<0.000000e+00> : vector<16x128xf32>
    %150 = tpu.matmul %147, %149, %cst_137 {dimension_numbers = #tpu.dot_dimension_numbers<[1], [0], [0], [1], [0, 0, 1, 1], [], []>} : vector<16x128xbf16>, vector<128x128xbf16>, vector<16x128xf32> -> vector<16x128xf32>
    %151 = arith.addf %145, %150 : vector<16x128xf32>
    %c12 = arith.constant 12 : index
    %c0_138 = arith.constant 0 : index
    %152 = vector.load %arg9[%c12, %c0_138] : memref<32x128xf32, #tpu.memory_space<vmem>>, vector<16x128xf32>
    %153 = arith.truncf %152 : vector<16x128xf32> to vector<16x128xbf16>
    %c2_139 = arith.constant 2 : index
    %c2_140 = arith.constant 2 : index
    %c0_141 = arith.constant 0 : index
    %c0_142 = arith.constant 0 : index
    %154 = vector.load %arg2[%c2_139, %c2_140, %c0_141, %c0_142] : memref<4x3x128x128xbf16, #tpu.memory_space<vmem>>, vector<1x1x128x128xbf16>
    %155 = vector.shape_cast %154 : vector<1x1x128x128xbf16> to vector<128x128xbf16>
    %cst_143 = arith.constant dense<0.000000e+00> : vector<16x128xf32>
    %156 = tpu.matmul %153, %155, %cst_143 {dimension_numbers = #tpu.dot_dimension_numbers<[1], [0], [0], [1], [0, 0, 1, 1], [], []>} : vector<16x128xbf16>, vector<128x128xbf16>, vector<16x128xf32> -> vector<16x128xf32>
    %157 = arith.addf %151, %156 : vector<16x128xf32>
    %c2_144 = arith.constant 2 : index
    %c0_145 = arith.constant 0 : index
    %c0_146 = arith.constant 0 : index
    %158 = vector.load %arg4[%c2_144, %c0_145, %c0_146] : memref<4x1x128xf32, #tpu.memory_space<vmem>>, vector<1x1x128xf32>
    %159 = vector.shape_cast %158 : vector<1x1x128xf32> to vector<1x128xf32>
    %160 = vector.broadcast %159 : vector<1x128xf32> to vector<16x128xf32>
    %161 = arith.addf %157, %160 : vector<16x128xf32>
    %cst_147 = arith.constant 0.000000e+00 : f32
    %162 = vector.broadcast %cst_147 : f32 to vector<16x128xf32>
    %163 = arith.cmpf ogt, %161, %162 : vector<16x128xf32>
    %cst_148 = arith.constant 2.500000e-01 : f32
    %164 = vector.broadcast %cst_148 : f32 to vector<16x128xf32>
    %165 = arith.mulf %164, %161 : vector<16x128xf32>
    %166 = arith.select %163, %161, %165 : vector<16x128xi1>, vector<16x128xf32>
    %c8_149 = arith.constant 8 : index
    %c0_150 = arith.constant 0 : index
    %167 = vector.load %arg9[%c8_149, %c0_150] : memref<32x128xf32, #tpu.memory_space<vmem>>, vector<16x128xf32>
    tpu.vector_store %arg9[%c8_149, %c0_150], %166 {strides = array<i32>} : memref<32x128xf32, #tpu.memory_space<vmem>>, vector<16x128xf32>,
    %cst_151 = arith.constant 0.000000e+00 : f32
    %168 = vector.broadcast %cst_151 : f32 to vector<16x128xf32>
    %c4_152 = arith.constant 4 : index
    %c0_153 = arith.constant 0 : index
    %169 = vector.load %arg9[%c4_152, %c0_153] : memref<32x128xf32, #tpu.memory_space<vmem>>, vector<16x128xf32>
    %170 = arith.truncf %169 : vector<16x128xf32> to vector<16x128xbf16>
    %c2_154 = arith.constant 2 : index
    %c0_155 = arith.constant 0 : index
    %c0_156 = arith.constant 0 : index
    %c0_157 = arith.constant 0 : index
    %171 = vector.load %arg3[%c2_154, %c0_155, %c0_156, %c0_157] : memref<4x3x128x128xbf16, #tpu.memory_space<vmem>>, vector<1x1x128x128xbf16>
    %172 = vector.shape_cast %171 : vector<1x1x128x128xbf16> to vector<128x128xbf16>
    %cst_158 = arith.constant dense<0.000000e+00> : vector<16x128xf32>
    %173 = tpu.matmul %170, %172, %cst_158 {dimension_numbers = #tpu.dot_dimension_numbers<[1], [0], [0], [1], [0, 0, 1, 1], [], []>} : vector<16x128xbf16>, vector<128x128xbf16>, vector<16x128xf32> -> vector<16x128xf32>
    %174 = arith.addf %168, %173 : vector<16x128xf32>
    %c8_159 = arith.constant 8 : index
    %c0_160 = arith.constant 0 : index
    %175 = vector.load %arg9[%c8_159, %c0_160] : memref<32x128xf32, #tpu.memory_space<vmem>>, vector<16x128xf32>
    %176 = arith.truncf %175 : vector<16x128xf32> to vector<16x128xbf16>
    %c2_161 = arith.constant 2 : index
    %c1_162 = arith.constant 1 : index
    %c0_163 = arith.constant 0 : index
    %c0_164 = arith.constant 0 : index
    %177 = vector.load %arg3[%c2_161, %c1_162, %c0_163, %c0_164] : memref<4x3x128x128xbf16, #tpu.memory_space<vmem>>, vector<1x1x128x128xbf16>
    %178 = vector.shape_cast %177 : vector<1x1x128x128xbf16> to vector<128x128xbf16>
    %cst_165 = arith.constant dense<0.000000e+00> : vector<16x128xf32>
    %179 = tpu.matmul %176, %178, %cst_165 {dimension_numbers = #tpu.dot_dimension_numbers<[1], [0], [0], [1], [0, 0, 1, 1], [], []>} : vector<16x128xbf16>, vector<128x128xbf16>, vector<16x128xf32> -> vector<16x128xf32>
    %180 = arith.addf %174, %179 : vector<16x128xf32>
    %c12_166 = arith.constant 12 : index
    %c0_167 = arith.constant 0 : index
    %181 = vector.load %arg9[%c12_166, %c0_167] : memref<32x128xf32, #tpu.memory_space<vmem>>, vector<16x128xf32>
    %182 = arith.truncf %181 : vector<16x128xf32> to vector<16x128xbf16>
    %c2_168 = arith.constant 2 : index
    %c2_169 = arith.constant 2 : index
    %c0_170 = arith.constant 0 : index
    %c0_171 = arith.constant 0 : index
    %183 = vector.load %arg3[%c2_168, %c2_169, %c0_170, %c0_171] : memref<4x3x128x128xbf16, #tpu.memory_space<vmem>>, vector<1x1x128x128xbf16>
    %184 = vector.shape_cast %183 : vector<1x1x128x128xbf16> to vector<128x128xbf16>
    %cst_172 = arith.constant dense<0.000000e+00> : vector<16x128xf32>
    %185 = tpu.matmul %182, %184, %cst_172 {dimension_numbers = #tpu.dot_dimension_numbers<[1], [0], [0], [1], [0, 0, 1, 1], [], []>} : vector<16x128xbf16>, vector<128x128xbf16>, vector<16x128xf32> -> vector<16x128xf32>
    %186 = arith.addf %180, %185 : vector<16x128xf32>
    %c2_173 = arith.constant 2 : index
    %c0_174 = arith.constant 0 : index
    %c0_175 = arith.constant 0 : index
    %187 = vector.load %arg5[%c2_173, %c0_174, %c0_175] : memref<4x1x128xf32, #tpu.memory_space<vmem>>, vector<1x1x128xf32>
    %188 = vector.shape_cast %187 : vector<1x1x128xf32> to vector<1x128xf32>
    %189 = vector.broadcast %188 : vector<1x128xf32> to vector<16x128xf32>
    %190 = arith.addf %186, %189 : vector<16x128xf32>
    %cst_176 = arith.constant 0.000000e+00 : f32
    %191 = vector.broadcast %cst_176 : f32 to vector<16x128xf32>
    %192 = arith.cmpf ogt, %190, %191 : vector<16x128xf32>
    %cst_177 = arith.constant 2.500000e-01 : f32
    %193 = vector.broadcast %cst_177 : f32 to vector<16x128xf32>
    %194 = arith.mulf %193, %190 : vector<16x128xf32>
    %195 = arith.select %192, %190, %194 : vector<16x128xi1>, vector<16x128xf32>
    %cst_178 = arith.constant 0.000000e+00 : f32
    %196 = vector.broadcast %cst_178 : f32 to vector<16x128xf32>
    %197 = arith.cmpf ogt, %195, %196 : vector<16x128xf32>
    %cst_179 = arith.constant 2.500000e-01 : f32
    %198 = vector.broadcast %cst_179 : f32 to vector<16x128xf32>
    %199 = arith.mulf %198, %195 : vector<16x128xf32>
    %200 = arith.select %197, %195, %199 : vector<16x128xi1>, vector<16x128xf32>
    %201 = arith.addf %137, %200 : vector<16x128xf32>
    %c8_180 = arith.constant 8 : index
    %c0_181 = arith.constant 0 : index
    %202 = vector.load %arg9[%c8_180, %c0_181] : memref<32x128xf32, #tpu.memory_space<vmem>>, vector<16x128xf32>
    tpu.vector_store %arg9[%c8_180, %c0_181], %201 {strides = array<i32>} : memref<32x128xf32, #tpu.memory_space<vmem>>, vector<16x128xf32>,
    %cst_182 = arith.constant 0.000000e+00 : f32
    %203 = vector.broadcast %cst_182 : f32 to vector<16x128xf32>
    %c0_183 = arith.constant 0 : index
    %c0_184 = arith.constant 0 : index
    %204 = vector.load %arg9[%c0_183, %c0_184] : memref<32x128xf32, #tpu.memory_space<vmem>>, vector<16x128xf32>
    %205 = arith.truncf %204 : vector<16x128xf32> to vector<16x128xbf16>
    %c3 = arith.constant 3 : index
    %c0_185 = arith.constant 0 : index
    %c0_186 = arith.constant 0 : index
    %c0_187 = arith.constant 0 : index
    %206 = vector.load %arg2[%c3, %c0_185, %c0_186, %c0_187] : memref<4x3x128x128xbf16, #tpu.memory_space<vmem>>, vector<1x1x128x128xbf16>
    %207 = vector.shape_cast %206 : vector<1x1x128x128xbf16> to vector<128x128xbf16>
    %cst_188 = arith.constant dense<0.000000e+00> : vector<16x128xf32>
    %208 = tpu.matmul %205, %207, %cst_188 {dimension_numbers = #tpu.dot_dimension_numbers<[1], [0], [0], [1], [0, 0, 1, 1], [], []>} : vector<16x128xbf16>, vector<128x128xbf16>, vector<16x128xf32> -> vector<16x128xf32>
    %209 = arith.addf %203, %208 : vector<16x128xf32>
    %c8_189 = arith.constant 8 : index
    %c0_190 = arith.constant 0 : index
    %210 = vector.load %arg9[%c8_189, %c0_190] : memref<32x128xf32, #tpu.memory_space<vmem>>, vector<16x128xf32>
    %211 = arith.truncf %210 : vector<16x128xf32> to vector<16x128xbf16>
    %c3_191 = arith.constant 3 : index
    %c1_192 = arith.constant 1 : index
    %c0_193 = arith.constant 0 : index
    %c0_194 = arith.constant 0 : index
    %212 = vector.load %arg2[%c3_191, %c1_192, %c0_193, %c0_194] : memref<4x3x128x128xbf16, #tpu.memory_space<vmem>>, vector<1x1x128x128xbf16>
    %213 = vector.shape_cast %212 : vector<1x1x128x128xbf16> to vector<128x128xbf16>
    %cst_195 = arith.constant dense<0.000000e+00> : vector<16x128xf32>
    %214 = tpu.matmul %211, %213, %cst_195 {dimension_numbers = #tpu.dot_dimension_numbers<[1], [0], [0], [1], [0, 0, 1, 1], [], []>} : vector<16x128xbf16>, vector<128x128xbf16>, vector<16x128xf32> -> vector<16x128xf32>
    %215 = arith.addf %209, %214 : vector<16x128xf32>
    %c16 = arith.constant 16 : index
    %c0_196 = arith.constant 0 : index
    %216 = vector.load %arg9[%c16, %c0_196] : memref<32x128xf32, #tpu.memory_space<vmem>>, vector<16x128xf32>
    %217 = arith.truncf %216 : vector<16x128xf32> to vector<16x128xbf16>
    %c3_197 = arith.constant 3 : index
    %c2_198 = arith.constant 2 : index
    %c0_199 = arith.constant 0 : index
    %c0_200 = arith.constant 0 : index
    %218 = vector.load %arg2[%c3_197, %c2_198, %c0_199, %c0_200] : memref<4x3x128x128xbf16, #tpu.memory_space<vmem>>, vector<1x1x128x128xbf16>
    %219 = vector.shape_cast %218 : vector<1x1x128x128xbf16> to vector<128x128xbf16>
    %cst_201 = arith.constant dense<0.000000e+00> : vector<16x128xf32>
    %220 = tpu.matmul %217, %219, %cst_201 {dimension_numbers = #tpu.dot_dimension_numbers<[1], [0], [0], [1], [0, 0, 1, 1], [], []>} : vector<16x128xbf16>, vector<128x128xbf16>, vector<16x128xf32> -> vector<16x128xf32>
    %221 = arith.addf %215, %220 : vector<16x128xf32>
    %c3_202 = arith.constant 3 : index
    %c0_203 = arith.constant 0 : index
    %c0_204 = arith.constant 0 : index
    %222 = vector.load %arg4[%c3_202, %c0_203, %c0_204] : memref<4x1x128xf32, #tpu.memory_space<vmem>>, vector<1x1x128xf32>
    %223 = vector.shape_cast %222 : vector<1x1x128xf32> to vector<1x128xf32>
    %224 = vector.broadcast %223 : vector<1x128xf32> to vector<16x128xf32>
    %225 = arith.addf %221, %224 : vector<16x128xf32>
    %cst_205 = arith.constant 0.000000e+00 : f32
    %226 = vector.broadcast %cst_205 : f32 to vector<16x128xf32>
    %227 = arith.cmpf ogt, %225, %226 : vector<16x128xf32>
    %cst_206 = arith.constant 2.500000e-01 : f32
    %228 = vector.broadcast %cst_206 : f32 to vector<16x128xf32>
    %229 = arith.mulf %228, %225 : vector<16x128xf32>
    %230 = arith.select %227, %225, %229 : vector<16x128xi1>, vector<16x128xf32>
    %c8_207 = arith.constant 8 : index
    %c0_208 = arith.constant 0 : index
    %231 = vector.load %arg9[%c8_207, %c0_208] : memref<32x128xf32, #tpu.memory_space<vmem>>, vector<16x128xf32>
    tpu.vector_store %arg9[%c8_207, %c0_208], %230 {strides = array<i32>} : memref<32x128xf32, #tpu.memory_space<vmem>>, vector<16x128xf32>,
    %cst_209 = arith.constant 0.000000e+00 : f32
    %232 = vector.broadcast %cst_209 : f32 to vector<16x128xf32>
    %c0_210 = arith.constant 0 : index
    %c0_211 = arith.constant 0 : index
    %233 = vector.load %arg9[%c0_210, %c0_211] : memref<32x128xf32, #tpu.memory_space<vmem>>, vector<16x128xf32>
    %234 = arith.truncf %233 : vector<16x128xf32> to vector<16x128xbf16>
    %c3_212 = arith.constant 3 : index
    %c0_213 = arith.constant 0 : index
    %c0_214 = arith.constant 0 : index
    %c0_215 = arith.constant 0 : index
    %235 = vector.load %arg3[%c3_212, %c0_213, %c0_214, %c0_215] : memref<4x3x128x128xbf16, #tpu.memory_space<vmem>>, vector<1x1x128x128xbf16>
    %236 = vector.shape_cast %235 : vector<1x1x128x128xbf16> to vector<128x128xbf16>
    %cst_216 = arith.constant dense<0.000000e+00> : vector<16x128xf32>
    %237 = tpu.matmul %234, %236, %cst_216 {dimension_numbers = #tpu.dot_dimension_numbers<[1], [0], [0], [1], [0, 0, 1, 1], [], []>} : vector<16x128xbf16>, vector<128x128xbf16>, vector<16x128xf32> -> vector<16x128xf32>
    %238 = arith.addf %232, %237 : vector<16x128xf32>
    %c8_217 = arith.constant 8 : index
    %c0_218 = arith.constant 0 : index
    %239 = vector.load %arg9[%c8_217, %c0_218] : memref<32x128xf32, #tpu.memory_space<vmem>>, vector<16x128xf32>
    %240 = arith.truncf %239 : vector<16x128xf32> to vector<16x128xbf16>
    %c3_219 = arith.constant 3 : index
    %c1_220 = arith.constant 1 : index
    %c0_221 = arith.constant 0 : index
    %c0_222 = arith.constant 0 : index
    %241 = vector.load %arg3[%c3_219, %c1_220, %c0_221, %c0_222] : memref<4x3x128x128xbf16, #tpu.memory_space<vmem>>, vector<1x1x128x128xbf16>
    %242 = vector.shape_cast %241 : vector<1x1x128x128xbf16> to vector<128x128xbf16>
    %cst_223 = arith.constant dense<0.000000e+00> : vector<16x128xf32>
    %243 = tpu.matmul %240, %242, %cst_223 {dimension_numbers = #tpu.dot_dimension_numbers<[1], [0], [0], [1], [0, 0, 1, 1], [], []>} : vector<16x128xbf16>, vector<128x128xbf16>, vector<16x128xf32> -> vector<16x128xf32>
    %244 = arith.addf %238, %243 : vector<16x128xf32>
    %c16_224 = arith.constant 16 : index
    %c0_225 = arith.constant 0 : index
    %245 = vector.load %arg9[%c16_224, %c0_225] : memref<32x128xf32, #tpu.memory_space<vmem>>, vector<16x128xf32>
    %246 = arith.truncf %245 : vector<16x128xf32> to vector<16x128xbf16>
    %c3_226 = arith.constant 3 : index
    %c2_227 = arith.constant 2 : index
    %c0_228 = arith.constant 0 : index
    %c0_229 = arith.constant 0 : index
    %247 = vector.load %arg3[%c3_226, %c2_227, %c0_228, %c0_229] : memref<4x3x128x128xbf16, #tpu.memory_space<vmem>>, vector<1x1x128x128xbf16>
    %248 = vector.shape_cast %247 : vector<1x1x128x128xbf16> to vector<128x128xbf16>
    %cst_230 = arith.constant dense<0.000000e+00> : vector<16x128xf32>
    %249 = tpu.matmul %246, %248, %cst_230 {dimension_numbers = #tpu.dot_dimension_numbers<[1], [0], [0], [1], [0, 0, 1, 1], [], []>} : vector<16x128xbf16>, vector<128x128xbf16>, vector<16x128xf32> -> vector<16x128xf32>
    %250 = arith.addf %244, %249 : vector<16x128xf32>
    %c3_231 = arith.constant 3 : index
    %c0_232 = arith.constant 0 : index
    %c0_233 = arith.constant 0 : index
    %251 = vector.load %arg5[%c3_231, %c0_232, %c0_233] : memref<4x1x128xf32, #tpu.memory_space<vmem>>, vector<1x1x128xf32>
    %252 = vector.shape_cast %251 : vector<1x1x128xf32> to vector<1x128xf32>
    %253 = vector.broadcast %252 : vector<1x128xf32> to vector<16x128xf32>
    %254 = arith.addf %250, %253 : vector<16x128xf32>
    %cst_234 = arith.constant 0.000000e+00 : f32
    %255 = vector.broadcast %cst_234 : f32 to vector<16x128xf32>
    %256 = arith.cmpf ogt, %254, %255 : vector<16x128xf32>
    %cst_235 = arith.constant 2.500000e-01 : f32
    %257 = vector.broadcast %cst_235 : f32 to vector<16x128xf32>
    %258 = arith.mulf %257, %254 : vector<16x128xf32>
    %259 = arith.select %256, %254, %258 : vector<16x128xi1>, vector<16x128xf32>
    %cst_236 = arith.constant 0.000000e+00 : f32
    %260 = vector.broadcast %cst_236 : f32 to vector<16x128xf32>
    %261 = arith.cmpf ogt, %259, %260 : vector<16x128xf32>
    %cst_237 = arith.constant 2.500000e-01 : f32
    %262 = vector.broadcast %cst_237 : f32 to vector<16x128xf32>
    %263 = arith.mulf %262, %259 : vector<16x128xf32>
    %264 = arith.select %261, %259, %263 : vector<16x128xi1>, vector<16x128xf32>
    %265 = arith.addf %201, %264 : vector<16x128xf32>
    %c0_238 = arith.constant 0 : index
    %c0_239 = arith.constant 0 : index
    %c0_240 = arith.constant 0 : index
    %266 = vector.load %arg8[%c0_238, %c0_239, %c0_240] : memref<1x16x128xf32, #tpu.memory_space<vmem>>, vector<1x16x128xf32>
    %267 = vector.shape_cast %266 : vector<1x16x128xf32> to vector<16x128xf32>
    %268 = vector.shape_cast %265 : vector<16x128xf32> to vector<1x16x128xf32>
    tpu.vector_store %arg8[%c0_238, %c0_239, %c0_240], %268 {strides = array<i32>} : memref<1x16x128xf32, #tpu.memory_space<vmem>>, vector<1x16x128xf32>,
    return
  }
  func.func @transform_0(%arg0: i32) -> (i32, i32, i32) {
    %c0_i32 = arith.constant 0 : i32
    %c0_i32_0 = arith.constant 0 : i32
    %c0_i32_1 = arith.constant 0 : i32
    return %arg0, %c0_i32, %c0_i32_0 : i32, i32, i32
  }
  func.func @transform_1(%arg0: i32) -> (i32, i32, i32, i32) {
    %c0_i32 = arith.constant 0 : i32
    %c0_i32_0 = arith.constant 0 : i32
    %c0_i32_1 = arith.constant 0 : i32
    %c0_i32_2 = arith.constant 0 : i32
    %c0_i32_3 = arith.constant 0 : i32
    return %c0_i32, %c0_i32_0, %c0_i32_1, %c0_i32_2 : i32, i32, i32, i32
  }
  func.func @transform_2(%arg0: i32) -> (i32, i32, i32, i32) {
    %c0_i32 = arith.constant 0 : i32
    %c0_i32_0 = arith.constant 0 : i32
    %c0_i32_1 = arith.constant 0 : i32
    %c0_i32_2 = arith.constant 0 : i32
    %c0_i32_3 = arith.constant 0 : i32
    return %c0_i32, %c0_i32_0, %c0_i32_1, %c0_i32_2 : i32, i32, i32, i32
  }
  func.func @transform_3(%arg0: i32) -> (i32, i32, i32) {
    %c0_i32 = arith.constant 0 : i32
    %c0_i32_0 = arith.constant 0 : i32
    %c0_i32_1 = arith.constant 0 : i32
    %c0_i32_2 = arith.constant 0 : i32
    return %c0_i32, %c0_i32_0, %c0_i32_1 : i32, i32, i32
  }
  func.func @transform_4(%arg0: i32) -> (i32, i32, i32) {
    %c0_i32 = arith.constant 0 : i32
    %c0_i32_0 = arith.constant 0 : i32
    %c0_i32_1 = arith.constant 0 : i32
    %c0_i32_2 = arith.constant 0 : i32
    return %c0_i32, %c0_i32_0, %c0_i32_1 : i32, i32, i32
  }
  func.func @transform_5(%arg0: i32) -> (i32, i32) {
    %c0_i32 = arith.constant 0 : i32
    %c0_i32_0 = arith.constant 0 : i32
    %c0_i32_1 = arith.constant 0 : i32
    return %c0_i32, %c0_i32_0 : i32, i32
  }
  func.func @transform_6(%arg0: i32) -> (i32, i32) {
    %c0_i32 = arith.constant 0 : i32
    %c0_i32_0 = arith.constant 0 : i32
    %c0_i32_1 = arith.constant 0 : i32
    return %c0_i32, %c0_i32_0 : i32, i32
  }
  func.func @transform_7(%arg0: i32) -> (i32, i32, i32) {
    %c0_i32 = arith.constant 0 : i32
    %c0_i32_0 = arith.constant 0 : i32
    %c0_i32_1 = arith.constant 0 : i32
    return %arg0, %c0_i32, %c0_i32_0 : i32, i32, i32
  }
}

</mosaic_0001>

<llo_original>
// kernel: tpu_custom_call.1
$region0: #{tpu_custom_call.1}
  #allocation0 [shape = 'u32[]', space=smem, size = 0x4, offset = 0x4, fixed_abs, tag = 'smem constant byte address 0x4 - core index']
  #allocation1 [shape = 'u32[144,128]{1,0:T(1,128)}', space=vmem, size = 0x12000, scoped, tag = 'internal scratch']
  #allocation2 [shape = 'f32[32,128]{1,0:T(8,128)}', space=vmem, size = 0x4000, scoped, tag = 'scratch operand']
  %s0 = inlined_call_operand.hbm [shape: f32[2,16,128], index: 0, kind: input, shape index: {}]
  %s1 = inlined_call_operand.hbm [shape: bf16[4,3,128,128], index: 1, kind: input, shape index: {}]
  %s2 = inlined_call_operand.hbm [shape: bf16[4,3,128,128], index: 2, kind: input, shape index: {}]
  %s3 = inlined_call_operand.vmem [shape: f32[4,1,128], index: 3, kind: input, shape index: {}]
  %s4 = inlined_call_operand.vmem [shape: f32[4,1,128], index: 4, kind: input, shape index: {}]
  %s5 = inlined_call_operand.hbm [shape: bf16[128,128], index: 5, kind: input, shape index: {}]
  %s6 = inlined_call_operand.vmem [shape: f32[1,128], index: 6, kind: input, shape index: {}]
  %s7 = inlined_call_operand.hbm [shape: f32[2,16,128], index: 7, kind: output, shape index: {}]
  %s8 = sld [smem:[#allocation0]]
  $region77: #{tpu_custom_call.1} parent=0
    _
  %s10 = ssub.s32 1, %s8
  %s11 = scalar_select 0, %s10, %s8
  $region1: #{tpu_custom_call.1} parent=0
    #allocation3 [shape = 'u8[16384]{0}', space=vmem, size = 0x4000, scoped, tag = 'input window, operand 0']
    #allocation4 [shape = 's32[2]{0}', space=sflag, size = 0x8, scoped, tag = 'scoped memory for tpu_custom_call.1']
    #allocation5 [shape = 's32[2]{0}', space=sflag, size = 0x8, scoped, tag = 'scoped memory for tpu_custom_call.1']
    #allocation6 [shape = 'u8[393216]{0}', space=vmem, size = 0x60000, scoped, tag = 'input window, operand 1, single buffered']
    #allocation7 [shape = 's32[1]{0}', space=sflag, size = 0x4, scoped, tag = 'scoped memory for tpu_custom_call.1']
    #allocation8 [shape = 'u8[393216]{0}', space=vmem, size = 0x60000, scoped, tag = 'input window, operand 2, single buffered']
    #allocation9 [shape = 'u8[32768]{0}', space=vmem, size = 0x8000, scoped, tag = 'input window, operand 5, single buffered']
    #allocation10 [shape = 's32[1]{0}', space=sflag, size = 0x4, scoped, tag = 'scoped memory for tpu_custom_call.1']
    #allocation11 [shape = 'u8[16384]{0}', space=vmem, size = 0x4000, scoped, tag = 'output window, operand 0']
    %12 = vsyncpa [#allocation4], 0
    %s13 = scalar_lea.sflag [#allocation4], 1
    %14 = vsyncpa %s13, 0
    %15 = vsyncpa [#allocation7], 0
    %16 = vsyncpa [#allocation10], 0
    %17 = vsyncpa [#allocation5], 0
    %s18 = scalar_lea.sflag [#allocation5], 1
    %19 = vsyncpa %s18, 0
    loop: start=0, step=1, limit=4
    $region2: #{tpu_custom_call.1} parent=1 // loop_pre_header
      _
    $region3: #{tpu_custom_call.1} parent=1 // loop_header
      %s21 = sphi 0, %s25
      %p22 = scmp.ge.s32.totalorder %s21, 4
      %s31 = sphi 0, %s33
      %s34 = sphi 0, %s31
      %s35 = sphi 0, %s34
      %s51 = sphi 0, %s35
      %s55 = sphi 0, %s55
      %s57 = sphi 0, %s55
      %s58 = sphi 0, %s57
      %s72 = sphi 0, %s58
      %s76 = sphi 0, %s76
      %s78 = sphi 0, %s76
      %s79 = sphi 0, %s78
      %s93 = sphi 0, %s79
      %s97 = sphi 0, %s97
      %s99 = sphi 0, %s97
      %s100 = sphi 0, %s99
      %s114 = sphi 0, %s100
      %s118 = sphi 0, %s118
      %s120 = sphi 0, %s118
      %s121 = sphi 0, %s120
      %s135 = sphi 0, %s121
      %s139 = sphi 0, %s139
      %s141 = sphi 0, %s139
      %s142 = sphi 0, %s141
      %s156 = sphi 0, %s142
      %s160 = sphi 0, %s160
      %s162 = sphi 0, %s160
      %s163 = sphi 0, %s162
      %s177 = sphi 0, %s163
      %s183 = sphi 0, %s185
      %s186 = sphi 0, %s183
      %s187 = sphi 0, %s186
      %s203 = sphi 0, %s187
    $region4: #{tpu_custom_call.1} parent=1 // loop_header_branch
      %24 = sbr.rel (%p22) target = $region8
    $region5: #{tpu_custom_call.1} parent=1 // loop_body
      %s26 = ssub.s32 %s21, 1
      %s27 = ssub.s32 %s21, 2
      %s28 = sadd.s32 %s21, 1
      %s29 = ssub.s32 %s21, %s28
      %p30 = scmp.eq.s32.totalorder %s29, 0
      %s32 = sadd.s32 %s31, 1
      %s33 = scalar_select %p30, %s31, %s32
      %p36 = pneg %p30
      %p37 = scmp.eq.s32.totalorder %s21, 1
      %p38 = por %p36, %p37
      %p39 = scmp.ne.s32.totalorder %s31, %s34
      %p40 = scmp.eq.s32.totalorder %s21, 0
      %p41 = por %p39, %p40
      %p42 = scmp.ne.s32.totalorder %s31, %s34
      %p43 = scmp.eq.s32.totalorder %s26, 1
      %p44 = por %p42, %p43
      %p45 = scmp.ne.s32.totalorder %s34, %s35
      %p46 = scmp.eq.s32.totalorder %s26, 0
      %p47 = por %p45, %p46
      %p48 = scmp.ne.s32.totalorder %s34, %s35
      %p49 = scmp.eq.s32.totalorder %s27, 1
      %p50 = por %p48, %p49
      %p52 = scmp.ne.s32.totalorder %s35, %s51
      %p53 = scmp.eq.s32.totalorder %s27, 0
      %p54 = por %p52, %p53
      %s56 = sadd.s32 %s55, 1
      %p59 = scmp.eq.s32.totalorder %s21, 1
      %p60 = scmp.ne.s32.totalorder %s55, %s57
      %p61 = scmp.eq.s32.totalorder %s21, 0
      %p62 = por %p60, %p61
      %p63 = scmp.ne.s32.totalorder %s55, %s57
      %p64 = scmp.eq.s32.totalorder %s26, 1
      %p65 = por %p63, %p64
      %p66 = scmp.ne.s32.totalorder %s57, %s58
      %p67 = scmp.eq.s32.totalorder %s26, 0
      %p68 = por %p66, %p67
      %p69 = scmp.ne.s32.totalorder %s57, %s58
      %p70 = scmp.eq.s32.totalorder %s27, 1
      %p71 = por %p69, %p70
      %p73 = scmp.ne.s32.totalorder %s58, %s72
      %p74 = scmp.eq.s32.totalorder %s27, 0
      %p75 = por %p73, %p74
      %s77 = sadd.s32 %s76, 1
      %p80 = scmp.eq.s32.totalorder %s21, 1
      %p81 = scmp.ne.s32.totalorder %s76, %s78
      %p82 = scmp.eq.s32.totalorder %s21, 0
      %p83 = por %p81, %p82
      %p84 = scmp.ne.s32.totalorder %s76, %s78
      %p85 = scmp.eq.s32.totalorder %s26, 1
      %p86 = por %p84, %p85
      %p87 = scmp.ne.s32.totalorder %s78, %s79
      %p88 = scmp.eq.s32.totalorder %s26, 0
      %p89 = por %p87, %p88
      %p90 = scmp.ne.s32.totalorder %s78, %s79
      %p91 = scmp.eq.s32.totalorder %s27, 1
      %p92 = por %p90, %p91
      %p94 = scmp.ne.s32.totalorder %s79, %s93
      %p95 = scmp.eq.s32.totalorder %s27, 0
      %p96 = por %p94, %p95
      %s98 = sadd.s32 %s97, 1
      %p101 = scmp.eq.s32.totalorder %s21, 1
      %p102 = scmp.ne.s32.totalorder %s97, %s99
      %p103 = scmp.eq.s32.totalorder %s21, 0
      %p104 = por %p102, %p103
      %p105 = scmp.ne.s32.totalorder %s97, %s99
      %p106 = scmp.eq.s32.totalorder %s26, 1
      %p107 = por %p105, %p106
      %p108 = scmp.ne.s32.totalorder %s99, %s100
      %p109 = scmp.eq.s32.totalorder %s26, 0
      %p110 = por %p108, %p109
      %p111 = scmp.ne.s32.totalorder %s99, %s100
      %p112 = scmp.eq.s32.totalorder %s27, 1
      %p113 = por %p111, %p112
      %p115 = scmp.ne.s32.totalorder %s100, %s114
      %p116 = scmp.eq.s32.totalorder %s27, 0
      %p117 = por %p115, %p116
      %s119 = sadd.s32 %s118, 1
      %p122 = scmp.eq.s32.totalorder %s21, 1
      %p123 = scmp.ne.s32.totalorder %s118, %s120
      %p124 = scmp.eq.s32.totalorder %s21, 0
      %p125 = por %p123, %p124
      %p126 = scmp.ne.s32.totalorder %s118, %s120
      %p127 = scmp.eq.s32.totalorder %s26, 1
      %p128 = por %p126, %p127
      %p129 = scmp.ne.s32.totalorder %s120, %s121
      %p130 = scmp.eq.s32.totalorder %s26, 0
      %p131 = por %p129, %p130
      %p132 = scmp.ne.s32.totalorder %s120, %s121
      %p133 = scmp.eq.s32.totalorder %s27, 1
      %p134 = por %p132, %p133
      %p136 = scmp.ne.s32.totalorder %s121, %s135
      %p137 = scmp.eq.s32.totalorder %s27, 0
      %p138 = por %p136, %p137
      %s140 = sadd.s32 %s139, 1
      %p143 = scmp.eq.s32.totalorder %s21, 1
      %p144 = scmp.ne.s32.totalorder %s139, %s141
      %p145 = scmp.eq.s32.totalorder %s21, 0
      %p146 = por %p144, %p145
      %p147 = scmp.ne.s32.totalorder %s139, %s141
      %p148 = scmp.eq.s32.totalorder %s26, 1
      %p149 = por %p147, %p148
      %p150 = scmp.ne.s32.totalorder %s141, %s142
      %p151 = scmp.eq.s32.totalorder %s26, 0
      %p152 = por %p150, %p151
      %p153 = scmp.ne.s32.totalorder %s141, %s142
      %p154 = scmp.eq.s32.totalorder %s27, 1
      %p155 = por %p153, %p154
      %p157 = scmp.ne.s32.totalorder %s142, %s156
      %p158 = scmp.eq.s32.totalorder %s27, 0
      %p159 = por %p157, %p158
      %s161 = sadd.s32 %s160, 1
      %p164 = scmp.eq.s32.totalorder %s21, 1
      %p165 = scmp.ne.s32.totalorder %s160, %s162
      %p166 = scmp.eq.s32.totalorder %s21, 0
      %p167 = por %p165, %p166
      %p168 = scmp.ne.s32.totalorder %s160, %s162
      %p169 = scmp.eq.s32.totalorder %s26, 1
      %p170 = por %p168, %p169
      %p171 = scmp.ne.s32.totalorder %s162, %s163
      %p172 = scmp.eq.s32.totalorder %s26, 0
      %p173 = por %p171, %p172
      %p174 = scmp.ne.s32.totalorder %s162, %s163
      %p175 = scmp.eq.s32.totalorder %s27, 1
      %p176 = por %p174, %p175
      %p178 = scmp.ne.s32.totalorder %s163, %s177
      %p179 = scmp.eq.s32.totalorder %s27, 0
      %p180 = por %p178, %p179
      %s181 = ssub.s32 %s21, %s28
      %p182 = scmp.eq.s32.totalorder %s181, 0
      %s184 = sadd.s32 %s183, 1
      %s185 = scalar_select %p182, %s183, %s184
      %p188 = pneg %p182
      %p189 = scmp.eq.s32.totalorder %s21, 1
      %p190 = por %p188, %p189
      %p191 = scmp.ne.s32.totalorder %s183, %s186
      %p192 = scmp.eq.s32.totalorder %s21, 0
      %p193 = por %p191, %p192
      %p194 = scmp.ne.s32.totalorder %s183, %s186
      %p195 = scmp.eq.s32.totalorder %s26, 1
      %p196 = por %p194, %p195
      %p197 = scmp.ne.s32.totalorder %s186, %s187
      %p198 = scmp.eq.s32.totalorder %s26, 0
      %p199 = por %p197, %p198
      %p200 = scmp.ne.s32.totalorder %s186, %s187
      %p201 = scmp.eq.s32.totalorder %s27, 1
      %p202 = por %p200, %p201
      %p204 = scmp.ne.s32.totalorder %s187, %s203
      %p205 = scmp.eq.s32.totalorder %s27, 0
      %p206 = por %p204, %p205
      %p207 = scmp.le.s32.totalorder 1, %s21
      %p208 = scmp.lt.s32.totalorder %s21, 3
      %p209 = pnand %p207, %p208
      %p210 = pneg %p209
      // Predicated region
      $region9: #{tpu_custom_call.1} parent=5 // pred_check
        _
      $region10: #{tpu_custom_call.1} parent=5 // pred_check_branch
        %212 = sbr.rel (%p209) target = $region12
      $region11: #{tpu_custom_call.1} parent=5 // pred_region
        %s213 = ssub.s32 %s21, 1
        // Predicated region
        $region13: #{tpu_custom_call.1} parent=11 // pred_check
          %p214 = pneg %p68
        $region14: #{tpu_custom_call.1} parent=11 // pred_check_branch
          %216 = sbr.rel (%p214) target = $region16
        $region15: #{tpu_custom_call.1} parent=11 // pred_region
          %s218 = ssub.s32 12288, 12288
          %219 = vsyncadd [#allocation7], %s218
          %s220 = sshll.u32 [#allocation6], 4
          %s221 = int_to_ptr.vmem [resolvable:$true] %s220
          %226 = dma.hbm_to_vmem [thread:$0]  %s1, 12288, %s221, [#allocation7], 64, 64, 4
        $region16: #{tpu_custom_call.1} parent=11 // pred_fallthru
          _
        // Predicated region
        $region17: #{tpu_custom_call.1} parent=11 // pred_check
          %p227 = pneg %p89
        $region18: #{tpu_custom_call.1} parent=11 // pred_check_branch
          %229 = sbr.rel (%p227) target = $region20
        $region19: #{tpu_custom_call.1} parent=11 // pred_region
          %s231 = ssub.s32 12288, 12288
          %232 = vsyncadd [#allocation7], %s231
          %s233 = sshll.u32 [#allocation8], 4
          %s234 = int_to_ptr.vmem [resolvable:$true] %s233
          %239 = dma.hbm_to_vmem [thread:$0]  %s2, 12288, %s234, [#allocation7], 64, 64, 4
        $region20: #{tpu_custom_call.1} parent=11 // pred_fallthru
          _
        // Predicated region
        $region21: #{tpu_custom_call.1} parent=11 // pred_check
          %p240 = pneg %p110
        $region22: #{tpu_custom_call.1} parent=11 // pred_check_branch
          %242 = sbr.rel (%p240) target = $region24
        $region23: #{tpu_custom_call.1} parent=11 // pred_region
          _
        $region24: #{tpu_custom_call.1} parent=11 // pred_fallthru
          _
        // Predicated region
        $region25: #{tpu_custom_call.1} parent=11 // pred_check
          %p243 = pneg %p131
        $region26: #{tpu_custom_call.1} parent=11 // pred_check_branch
          %245 = sbr.rel (%p243) target = $region28
        $region27: #{tpu_custom_call.1} parent=11 // pred_region
          _
        $region28: #{tpu_custom_call.1} parent=11 // pred_fallthru
          _
        // Predicated region
        $region29: #{tpu_custom_call.1} parent=11 // pred_check
          %p246 = pneg %p152
        $region30: #{tpu_custom_call.1} parent=11 // pred_check_branch
          %248 = sbr.rel (%p246) target = $region32
        $region31: #{tpu_custom_call.1} parent=11 // pred_region
          %s250 = ssub.s32 1024, 1024
          %251 = vsyncadd [#allocation10], %s250
          %s252 = sshll.u32 [#allocation9], 4
          %s253 = int_to_ptr.vmem [resolvable:$true] %s252
          %258 = dma.hbm_to_vmem [thread:$0]  %s5, 1024, %s253, [#allocation10], 64, 64, 4
        $region32: #{tpu_custom_call.1} parent=11 // pred_fallthru
          _
        // Predicated region
        $region33: #{tpu_custom_call.1} parent=11 // pred_check
          %p259 = pneg %p173
        $region34: #{tpu_custom_call.1} parent=11 // pred_check_branch
          %261 = sbr.rel (%p259) target = $region36
        $region35: #{tpu_custom_call.1} parent=11 // pred_region
          _
        $region36: #{tpu_custom_call.1} parent=11 // pred_fallthru
          _
      $region12: #{tpu_custom_call.1} parent=5 // pred_fallthru
        _
      %p262 = scmp.lt.s32.totalorder %s21, 2
      // Predicated region
      $region37: #{tpu_custom_call.1} parent=5 // pred_check
        %p263 = pneg %p262
      $region38: #{tpu_custom_call.1} parent=5 // pred_check_branch
        %265 = sbr.rel (%p263) target = $region40
      $region39: #{tpu_custom_call.1} parent=5 // pred_region
        // Predicated region
        $region41: #{tpu_custom_call.1} parent=39 // pred_check
          %p266 = pneg %p41
        $region42: #{tpu_custom_call.1} parent=39 // pred_check_branch
          %268 = sbr.rel (%p266) target = $region44
        $region43: #{tpu_custom_call.1} parent=39 // pred_region
          %s269 = sand.u32 %s31, 1
          %s270 = scalar_lea.sflag [#allocation4], %s269
          %s271 = sand.u32 %s31, 1
          %s272 = smul.addr %s271, 16
          %s273 = scalar_lea.vmem [#allocation3], %s272
          %s275 = ssub.s32 256, 256
          %276 = vsyncadd %s270, %s275
          %s277 = smul.addr %s21, 2
          %s278 = smul.addr %s277, 128
          %s279 = scalar_lea.hbm %s0, %s278
          %s280 = sshll.u32 %s273, 4
          %s281 = int_to_ptr.vmem [resolvable:$true] %s280
          %286 = dma.hbm_to_vmem [thread:$0]  %s279, 256, %s281, %s270, 128, 128, 8
        $region44: #{tpu_custom_call.1} parent=39 // pred_fallthru
          _
      $region40: #{tpu_custom_call.1} parent=5 // pred_fallthru
        _
      %p287 = scmp.le.s32.totalorder 1, %s21
      %p288 = scmp.lt.s32.totalorder %s21, 3
      %p289 = pnand %p287, %p288
      %p290 = pneg %p289
      // Predicated region
      $region45: #{tpu_custom_call.1} parent=5 // pred_check
        _
      $region46: #{tpu_custom_call.1} parent=5 // pred_check_branch
        %292 = sbr.rel (%p289) target = $region48
      $region47: #{tpu_custom_call.1} parent=5 // pred_region
        %s293 = ssub.s32 %s21, 1
        %s294 = sand.u32 %s34, 1
        %s295 = scalar_lea.sflag [#allocation4], %s294
        %s296 = sand.u32 %s34, 1
        %s297 = smul.addr %s296, 16
        %s298 = scalar_lea.vmem [#allocation3], %s297
        // Predicated region
        $region49: #{tpu_custom_call.1} parent=47 // pred_check
          %p299 = pneg %p47
        $region50: #{tpu_custom_call.1} parent=47 // pred_check_branch
          %301 = sbr.rel (%p299) target = $region52
        $region51: #{tpu_custom_call.1} parent=47 // pred_region
          %302 = dma.done %s295, 256
        $region52: #{tpu_custom_call.1} parent=47 // pred_fallthru
          _
        // Predicated region
        $region53: #{tpu_custom_call.1} parent=47 // pred_check
          %p303 = pneg %p68
        $region54: #{tpu_custom_call.1} parent=47 // pred_check_branch
          %305 = sbr.rel (%p303) target = $region56
        $region55: #{tpu_custom_call.1} parent=47 // pred_region
          %306 = dma.done [#allocation7], 12288
        $region56: #{tpu_custom_call.1} parent=47 // pred_fallthru
          _
        // Predicated region
        $region57: #{tpu_custom_call.1} parent=47 // pred_check
          %p307 = pneg %p89
        $region58: #{tpu_custom_call.1} parent=47 // pred_check_branch
          %309 = sbr.rel (%p307) target = $region60
        $region59: #{tpu_custom_call.1} parent=47 // pred_region
          %310 = dma.done [#allocation7], 12288
        $region60: #{tpu_custom_call.1} parent=47 // pred_fallthru
          _
        // Predicated region
        $region61: #{tpu_custom_call.1} parent=47 // pred_check
          %p311 = pneg %p152
        $region62: #{tpu_custom_call.1} parent=47 // pred_check_branch
          %313 = sbr.rel (%p311) target = $region64
        $region63: #{tpu_custom_call.1} parent=47 // pred_region
          %314 = dma.done [#allocation10], 1024
        $region64: #{tpu_custom_call.1} parent=47 // pred_fallthru
          _
        %s315 = sand.u32 %s34, 1
        %s316 = scalar_lea.sflag [#allocation4], %s315
        %s317 = sand.u32 %s34, 1
        %s318 = smul.addr %s317, 16
        %s319 = scalar_lea.vmem [#allocation3], %s318
        %p320 = pneg %p47
        %p321 = pneg %p44
        %p322 = pneg %p68
        %p323 = pneg %p65
        %p324 = pneg %p89
        %p325 = pneg %p86
        %p326 = pneg %p110
        %p327 = pneg %p107
        %p328 = pneg %p131
        %p329 = pneg %p128
        %p330 = pneg %p152
        %p331 = pneg %p149
        %p332 = pneg %p173
        %p333 = pneg %p170
        %p334 = pneg %p199
        %p335 = pneg %p196
        %s336 = sand.u32 %s186, 1
        %s337 = scalar_lea.sflag [#allocation5], %s336
        %s338 = sand.u32 %s186, 1
        %s339 = smul.addr %s338, 16
        %s340 = scalar_lea.vmem [#allocation11], %s339
        %342 = vst [vmem:[#allocation2] sm:$0xff] 0.0
        %343 = vst [vmem:[#allocation2 + $0x8] sm:$0xff] 0.0
        %344 = vst [vmem:[#allocation2 + $0x10] sm:$0xff] 0.0
        %345 = vst [vmem:[#allocation2 + $0x18] sm:$0xff] 0.0
        %v346 = vld [vmem:[%s298] sm:$0xff]
        %v347 = vld [vmem:[%s298 + $0x8] sm:$0xff]
        %348 = vst [vmem:[#allocation2 + $0x8] sm:$0xff] %v346
        %349 = vst [vmem:[#allocation2 + $0x10] sm:$0xff] %v347
        %v350 = vld [vmem:[#allocation2 + $0x7] sm:$0xff]
        %v351 = vld [vmem:[#allocation2 + $0xf] sm:$0xff]
        %v352 = vpack.c.bf16 %v351, %v350
        %v353 = vld [vmem:[#allocation6] sm:$0xf]
        %v354 = vld [vmem:[#allocation6 + $0x4] sm:$0xf]
        %v355 = vld [vmem:[#allocation6 + $0x8] sm:$0xf]
        %v356 = vld [vmem:[#allocation6 + $0xc] sm:$0xf]
        %v357 = vld [vmem:[#allocation6 + $0x10] sm:$0xf]
        %v358 = vld [vmem:[#allocation6 + $0x14] sm:$0xf]
        %v359 = vld [vmem:[#allocation6 + $0x18] sm:$0xf]
        %v360 = vld [vmem:[#allocation6 + $0x1c] sm:$0xf]
        %v361 = vld [vmem:[#allocation6 + $0x20] sm:$0xf]
        %v362 = vld [vmem:[#allocation6 + $0x24] sm:$0xf]
        %v363 = vld [vmem:[#allocation6 + $0x28] sm:$0xf]
        %v364 = vld [vmem:[#allocation6 + $0x2c] sm:$0xf]
        %v365 = vld [vmem:[#allocation6 + $0x30] sm:$0xf]
        %v366 = vld [vmem:[#allocation6 + $0x34] sm:$0xf]
        %v367 = vld [vmem:[#allocation6 + $0x38] sm:$0xf]
        %v368 = vld [vmem:[#allocation6 + $0x3c] sm:$0xf]
        %v369 = vld [vmem:[#allocation2 + $0x8] sm:$0xff]
        %v370 = vld [vmem:[#allocation2 + $0x10] sm:$0xff]
        %v371 = vpack.c.bf16 %v370, %v369
        %s372 = scalar_lea.vmem [#allocation6], 64
        %v373 = vld [vmem:[%s372] sm:$0xf]
        %v374 = vld [vmem:[%s372 + $0x4] sm:$0xf]
        %v375 = vld [vmem:[%s372 + $0x8] sm:$0xf]
        %v376 = vld [vmem:[%s372 + $0xc] sm:$0xf]
        %v377 = vld [vmem:[%s372 + $0x10] sm:$0xf]
        %v378 = vld [vmem:[%s372 + $0x14] sm:$0xf]
        %v379 = vld [vmem:[%s372 + $0x18] sm:$0xf]
        %v380 = vld [vmem:[%s372 + $0x1c] sm:$0xf]
        %v381 = vld [vmem:[%s372 + $0x20] sm:$0xf]
        %v382 = vld [vmem:[%s372 + $0x24] sm:$0xf]
        %v383 = vld [vmem:[%s372 + $0x28] sm:$0xf]
        %v384 = vld [vmem:[%s372 + $0x2c] sm:$0xf]
        %v385 = vld [vmem:[%s372 + $0x30] sm:$0xf]
        %v386 = vld [vmem:[%s372 + $0x34] sm:$0xf]
        %v387 = vld [vmem:[%s372 + $0x38] sm:$0xf]
        %v388 = vld [vmem:[%s372 + $0x3c] sm:$0xf]
        %v405 = vunpack.c.l.b16 %v373
        %v406 = vunpack.c.l.b16 %v374
        %v407 = vunpack.c.l.b16 %v375
        %v408 = vunpack.c.l.b16 %v376
        %v409 = vunpack.c.l.b16 %v377
        %v410 = vunpack.c.l.b16 %v378
        %v411 = vunpack.c.l.b16 %v379
        %v412 = vunpack.c.l.b16 %v380
        %v413 = vunpack.c.l.b16 %v381
        %v414 = vunpack.c.l.b16 %v382
        %v415 = vunpack.c.l.b16 %v383
        %v416 = vunpack.c.l.b16 %v384
        %v417 = vunpack.c.l.b16 %v385
        %v418 = vunpack.c.l.b16 %v386
        %v419 = vunpack.c.l.b16 %v387
        %v420 = vunpack.c.l.b16 %v388
        %v421 = vpack.c.b16 %v406, %v405
        %v422 = vpack.c.b16 %v408, %v407
        %v423 = vpack.c.b16 %v410, %v409
        %v424 = vpack.c.b16 %v412, %v411
        %v425 = vpack.c.b16 %v414, %v413
        %v426 = vpack.c.b16 %v416, %v415
        %v427 = vpack.c.b16 %v418, %v417
        %v428 = vpack.c.b16 %v420, %v419
        %437 = vmatprep.subr.bf16.mxu0 0
        %438 = vmatpush1.bf16.msra.mxu0 %v421
        %439 = vmatprep.subr.bf16.mxu0 0
        %440 = vmatpush1.bf16.msra.mxu0 %v422
        %441 = vmatprep.subr.bf16.mxu0 0
        %442 = vmatpush1.bf16.msra.mxu0 %v423
        %443 = vmatprep.subr.bf16.mxu0 0
        %444 = vmatpush1.bf16.msra.mxu0 %v424
        %445 = vmatprep.subr.bf16.mxu0 0
        %446 = vmatpush1.bf16.msra.mxu0 %v425
        %447 = vmatprep.subr.bf16.mxu0 0
        %448 = vmatpush1.bf16.msra.mxu0 %v426
        %449 = vmatprep.subr.bf16.mxu0 0
        %450 = vmatpush1.bf16.msra.mxu0 %v427
        %451 = vmatprep.subr.bf16.mxu0 0
        %452 = vmatpush1.bf16.msra.mxu0 %v428
        %453 = vmatprep.subr.bf16.mxu0 0
        %454 = vmatpush1.bf16.msra.mxu0 0
        %455 = vmatprep.subr.bf16.mxu0 0
        %456 = vmatpush1.bf16.msra.mxu0 0
        %457 = vmatprep.subr.bf16.mxu0 0
        %458 = vmatpush1.bf16.msra.mxu0 0
        %459 = vmatprep.subr.bf16.mxu0 0
        %460 = vmatpush1.bf16.msra.mxu0 0
        %461 = vmatprep.subr.bf16.mxu0 0
        %462 = vmatpush1.bf16.msra.mxu0 0
        %463 = vmatprep.subr.bf16.mxu0 0
        %464 = vmatpush1.bf16.msra.mxu0 0
        %465 = vmatprep.subr.bf16.mxu0 0
        %466 = vmatpush1.bf16.msra.mxu0 0
        %467 = vmatprep.subr.bf16.mxu0 0
        %468 = vmatpush1.bf16.msra.mxu0 0
        %469 = vmatprep.mubr.bf16.mxu0 0
        %470 = vmatmul.mubr.bf16.gmra.mrb[0].mxu0 %v371
        %v471 = vpop.f32.mrb[0].mxu0
        %v472 = vadd.f32 0.0, %v471
        %v473 = vpop.f32.mrb[0].mxu0
        %v474 = vpop.f32.mrb[0].mxu0
        %v475 = vadd.f32 0.0, %v474
        %v476 = vpop.f32.mrb[0].mxu0
        %477 = vdwg.mxu0
        %v494 = vunpack.c.l.b16 %v353
        %v495 = vunpack.c.l.b16 %v354
        %v496 = vunpack.c.l.b16 %v355
        %v497 = vunpack.c.l.b16 %v356
        %v498 = vunpack.c.l.b16 %v357
        %v499 = vunpack.c.l.b16 %v358
        %v500 = vunpack.c.l.b16 %v359
        %v501 = vunpack.c.l.b16 %v360
        %v502 = vunpack.c.l.b16 %v361
        %v503 = vunpack.c.l.b16 %v362
        %v504 = vunpack.c.l.b16 %v363
        %v505 = vunpack.c.l.b16 %v364
        %v506 = vunpack.c.l.b16 %v365
        %v507 = vunpack.c.l.b16 %v366
        %v508 = vunpack.c.l.b16 %v367
        %v509 = vunpack.c.l.b16 %v368
        %v510 = vpack.c.b16 %v495, %v494
        %v511 = vpack.c.b16 %v497, %v496
        %v512 = vpack.c.b16 %v499, %v498
        %v513 = vpack.c.b16 %v501, %v500
        %v514 = vpack.c.b16 %v503, %v502
        %v515 = vpack.c.b16 %v505, %v504
        %v516 = vpack.c.b16 %v507, %v506
        %v517 = vpack.c.b16 %v509, %v508
        %526 = vmatprep.subr.bf16.mxu0 0
        %527 = vmatpush1.bf16.msra.mxu0 %v510
        %528 = vmatprep.subr.bf16.mxu0 0
        %529 = vmatpush1.bf16.msra.mxu0 %v511
        %530 = vmatprep.subr.bf16.mxu0 0
        %531 = vmatpush1.bf16.msra.mxu0 %v512
        %532 = vmatprep.subr.bf16.mxu0 0
        %533 = vmatpush1.bf16.msra.mxu0 %v513
        %534 = vmatprep.subr.bf16.mxu0 0
        %535 = vmatpush1.bf16.msra.mxu0 %v514
        %536 = vmatprep.subr.bf16.mxu0 0
        %537 = vmatpush1.bf16.msra.mxu0 %v515
        %538 = vmatprep.subr.bf16.mxu0 0
        %539 = vmatpush1.bf16.msra.mxu0 %v516
        %540 = vmatprep.subr.bf16.mxu0 0
        %541 = vmatpush1.bf16.msra.mxu0 %v517
        %542 = vmatprep.subr.bf16.mxu0 0
        %543 = vmatpush1.bf16.msra.mxu0 0
        %544 = vmatprep.subr.bf16.mxu0 0
        %545 = vmatpush1.bf16.msra.mxu0 0
        %546 = vmatprep.subr.bf16.mxu0 0
        %547 = vmatpush1.bf16.msra.mxu0 0
        %548 = vmatprep.subr.bf16.mxu0 0
        %549 = vmatpush1.bf16.msra.mxu0 0
        %550 = vmatprep.subr.bf16.mxu0 0
        %551 = vmatpush1.bf16.msra.mxu0 0
        %552 = vmatprep.subr.bf16.mxu0 0
        %553 = vmatpush1.bf16.msra.mxu0 0
        %554 = vmatprep.subr.bf16.mxu0 0
        %555 = vmatpush1.bf16.msra.mxu0 0
        %556 = vmatprep.subr.bf16.mxu0 0
        %557 = vmatpush1.bf16.msra.mxu0 0
        %558 = vmatprep.mubr.bf16.mxu0 0
        %559 = vmatmul.mubr.bf16.gmra.mrb[0].mxu0 %v352
        %v560 = vpop.f32.mrb[0].mxu0
        %v561 = vadd.f32 %v472, %v560
        %v562 = vpop.f32.mrb[0].mxu0
        %v563 = vpop.f32.mrb[0].mxu0
        %v564 = vadd.f32 %v475, %v563
        %v565 = vpop.f32.mrb[0].mxu0
        %566 = vdwg.mxu0
        %v567 = vld [vmem:[#allocation2 + $0x9] sm:$0xff]
        %v568 = vld [vmem:[#allocation2 + $0x11] sm:$0xff]
        %v569 = vpack.c.bf16 %v568, %v567
        %s570 = scalar_lea.vmem [#allocation6], 128
        %v571 = vld [vmem:[%s570] sm:$0xf]
        %v572 = vld [vmem:[%s570 + $0x4] sm:$0xf]
        %v573 = vld [vmem:[%s570 + $0x8] sm:$0xf]
        %v574 = vld [vmem:[%s570 + $0xc] sm:$0xf]
        %v575 = vld [vmem:[%s570 + $0x10] sm:$0xf]
        %v576 = vld [vmem:[%s570 + $0x14] sm:$0xf]
        %v577 = vld [vmem:[%s570 + $0x18] sm:$0xf]
        %v578 = vld [vmem:[%s570 + $0x1c] sm:$0xf]
        %v579 = vld [vmem:[%s570 + $0x20] sm:$0xf]
        %v580 = vld [vmem:[%s570 + $0x24] sm:$0xf]
        %v581 = vld [vmem:[%s570 + $0x28] sm:$0xf]
        %v582 = vld [vmem:[%s570 + $0x2c] sm:$0xf]
        %v583 = vld [vmem:[%s570 + $0x30] sm:$0xf]
        %v584 = vld [vmem:[%s570 + $0x34] sm:$0xf]
        %v585 = vld [vmem:[%s570 + $0x38] sm:$0xf]
        %v586 = vld [vmem:[%s570 + $0x3c] sm:$0xf]
        %v603 = vunpack.c.l.b16 %v571
        %v604 = vunpack.c.l.b16 %v572
        %v605 = vunpack.c.l.b16 %v573
        %v606 = vunpack.c.l.b16 %v574
        %v607 = vunpack.c.l.b16 %v575
        %v608 = vunpack.c.l.b16 %v576
        %v609 = vunpack.c.l.b16 %v577
        %v610 = vunpack.c.l.b16 %v578
        %v611 = vunpack.c.l.b16 %v579
        %v612 = vunpack.c.l.b16 %v580
        %v613 = vunpack.c.l.b16 %v581
        %v614 = vunpack.c.l.b16 %v582
        %v615 = vunpack.c.l.b16 %v583
        %v616 = vunpack.c.l.b16 %v584
        %v617 = vunpack.c.l.b16 %v585
        %v618 = vunpack.c.l.b16 %v586
        %v619 = vpack.c.b16 %v604, %v603
        %v620 = vpack.c.b16 %v606, %v605
        %v621 = vpack.c.b16 %v608, %v607
        %v622 = vpack.c.b16 %v610, %v609
        %v623 = vpack.c.b16 %v612, %v611
        %v624 = vpack.c.b16 %v614, %v613
        %v625 = vpack.c.b16 %v616, %v615
        %v626 = vpack.c.b16 %v618, %v617
        %635 = vmatprep.subr.bf16.mxu0 0
        %636 = vmatpush1.bf16.msra.mxu0 %v619
        %637 = vmatprep.subr.bf16.mxu0 0
        %638 = vmatpush1.bf16.msra.mxu0 %v620
        %639 = vmatprep.subr.bf16.mxu0 0
        %640 = vmatpush1.bf16.msra.mxu0 %v621
        %641 = vmatprep.subr.bf16.mxu0 0
        %642 = vmatpush1.bf16.msra.mxu0 %v622
        %643 = vmatprep.subr.bf16.mxu0 0
        %644 = vmatpush1.bf16.msra.mxu0 %v623
        %645 = vmatprep.subr.bf16.mxu0 0
        %646 = vmatpush1.bf16.msra.mxu0 %v624
        %647 = vmatprep.subr.bf16.mxu0 0
        %648 = vmatpush1.bf16.msra.mxu0 %v625
        %649 = vmatprep.subr.bf16.mxu0 0
        %650 = vmatpush1.bf16.msra.mxu0 %v626
        %651 = vmatprep.subr.bf16.mxu0 0
        %652 = vmatpush1.bf16.msra.mxu0 0
        %653 = vmatprep.subr.bf16.mxu0 0
        %654 = vmatpush1.bf16.msra.mxu0 0
        %655 = vmatprep.subr.bf16.mxu0 0
        %656 = vmatpush1.bf16.msra.mxu0 0
        %657 = vmatprep.subr.bf16.mxu0 0
        %658 = vmatpush1.bf16.msra.mxu0 0
        %659 = vmatprep.subr.bf16.mxu0 0
        %660 = vmatpush1.bf16.msra.mxu0 0
        %661 = vmatprep.subr.bf16.mxu0 0
        %662 = vmatpush1.bf16.msra.mxu0 0
        %663 = vmatprep.subr.bf16.mxu0 0
        %664 = vmatpush1.bf16.msra.mxu0 0
        %665 = vmatprep.subr.bf16.mxu0 0
        %666 = vmatpush1.bf16.msra.mxu0 0
        %667 = vmatprep.mubr.bf16.mxu0 0
        %668 = vmatmul.mubr.bf16.gmra.mrb[0].mxu0 %v569
        %v669 = vpop.f32.mrb[0].mxu0
        %v670 = vadd.f32 0.0, %v669
        %v671 = vpop.f32.mrb[0].mxu0
        %v672 = vpop.f32.mrb[0].mxu0
        %v673 = vadd.f32 0.0, %v672
        %v674 = vpop.f32.mrb[0].mxu0
        %675 = vdwg.mxu0
        %v676 = vadd.f32 %v561, %v670
        %v677 = vadd.f32 %v564, %v673
        %v678 = vld [vmem:[%s3] sm:$0x1]
        %v680 = vlaneseq
        %v681 = vshrl.u32 %v680, 7
        %v682 = vsub.s32 0, %v681
        %v683 = vrot.slane %v678, %v682
        %v685 = vadd.f32 %v676, %v683
        %v686 = vadd.f32 %v677, %v683
        %vm687 = vcmp.gt.f32.partialorder %v685, 0.0
        %vm688 = vcmp.gt.f32.partialorder %v686, 0.0
        %v689 = vmul.f32 %v685, 0.25
        %v690 = vmul.f32 %v686, 0.25
        %v691 = vsel %vm687, %v685, %v689
        %v692 = vsel %vm688, %v686, %v690
        %693 = vst [vmem:[#allocation2 + $0x8] sm:$0xff] %v691
        %694 = vst [vmem:[#allocation2 + $0x10] sm:$0xff] %v692
        %v695 = vld [vmem:[#allocation2 + $0x7] sm:$0xff]
        %v696 = vld [vmem:[#allocation2 + $0xf] sm:$0xff]
        %v697 = vpack.c.bf16 %v696, %v695
        %v698 = vld [vmem:[#allocation8] sm:$0xf]
        %v699 = vld [vmem:[#allocation8 + $0x4] sm:$0xf]
        %v700 = vld [vmem:[#allocation8 + $0x8] sm:$0xf]
        %v701 = vld [vmem:[#allocation8 + $0xc] sm:$0xf]
        %v702 = vld [vmem:[#allocation8 + $0x10] sm:$0xf]
        %v703 = vld [vmem:[#allocation8 + $0x14] sm:$0xf]
        %v704 = vld [vmem:[#allocation8 + $0x18] sm:$0xf]
        %v705 = vld [vmem:[#allocation8 + $0x1c] sm:$0xf]
        %v706 = vld [vmem:[#allocation8 + $0x20] sm:$0xf]
        %v707 = vld [vmem:[#allocation8 + $0x24] sm:$0xf]
        %v708 = vld [vmem:[#allocation8 + $0x28] sm:$0xf]
        %v709 = vld [vmem:[#allocation8 + $0x2c] sm:$0xf]
        %v710 = vld [vmem:[#allocation8 + $0x30] sm:$0xf]
        %v711 = vld [vmem:[#allocation8 + $0x34] sm:$0xf]
        %v712 = vld [vmem:[#allocation8 + $0x38] sm:$0xf]
        %v713 = vld [vmem:[#allocation8 + $0x3c] sm:$0xf]
        %v714 = vld [vmem:[#allocation2 + $0x8] sm:$0xff]
        %v715 = vld [vmem:[#allocation2 + $0x10] sm:$0xff]
        %v716 = vpack.c.bf16 %v715, %v714
        %s717 = scalar_lea.vmem [#allocation8], 64
        %v718 = vld [vmem:[%s717] sm:$0xf]
        %v719 = vld [vmem:[%s717 + $0x4] sm:$0xf]
        %v720 = vld [vmem:[%s717 + $0x8] sm:$0xf]
        %v721 = vld [vmem:[%s717 + $0xc] sm:$0xf]
        %v722 = vld [vmem:[%s717 + $0x10] sm:$0xf]
        %v723 = vld [vmem:[%s717 + $0x14] sm:$0xf]
        %v724 = vld [vmem:[%s717 + $0x18] sm:$0xf]
        %v725 = vld [vmem:[%s717 + $0x1c] sm:$0xf]
        %v726 = vld [vmem:[%s717 + $0x20] sm:$0xf]
        %v727 = vld [vmem:[%s717 + $0x24] sm:$0xf]
        %v728 = vld [vmem:[%s717 + $0x28] sm:$0xf]
        %v729 = vld [vmem:[%s717 + $0x2c] sm:$0xf]
        %v730 = vld [vmem:[%s717 + $0x30] sm:$0xf]
        %v731 = vld [vmem:[%s717 + $0x34] sm:$0xf]
        %v732 = vld [vmem:[%s717 + $0x38] sm:$0xf]
        %v733 = vld [vmem:[%s717 + $0x3c] sm:$0xf]
        %v750 = vunpack.c.l.b16 %v718
        %v751 = vunpack.c.l.b16 %v719
        %v752 = vunpack.c.l.b16 %v720
        %v753 = vunpack.c.l.b16 %v721
        %v754 = vunpack.c.l.b16 %v722
        %v755 = vunpack.c.l.b16 %v723
        %v756 = vunpack.c.l.b16 %v724
        %v757 = vunpack.c.l.b16 %v725
        %v758 = vunpack.c.l.b16 %v726
        %v759 = vunpack.c.l.b16 %v727
        %v760 = vunpack.c.l.b16 %v728
        %v761 = vunpack.c.l.b16 %v729
        %v762 = vunpack.c.l.b16 %v730
        %v763 = vunpack.c.l.b16 %v731
        %v764 = vunpack.c.l.b16 %v732
        %v765 = vunpack.c.l.b16 %v733
        %v766 = vpack.c.b16 %v751, %v750
        %v767 = vpack.c.b16 %v753, %v752
        %v768 = vpack.c.b16 %v755, %v754
        %v769 = vpack.c.b16 %v757, %v756
        %v770 = vpack.c.b16 %v759, %v758
        %v771 = vpack.c.b16 %v761, %v760
        %v772 = vpack.c.b16 %v763, %v762
        %v773 = vpack.c.b16 %v765, %v764
        %782 = vmatprep.subr.bf16.mxu0 0
        %783 = vmatpush1.bf16.msra.mxu0 %v766
        %784 = vmatprep.subr.bf16.mxu0 0
        %785 = vmatpush1.bf16.msra.mxu0 %v767
        %786 = vmatprep.subr.bf16.mxu0 0
        %787 = vmatpush1.bf16.msra.mxu0 %v768
        %788 = vmatprep.subr.bf16.mxu0 0
        %789 = vmatpush1.bf16.msra.mxu0 %v769
        %790 = vmatprep.subr.bf16.mxu0 0
        %791 = vmatpush1.bf16.msra.mxu0 %v770
        %792 = vmatprep.subr.bf16.mxu0 0
        %793 = vmatpush1.bf16.msra.mxu0 %v771
        %794 = vmatprep.subr.bf16.mxu0 0
        %795 = vmatpush1.bf16.msra.mxu0 %v772
        %796 = vmatprep.subr.bf16.mxu0 0
        %797 = vmatpush1.bf16.msra.mxu0 %v773
        %798 = vmatprep.subr.bf16.mxu0 0
        %799 = vmatpush1.bf16.msra.mxu0 0
        %800 = vmatprep.subr.bf16.mxu0 0
        %801 = vmatpush1.bf16.msra.mxu0 0
        %802 = vmatprep.subr.bf16.mxu0 0
        %803 = vmatpush1.bf16.msra.mxu0 0
        %804 = vmatprep.subr.bf16.mxu0 0
        %805 = vmatpush1.bf16.msra.mxu0 0
        %806 = vmatprep.subr.bf16.mxu0 0
        %807 = vmatpush1.bf16.msra.mxu0 0
        %808 = vmatprep.subr.bf16.mxu0 0
        %809 = vmatpush1.bf16.msra.mxu0 0
        %810 = vmatprep.subr.bf16.mxu0 0
        %811 = vmatpush1.bf16.msra.mxu0 0
        %812 = vmatprep.subr.bf16.mxu0 0
        %813 = vmatpush1.bf16.msra.mxu0 0
        %814 = vmatprep.mubr.bf16.mxu0 0
        %815 = vmatmul.mubr.bf16.gmra.mrb[0].mxu0 %v716
        %v816 = vpop.f32.mrb[0].mxu0
        %v817 = vadd.f32 0.0, %v816
        %v818 = vpop.f32.mrb[0].mxu0
        %v819 = vpop.f32.mrb[0].mxu0
        %v820 = vadd.f32 0.0, %v819
        %v821 = vpop.f32.mrb[0].mxu0
        %822 = vdwg.mxu0
        %v839 = vunpack.c.l.b16 %v698
        %v840 = vunpack.c.l.b16 %v699
        %v841 = vunpack.c.l.b16 %v700
        %v842 = vunpack.c.l.b16 %v701
        %v843 = vunpack.c.l.b16 %v702
        %v844 = vunpack.c.l.b16 %v703
        %v845 = vunpack.c.l.b16 %v704
        %v846 = vunpack.c.l.b16 %v705
        %v847 = vunpack.c.l.b16 %v706
        %v848 = vunpack.c.l.b16 %v707
        %v849 = vunpack.c.l.b16 %v708
        %v850 = vunpack.c.l.b16 %v709
        %v851 = vunpack.c.l.b16 %v710
        %v852 = vunpack.c.l.b16 %v711
        %v853 = vunpack.c.l.b16 %v712
        %v854 = vunpack.c.l.b16 %v713
        %v855 = vpack.c.b16 %v840, %v839
        %v856 = vpack.c.b16 %v842, %v841
        %v857 = vpack.c.b16 %v844, %v843
        %v858 = vpack.c.b16 %v846, %v845
        %v859 = vpack.c.b16 %v848, %v847
        %v860 = vpack.c.b16 %v850, %v849
        %v861 = vpack.c.b16 %v852, %v851
        %v862 = vpack.c.b16 %v854, %v853
        %871 = vmatprep.subr.bf16.mxu0 0
        %872 = vmatpush1.bf16.msra.mxu0 %v855
        %873 = vmatprep.subr.bf16.mxu0 0
        %874 = vmatpush1.bf16.msra.mxu0 %v856
        %875 = vmatprep.subr.bf16.mxu0 0
        %876 = vmatpush1.bf16.msra.mxu0 %v857
        %877 = vmatprep.subr.bf16.mxu0 0
        %878 = vmatpush1.bf16.msra.mxu0 %v858
        %879 = vmatprep.subr.bf16.mxu0 0
        %880 = vmatpush1.bf16.msra.mxu0 %v859
        %881 = vmatprep.subr.bf16.mxu0 0
        %882 = vmatpush1.bf16.msra.mxu0 %v860
        %883 = vmatprep.subr.bf16.mxu0 0
        %884 = vmatpush1.bf16.msra.mxu0 %v861
        %885 = vmatprep.subr.bf16.mxu0 0
        %886 = vmatpush1.bf16.msra.mxu0 %v862
        %887 = vmatprep.subr.bf16.mxu0 0
        %888 = vmatpush1.bf16.msra.mxu0 0
        %889 = vmatprep.subr.bf16.mxu0 0
        %890 = vmatpush1.bf16.msra.mxu0 0
        %891 = vmatprep.subr.bf16.mxu0 0
        %892 = vmatpush1.bf16.msra.mxu0 0
        %893 = vmatprep.subr.bf16.mxu0 0
        %894 = vmatpush1.bf16.msra.mxu0 0
        %895 = vmatprep.subr.bf16.mxu0 0
        %896 = vmatpush1.bf16.msra.mxu0 0
        %897 = vmatprep.subr.bf16.mxu0 0
        %898 = vmatpush1.bf16.msra.mxu0 0
        %899 = vmatprep.subr.bf16.mxu0 0
        %900 = vmatpush1.bf16.msra.mxu0 0
        %901 = vmatprep.subr.bf16.mxu0 0
        %902 = vmatpush1.bf16.msra.mxu0 0
        %903 = vmatprep.mubr.bf16.mxu0 0
        %904 = vmatmul.mubr.bf16.gmra.mrb[0].mxu0 %v697
        %v905 = vpop.f32.mrb[0].mxu0
        %v906 = vadd.f32 %v817, %v905
        %v907 = vpop.f32.mrb[0].mxu0
        %v908 = vpop.f32.mrb[0].mxu0
        %v909 = vadd.f32 %v820, %v908
        %v910 = vpop.f32.mrb[0].mxu0
        %911 = vdwg.mxu0
        %v912 = vld [vmem:[#allocation2 + $0x9] sm:$0xff]
        %v913 = vld [vmem:[#allocation2 + $0x11] sm:$0xff]
        %v914 = vpack.c.bf16 %v913, %v912
        %s915 = scalar_lea.vmem [#allocation8], 128
        %v916 = vld [vmem:[%s915] sm:$0xf]
        %v917 = vld [vmem:[%s915 + $0x4] sm:$0xf]
        %v918 = vld [vmem:[%s915 + $0x8] sm:$0xf]
        %v919 = vld [vmem:[%s915 + $0xc] sm:$0xf]
        %v920 = vld [vmem:[%s915 + $0x10] sm:$0xf]
        %v921 = vld [vmem:[%s915 + $0x14] sm:$0xf]
        %v922 = vld [vmem:[%s915 + $0x18] sm:$0xf]
        %v923 = vld [vmem:[%s915 + $0x1c] sm:$0xf]
        %v924 = vld [vmem:[%s915 + $0x20] sm:$0xf]
        %v925 = vld [vmem:[%s915 + $0x24] sm:$0xf]
        %v926 = vld [vmem:[%s915 + $0x28] sm:$0xf]
        %v927 = vld [vmem:[%s915 + $0x2c] sm:$0xf]
        %v928 = vld [vmem:[%s915 + $0x30] sm:$0xf]
        %v929 = vld [vmem:[%s915 + $0x34] sm:$0xf]
        %v930 = vld [vmem:[%s915 + $0x38] sm:$0xf]
        %v931 = vld [vmem:[%s915 + $0x3c] sm:$0xf]
        %v948 = vunpack.c.l.b16 %v916
        %v949 = vunpack.c.l.b16 %v917
        %v950 = vunpack.c.l.b16 %v918
        %v951 = vunpack.c.l.b16 %v919
        %v952 = vunpack.c.l.b16 %v920
        %v953 = vunpack.c.l.b16 %v921
        %v954 = vunpack.c.l.b16 %v922
        %v955 = vunpack.c.l.b16 %v923
        %v956 = vunpack.c.l.b16 %v924
        %v957 = vunpack.c.l.b16 %v925
        %v958 = vunpack.c.l.b16 %v926
        %v959 = vunpack.c.l.b16 %v927
        %v960 = vunpack.c.l.b16 %v928
        %v961 = vunpack.c.l.b16 %v929
        %v962 = vunpack.c.l.b16 %v930
        %v963 = vunpack.c.l.b16 %v931
        %v964 = vpack.c.b16 %v949, %v948
        %v965 = vpack.c.b16 %v951, %v950
        %v966 = vpack.c.b16 %v953, %v952
        %v967 = vpack.c.b16 %v955, %v954
        %v968 = vpack.c.b16 %v957, %v956
        %v969 = vpack.c.b16 %v959, %v958
        %v970 = vpack.c.b16 %v961, %v960
        %v971 = vpack.c.b16 %v963, %v962
        %980 = vmatprep.subr.bf16.mxu0 0
        %981 = vmatpush1.bf16.msra.mxu0 %v964
        %982 = vmatprep.subr.bf16.mxu0 0
        %983 = vmatpush1.bf16.msra.mxu0 %v965
        %984 = vmatprep.subr.bf16.mxu0 0
        %985 = vmatpush1.bf16.msra.mxu0 %v966
        %986 = vmatprep.subr.bf16.mxu0 0
        %987 = vmatpush1.bf16.msra.mxu0 %v967
        %988 = vmatprep.subr.bf16.mxu0 0
        %989 = vmatpush1.bf16.msra.mxu0 %v968
        %990 = vmatprep.subr.bf16.mxu0 0
        %991 = vmatpush1.bf16.msra.mxu0 %v969
        %992 = vmatprep.subr.bf16.mxu0 0
        %993 = vmatpush1.bf16.msra.mxu0 %v970
        %994 = vmatprep.subr.bf16.mxu0 0
        %995 = vmatpush1.bf16.msra.mxu0 %v971
        %996 = vmatprep.subr.bf16.mxu0 0
        %997 = vmatpush1.bf16.msra.mxu0 0
        %998 = vmatprep.subr.bf16.mxu0 0
        %999 = vmatpush1.bf16.msra.mxu0 0
        %1000 = vmatprep.subr.bf16.mxu0 0
        %1001 = vmatpush1.bf16.msra.mxu0 0
        %1002 = vmatprep.subr.bf16.mxu0 0
        %1003 = vmatpush1.bf16.msra.mxu0 0
        %1004 = vmatprep.subr.bf16.mxu0 0
        %1005 = vmatpush1.bf16.msra.mxu0 0
        %1006 = vmatprep.subr.bf16.mxu0 0
        %1007 = vmatpush1.bf16.msra.mxu0 0
        %1008 = vmatprep.subr.bf16.mxu0 0
        %1009 = vmatpush1.bf16.msra.mxu0 0
        %1010 = vmatprep.subr.bf16.mxu0 0
        %1011 = vmatpush1.bf16.msra.mxu0 0
        %1012 = vmatprep.mubr.bf16.mxu0 0
        %1013 = vmatmul.mubr.bf16.gmra.mrb[0].mxu0 %v914
        %v1014 = vpop.f32.mrb[0].mxu0
        %v1015 = vadd.f32 0.0, %v1014
        %v1016 = vpop.f32.mrb[0].mxu0
        %v1017 = vpop.f32.mrb[0].mxu0
        %v1018 = vadd.f32 0.0, %v1017
        %v1019 = vpop.f32.mrb[0].mxu0
        %1020 = vdwg.mxu0
        %v1021 = vadd.f32 %v906, %v1015
        %v1022 = vadd.f32 %v909, %v1018
        %v1023 = vld [vmem:[%s4] sm:$0x1]
        %v1025 = vlaneseq
        %v1026 = vshrl.u32 %v1025, 7
        %v1027 = vsub.s32 0, %v1026
        %v1028 = vrot.slane %v1023, %v1027
        %v1030 = vadd.f32 %v1021, %v1028
        %v1031 = vadd.f32 %v1022, %v1028
        %vm1032 = vcmp.gt.f32.partialorder %v1030, 0.0
        %vm1033 = vcmp.gt.f32.partialorder %v1031, 0.0
        %v1034 = vmul.f32 %v1030, 0.25
        %v1035 = vmul.f32 %v1031, 0.25
        %v1036 = vsel %vm1032, %v1030, %v1034
        %v1037 = vsel %vm1033, %v1031, %v1035
        %vm1038 = vcmp.gt.f32.partialorder %v1036, 0.0
        %vm1039 = vcmp.gt.f32.partialorder %v1037, 0.0
        %v1040 = vmul.f32 %v1036, 0.25
        %v1041 = vmul.f32 %v1037, 0.25
        %v1042 = vsel %vm1038, %v1036, %v1040
        %v1043 = vsel %vm1039, %v1037, %v1041
        %v1044 = vpack.c.bf16 %v347, %v346
        %v1045 = vld [vmem:[#allocation9] sm:$0xf]
        %v1046 = vld [vmem:[#allocation9 + $0x4] sm:$0xf]
        %v1047 = vld [vmem:[#allocation9 + $0x8] sm:$0xf]
        %v1048 = vld [vmem:[#allocation9 + $0xc] sm:$0xf]
        %v1049 = vld [vmem:[#allocation9 + $0x10] sm:$0xf]
        %v1050 = vld [vmem:[#allocation9 + $0x14] sm:$0xf]
        %v1051 = vld [vmem:[#allocation9 + $0x18] sm:$0xf]
        %v1052 = vld [vmem:[#allocation9 + $0x1c] sm:$0xf]
        %v1053 = vld [vmem:[#allocation9 + $0x20] sm:$0xf]
        %v1054 = vld [vmem:[#allocation9 + $0x24] sm:$0xf]
        %v1055 = vld [vmem:[#allocation9 + $0x28] sm:$0xf]
        %v1056 = vld [vmem:[#allocation9 + $0x2c] sm:$0xf]
        %v1057 = vld [vmem:[#allocation9 + $0x30] sm:$0xf]
        %v1058 = vld [vmem:[#allocation9 + $0x34] sm:$0xf]
        %v1059 = vld [vmem:[#allocation9 + $0x38] sm:$0xf]
        %v1060 = vld [vmem:[#allocation9 + $0x3c] sm:$0xf]
        %v1061 = vld [vmem:[%s6] sm:$0x1]
        %v1063 = vlaneseq
        %v1064 = vshrl.u32 %v1063, 7
        %v1065 = vsub.s32 0, %v1064
        %v1066 = vrot.slane %v1061, %v1065
        %v1084 = vunpack.c.l.b16 %v1045
        %v1085 = vunpack.c.l.b16 %v1046
        %v1086 = vunpack.c.l.b16 %v1047
        %v1087 = vunpack.c.l.b16 %v1048
        %v1088 = vunpack.c.l.b16 %v1049
        %v1089 = vunpack.c.l.b16 %v1050
        %v1090 = vunpack.c.l.b16 %v1051
        %v1091 = vunpack.c.l.b16 %v1052
        %v1092 = vunpack.c.l.b16 %v1053
        %v1093 = vunpack.c.l.b16 %v1054
        %v1094 = vunpack.c.l.b16 %v1055
        %v1095 = vunpack.c.l.b16 %v1056
        %v1096 = vunpack.c.l.b16 %v1057
        %v1097 = vunpack.c.l.b16 %v1058
        %v1098 = vunpack.c.l.b16 %v1059
        %v1099 = vunpack.c.l.b16 %v1060
        %v1100 = vpack.c.b16 %v1085, %v1084
        %v1101 = vpack.c.b16 %v1087, %v1086
        %v1102 = vpack.c.b16 %v1089, %v1088
        %v1103 = vpack.c.b16 %v1091, %v1090
        %v1104 = vpack.c.b16 %v1093, %v1092
        %v1105 = vpack.c.b16 %v1095, %v1094
        %v1106 = vpack.c.b16 %v1097, %v1096
        %v1107 = vpack.c.b16 %v1099, %v1098
        %1116 = vmatprep.subr.bf16.mxu0 0
        %1117 = vmatpush1.bf16.msra.mxu0 %v1100
        %1118 = vmatprep.subr.bf16.mxu0 0
        %1119 = vmatpush1.bf16.msra.mxu0 %v1101
        %1120 = vmatprep.subr.bf16.mxu0 0
        %1121 = vmatpush1.bf16.msra.mxu0 %v1102
        %1122 = vmatprep.subr.bf16.mxu0 0
        %1123 = vmatpush1.bf16.msra.mxu0 %v1103
        %1124 = vmatprep.subr.bf16.mxu0 0
        %1125 = vmatpush1.bf16.msra.mxu0 %v1104
        %1126 = vmatprep.subr.bf16.mxu0 0
        %1127 = vmatpush1.bf16.msra.mxu0 %v1105
        %1128 = vmatprep.subr.bf16.mxu0 0
        %1129 = vmatpush1.bf16.msra.mxu0 %v1106
        %1130 = vmatprep.subr.bf16.mxu0 0
        %1131 = vmatpush1.bf16.msra.mxu0 %v1107
        %1132 = vmatprep.subr.bf16.mxu0 0
        %1133 = vmatpush1.bf16.msra.mxu0 0
        %1134 = vmatprep.subr.bf16.mxu0 0
        %1135 = vmatpush1.bf16.msra.mxu0 0
        %1136 = vmatprep.subr.bf16.mxu0 0
        %1137 = vmatpush1.bf16.msra.mxu0 0
        %1138 = vmatprep.subr.bf16.mxu0 0
        %1139 = vmatpush1.bf16.msra.mxu0 0
        %1140 = vmatprep.subr.bf16.mxu0 0
        %1141 = vmatpush1.bf16.msra.mxu0 0
        %1142 = vmatprep.subr.bf16.mxu0 0
        %1143 = vmatpush1.bf16.msra.mxu0 0
        %1144 = vmatprep.subr.bf16.mxu0 0
        %1145 = vmatpush1.bf16.msra.mxu0 0
        %1146 = vmatprep.subr.bf16.mxu0 0
        %1147 = vmatpush1.bf16.msra.mxu0 0
        %1148 = vmatprep.mubr.bf16.mxu0 0
        %1149 = vmatmul.mubr.bf16.gmra.mrb[0].mxu0 %v1044
        %v1150 = vpop.f32.mrb[0].mxu0
        %v1151 = vadd.f32 %v1066, %v1150
        %v1152 = vpop.f32.mrb[0].mxu0
        %v1153 = vpop.f32.mrb[0].mxu0
        %v1154 = vadd.f32 %v1066, %v1153
        %v1155 = vpop.f32.mrb[0].mxu0
        %1156 = vdwg.mxu0
        %v1157 = vadd.f32 %v1151, %v1042
        %v1158 = vadd.f32 %v1154, %v1043
        %1159 = vst [vmem:[#allocation2 + $0x8] sm:$0xff] %v1157
        %1160 = vst [vmem:[#allocation2 + $0x10] sm:$0xff] %v1158
        %v1161 = vld [vmem:[#allocation2 + $0x6] sm:$0xff]
        %v1162 = vld [vmem:[#allocation2 + $0xe] sm:$0xff]
        %v1163 = vpack.c.bf16 %v1162, %v1161
        %s1164 = scalar_lea.vmem [#allocation6], 192
        %v1165 = vld [vmem:[%s1164] sm:$0xf]
        %v1166 = vld [vmem:[%s1164 + $0x4] sm:$0xf]
        %v1167 = vld [vmem:[%s1164 + $0x8] sm:$0xf]
        %v1168 = vld [vmem:[%s1164 + $0xc] sm:$0xf]
        %v1169 = vld [vmem:[%s1164 + $0x10] sm:$0xf]
        %v1170 = vld [vmem:[%s1164 + $0x14] sm:$0xf]
        %v1171 = vld [vmem:[%s1164 + $0x18] sm:$0xf]
        %v1172 = vld [vmem:[%s1164 + $0x1c] sm:$0xf]
        %v1173 = vld [vmem:[%s1164 + $0x20] sm:$0xf]
        %v1174 = vld [vmem:[%s1164 + $0x24] sm:$0xf]
        %v1175 = vld [vmem:[%s1164 + $0x28] sm:$0xf]
        %v1176 = vld [vmem:[%s1164 + $0x2c] sm:$0xf]
        %v1177 = vld [vmem:[%s1164 + $0x30] sm:$0xf]
        %v1178 = vld [vmem:[%s1164 + $0x34] sm:$0xf]
        %v1179 = vld [vmem:[%s1164 + $0x38] sm:$0xf]
        %v1180 = vld [vmem:[%s1164 + $0x3c] sm:$0xf]
        %v1181 = vld [vmem:[#allocation2 + $0x8] sm:$0xff]
        %v1182 = vld [vmem:[#allocation2 + $0x10] sm:$0xff]
        %v1183 = vpack.c.bf16 %v1182, %v1181
        %s1184 = scalar_lea.vmem [#allocation6], 256
        %v1185 = vld [vmem:[%s1184] sm:$0xf]
        %v1186 = vld [vmem:[%s1184 + $0x4] sm:$0xf]
        %v1187 = vld [vmem:[%s1184 + $0x8] sm:$0xf]
        %v1188 = vld [vmem:[%s1184 + $0xc] sm:$0xf]
        %v1189 = vld [vmem:[%s1184 + $0x10] sm:$0xf]
        %v1190 = vld [vmem:[%s1184 + $0x14] sm:$0xf]
        %v1191 = vld [vmem:[%s1184 + $0x18] sm:$0xf]
        %v1192 = vld [vmem:[%s1184 + $0x1c] sm:$0xf]
        %v1193 = vld [vmem:[%s1184 + $0x20] sm:$0xf]
        %v1194 = vld [vmem:[%s1184 + $0x24] sm:$0xf]
        %v1195 = vld [vmem:[%s1184 + $0x28] sm:$0xf]
        %v1196 = vld [vmem:[%s1184 + $0x2c] sm:$0xf]
        %v1197 = vld [vmem:[%s1184 + $0x30] sm:$0xf]
        %v1198 = vld [vmem:[%s1184 + $0x34] sm:$0xf]
        %v1199 = vld [vmem:[%s1184 + $0x38] sm:$0xf]
        %v1200 = vld [vmem:[%s1184 + $0x3c] sm:$0xf]
        %v1217 = vunpack.c.l.b16 %v1185
        %v1218 = vunpack.c.l.b16 %v1186
        %v1219 = vunpack.c.l.b16 %v1187
        %v1220 = vunpack.c.l.b16 %v1188
        %v1221 = vunpack.c.l.b16 %v1189
        %v1222 = vunpack.c.l.b16 %v1190
        %v1223 = vunpack.c.l.b16 %v1191
        %v1224 = vunpack.c.l.b16 %v1192
        %v1225 = vunpack.c.l.b16 %v1193
        %v1226 = vunpack.c.l.b16 %v1194
        %v1227 = vunpack.c.l.b16 %v1195
        %v1228 = vunpack.c.l.b16 %v1196
        %v1229 = vunpack.c.l.b16 %v1197
        %v1230 = vunpack.c.l.b16 %v1198
        %v1231 = vunpack.c.l.b16 %v1199
        %v1232 = vunpack.c.l.b16 %v1200
        %v1233 = vpack.c.b16 %v1218, %v1217
        %v1234 = vpack.c.b16 %v1220, %v1219
        %v1235 = vpack.c.b16 %v1222, %v1221
        %v1236 = vpack.c.b16 %v1224, %v1223
        %v1237 = vpack.c.b16 %v1226, %v1225
        %v1238 = vpack.c.b16 %v1228, %v1227
        %v1239 = vpack.c.b16 %v1230, %v1229
        %v1240 = vpack.c.b16 %v1232, %v1231
        %1249 = vmatprep.subr.bf16.mxu0 0
        %1250 = vmatpush1.bf16.msra.mxu0 %v1233
        %1251 = vmatprep.subr.bf16.mxu0 0
        %1252 = vmatpush1.bf16.msra.mxu0 %v1234
        %1253 = vmatprep.subr.bf16.mxu0 0
        %1254 = vmatpush1.bf16.msra.mxu0 %v1235
        %1255 = vmatprep.subr.bf16.mxu0 0
        %1256 = vmatpush1.bf16.msra.mxu0 %v1236
        %1257 = vmatprep.subr.bf16.mxu0 0
        %1258 = vmatpush1.bf16.msra.mxu0 %v1237
        %1259 = vmatprep.subr.bf16.mxu0 0
        %1260 = vmatpush1.bf16.msra.mxu0 %v1238
        %1261 = vmatprep.subr.bf16.mxu0 0
        %1262 = vmatpush1.bf16.msra.mxu0 %v1239
        %1263 = vmatprep.subr.bf16.mxu0 0
        %1264 = vmatpush1.bf16.msra.mxu0 %v1240
        %1265 = vmatprep.subr.bf16.mxu0 0
        %1266 = vmatpush1.bf16.msra.mxu0 0
        %1267 = vmatprep.subr.bf16.mxu0 0
        %1268 = vmatpush1.bf16.msra.mxu0 0
        %1269 = vmatprep.subr.bf16.mxu0 0
        %1270 = vmatpush1.bf16.msra.mxu0 0
        %1271 = vmatprep.subr.bf16.mxu0 0
        %1272 = vmatpush1.bf16.msra.mxu0 0
        %1273 = vmatprep.subr.bf16.mxu0 0
        %1274 = vmatpush1.bf16.msra.mxu0 0
        %1275 = vmatprep.subr.bf16.mxu0 0
        %1276 = vmatpush1.bf16.msra.mxu0 0
        %1277 = vmatprep.subr.bf16.mxu0 0
        %1278 = vmatpush1.bf16.msra.mxu0 0
        %1279 = vmatprep.subr.bf16.mxu0 0
        %1280 = vmatpush1.bf16.msra.mxu0 0
        %1281 = vmatprep.mubr.bf16.mxu0 0
        %1282 = vmatmul.mubr.bf16.gmra.mrb[0].mxu0 %v1183
        %v1283 = vpop.f32.mrb[0].mxu0
        %v1284 = vadd.f32 0.0, %v1283
        %v1285 = vpop.f32.mrb[0].mxu0
        %v1286 = vpop.f32.mrb[0].mxu0
        %v1287 = vadd.f32 0.0, %v1286
        %v1288 = vpop.f32.mrb[0].mxu0
        %1289 = vdwg.mxu0
        %v1306 = vunpack.c.l.b16 %v1165
        %v1307 = vunpack.c.l.b16 %v1166
        %v1308 = vunpack.c.l.b16 %v1167
        %v1309 = vunpack.c.l.b16 %v1168
        %v1310 = vunpack.c.l.b16 %v1169
        %v1311 = vunpack.c.l.b16 %v1170
        %v1312 = vunpack.c.l.b16 %v1171
        %v1313 = vunpack.c.l.b16 %v1172
        %v1314 = vunpack.c.l.b16 %v1173
        %v1315 = vunpack.c.l.b16 %v1174
        %v1316 = vunpack.c.l.b16 %v1175
        %v1317 = vunpack.c.l.b16 %v1176
        %v1318 = vunpack.c.l.b16 %v1177
        %v1319 = vunpack.c.l.b16 %v1178
        %v1320 = vunpack.c.l.b16 %v1179
        %v1321 = vunpack.c.l.b16 %v1180
        %v1322 = vpack.c.b16 %v1307, %v1306
        %v1323 = vpack.c.b16 %v1309, %v1308
        %v1324 = vpack.c.b16 %v1311, %v1310
        %v1325 = vpack.c.b16 %v1313, %v1312
        %v1326 = vpack.c.b16 %v1315, %v1314
        %v1327 = vpack.c.b16 %v1317, %v1316
        %v1328 = vpack.c.b16 %v1319, %v1318
        %v1329 = vpack.c.b16 %v1321, %v1320
        %1338 = vmatprep.subr.bf16.mxu0 0
        %1339 = vmatpush1.bf16.msra.mxu0 %v1322
        %1340 = vmatprep.subr.bf16.mxu0 0
        %1341 = vmatpush1.bf16.msra.mxu0 %v1323
        %1342 = vmatprep.subr.bf16.mxu0 0
        %1343 = vmatpush1.bf16.msra.mxu0 %v1324
        %1344 = vmatprep.subr.bf16.mxu0 0
        %1345 = vmatpush1.bf16.msra.mxu0 %v1325
        %1346 = vmatprep.subr.bf16.mxu0 0
        %1347 = vmatpush1.bf16.msra.mxu0 %v1326
        %1348 = vmatprep.subr.bf16.mxu0 0
        %1349 = vmatpush1.bf16.msra.mxu0 %v1327
        %1350 = vmatprep.subr.bf16.mxu0 0
        %1351 = vmatpush1.bf16.msra.mxu0 %v1328
        %1352 = vmatprep.subr.bf16.mxu0 0
        %1353 = vmatpush1.bf16.msra.mxu0 %v1329
        %1354 = vmatprep.subr.bf16.mxu0 0
        %1355 = vmatpush1.bf16.msra.mxu0 0
        %1356 = vmatprep.subr.bf16.mxu0 0
        %1357 = vmatpush1.bf16.msra.mxu0 0
        %1358 = vmatprep.subr.bf16.mxu0 0
        %1359 = vmatpush1.bf16.msra.mxu0 0
        %1360 = vmatprep.subr.bf16.mxu0 0
        %1361 = vmatpush1.bf16.msra.mxu0 0
        %1362 = vmatprep.subr.bf16.mxu0 0
        %1363 = vmatpush1.bf16.msra.mxu0 0
        %1364 = vmatprep.subr.bf16.mxu0 0
        %1365 = vmatpush1.bf16.msra.mxu0 0
        %1366 = vmatprep.subr.bf16.mxu0 0
        %1367 = vmatpush1.bf16.msra.mxu0 0
        %1368 = vmatprep.subr.bf16.mxu0 0
        %1369 = vmatpush1.bf16.msra.mxu0 0
        %1370 = vmatprep.mubr.bf16.mxu0 0
        %1371 = vmatmul.mubr.bf16.gmra.mrb[0].mxu0 %v1163
        %v1372 = vpop.f32.mrb[0].mxu0
        %v1373 = vadd.f32 %v1284, %v1372
        %v1374 = vpop.f32.mrb[0].mxu0
        %v1375 = vpop.f32.mrb[0].mxu0
        %v1376 = vadd.f32 %v1287, %v1375
        %v1377 = vpop.f32.mrb[0].mxu0
        %1378 = vdwg.mxu0
        %v1379 = vld [vmem:[#allocation2 + $0xa] sm:$0xff]
        %v1380 = vld [vmem:[#allocation2 + $0x12] sm:$0xff]
        %v1381 = vpack.c.bf16 %v1380, %v1379
        %s1382 = scalar_lea.vmem [#allocation6], 320
        %v1383 = vld [vmem:[%s1382] sm:$0xf]
        %v1384 = vld [vmem:[%s1382 + $0x4] sm:$0xf]
        %v1385 = vld [vmem:[%s1382 + $0x8] sm:$0xf]
        %v1386 = vld [vmem:[%s1382 + $0xc] sm:$0xf]
        %v1387 = vld [vmem:[%s1382 + $0x10] sm:$0xf]
        %v1388 = vld [vmem:[%s1382 + $0x14] sm:$0xf]
        %v1389 = vld [vmem:[%s1382 + $0x18] sm:$0xf]
        %v1390 = vld [vmem:[%s1382 + $0x1c] sm:$0xf]
        %v1391 = vld [vmem:[%s1382 + $0x20] sm:$0xf]
        %v1392 = vld [vmem:[%s1382 + $0x24] sm:$0xf]
        %v1393 = vld [vmem:[%s1382 + $0x28] sm:$0xf]
        %v1394 = vld [vmem:[%s1382 + $0x2c] sm:$0xf]
        %v1395 = vld [vmem:[%s1382 + $0x30] sm:$0xf]
        %v1396 = vld [vmem:[%s1382 + $0x34] sm:$0xf]
        %v1397 = vld [vmem:[%s1382 + $0x38] sm:$0xf]
        %v1398 = vld [vmem:[%s1382 + $0x3c] sm:$0xf]
        %v1415 = vunpack.c.l.b16 %v1383
        %v1416 = vunpack.c.l.b16 %v1384
        %v1417 = vunpack.c.l.b16 %v1385
        %v1418 = vunpack.c.l.b16 %v1386
        %v1419 = vunpack.c.l.b16 %v1387
        %v1420 = vunpack.c.l.b16 %v1388
        %v1421 = vunpack.c.l.b16 %v1389
        %v1422 = vunpack.c.l.b16 %v1390
        %v1423 = vunpack.c.l.b16 %v1391
        %v1424 = vunpack.c.l.b16 %v1392
        %v1425 = vunpack.c.l.b16 %v1393
        %v1426 = vunpack.c.l.b16 %v1394
        %v1427 = vunpack.c.l.b16 %v1395
        %v1428 = vunpack.c.l.b16 %v1396
        %v1429 = vunpack.c.l.b16 %v1397
        %v1430 = vunpack.c.l.b16 %v1398
        %v1431 = vpack.c.b16 %v1416, %v1415
        %v1432 = vpack.c.b16 %v1418, %v1417
        %v1433 = vpack.c.b16 %v1420, %v1419
        %v1434 = vpack.c.b16 %v1422, %v1421
        %v1435 = vpack.c.b16 %v1424, %v1423
        %v1436 = vpack.c.b16 %v1426, %v1425
        %v1437 = vpack.c.b16 %v1428, %v1427
        %v1438 = vpack.c.b16 %v1430, %v1429
        %1447 = vmatprep.subr.bf16.mxu0 0
        %1448 = vmatpush1.bf16.msra.mxu0 %v1431
        %1449 = vmatprep.subr.bf16.mxu0 0
        %1450 = vmatpush1.bf16.msra.mxu0 %v1432
        %1451 = vmatprep.subr.bf16.mxu0 0
        %1452 = vmatpush1.bf16.msra.mxu0 %v1433
        %1453 = vmatprep.subr.bf16.mxu0 0
        %1454 = vmatpush1.bf16.msra.mxu0 %v1434
        %1455 = vmatprep.subr.bf16.mxu0 0
        %1456 = vmatpush1.bf16.msra.mxu0 %v1435
        %1457 = vmatprep.subr.bf16.mxu0 0
        %1458 = vmatpush1.bf16.msra.mxu0 %v1436
        %1459 = vmatprep.subr.bf16.mxu0 0
        %1460 = vmatpush1.bf16.msra.mxu0 %v1437
        %1461 = vmatprep.subr.bf16.mxu0 0
        %1462 = vmatpush1.bf16.msra.mxu0 %v1438
        %1463 = vmatprep.subr.bf16.mxu0 0
        %1464 = vmatpush1.bf16.msra.mxu0 0
        %1465 = vmatprep.subr.bf16.mxu0 0
        %1466 = vmatpush1.bf16.msra.mxu0 0
        %1467 = vmatprep.subr.bf16.mxu0 0
        %1468 = vmatpush1.bf16.msra.mxu0 0
        %1469 = vmatprep.subr.bf16.mxu0 0
        %1470 = vmatpush1.bf16.msra.mxu0 0
        %1471 = vmatprep.subr.bf16.mxu0 0
        %1472 = vmatpush1.bf16.msra.mxu0 0
        %1473 = vmatprep.subr.bf16.mxu0 0
        %1474 = vmatpush1.bf16.msra.mxu0 0
        %1475 = vmatprep.subr.bf16.mxu0 0
        %1476 = vmatpush1.bf16.msra.mxu0 0
        %1477 = vmatprep.subr.bf16.mxu0 0
        %1478 = vmatpush1.bf16.msra.mxu0 0
        %1479 = vmatprep.mubr.bf16.mxu0 0
        %1480 = vmatmul.mubr.bf16.gmra.mrb[0].mxu0 %v1381
        %v1481 = vpop.f32.mrb[0].mxu0
        %v1482 = vadd.f32 0.0, %v1481
        %v1483 = vpop.f32.mrb[0].mxu0
        %v1484 = vpop.f32.mrb[0].mxu0
        %v1485 = vadd.f32 0.0, %v1484
        %v1486 = vpop.f32.mrb[0].mxu0
        %1487 = vdwg.mxu0
        %v1488 = vadd.f32 %v1373, %v1482
        %v1489 = vadd.f32 %v1376, %v1485
        %s1490 = scalar_lea.vmem %s3, 1
        %v1491 = vld [vmem:[%s1490] sm:$0x1]
        %v1493 = vlaneseq
        %v1494 = vshrl.u32 %v1493, 7
        %v1495 = vsub.s32 0, %v1494
        %v1496 = vrot.slane %v1491, %v1495
        %v1498 = vadd.f32 %v1488, %v1496
        %v1499 = vadd.f32 %v1489, %v1496
        %vm1500 = vcmp.gt.f32.partialorder %v1498, 0.0
        %vm1501 = vcmp.gt.f32.partialorder %v1499, 0.0
        %v1502 = vmul.f32 %v1498, 0.25
        %v1503 = vmul.f32 %v1499, 0.25
        %v1504 = vsel %vm1500, %v1498, %v1502
        %v1505 = vsel %vm1501, %v1499, %v1503
        %1506 = vst [vmem:[#allocation2 + $0x8] sm:$0xff] %v1504
        %1507 = vst [vmem:[#allocation2 + $0x10] sm:$0xff] %v1505
        %v1508 = vld [vmem:[#allocation2 + $0x6] sm:$0xff]
        %v1509 = vld [vmem:[#allocation2 + $0xe] sm:$0xff]
        %v1510 = vpack.c.bf16 %v1509, %v1508
        %s1511 = scalar_lea.vmem [#allocation8], 192
        %v1512 = vld [vmem:[%s1511] sm:$0xf]
        %v1513 = vld [vmem:[%s1511 + $0x4] sm:$0xf]
        %v1514 = vld [vmem:[%s1511 + $0x8] sm:$0xf]
        %v1515 = vld [vmem:[%s1511 + $0xc] sm:$0xf]
        %v1516 = vld [vmem:[%s1511 + $0x10] sm:$0xf]
        %v1517 = vld [vmem:[%s1511 + $0x14] sm:$0xf]
        %v1518 = vld [vmem:[%s1511 + $0x18] sm:$0xf]
        %v1519 = vld [vmem:[%s1511 + $0x1c] sm:$0xf]
        %v1520 = vld [vmem:[%s1511 + $0x20] sm:$0xf]
        %v1521 = vld [vmem:[%s1511 + $0x24] sm:$0xf]
        %v1522 = vld [vmem:[%s1511 + $0x28] sm:$0xf]
        %v1523 = vld [vmem:[%s1511 + $0x2c] sm:$0xf]
        %v1524 = vld [vmem:[%s1511 + $0x30] sm:$0xf]
        %v1525 = vld [vmem:[%s1511 + $0x34] sm:$0xf]
        %v1526 = vld [vmem:[%s1511 + $0x38] sm:$0xf]
        %v1527 = vld [vmem:[%s1511 + $0x3c] sm:$0xf]
        %v1528 = vld [vmem:[#allocation2 + $0x8] sm:$0xff]
        %v1529 = vld [vmem:[#allocation2 + $0x10] sm:$0xff]
        %v1530 = vpack.c.bf16 %v1529, %v1528
        %s1531 = scalar_lea.vmem [#allocation8], 256
        %v1532 = vld [vmem:[%s1531] sm:$0xf]
        %v1533 = vld [vmem:[%s1531 + $0x4] sm:$0xf]
        %v1534 = vld [vmem:[%s1531 + $0x8] sm:$0xf]
        %v1535 = vld [vmem:[%s1531 + $0xc] sm:$0xf]
        %v1536 = vld [vmem:[%s1531 + $0x10] sm:$0xf]
        %v1537 = vld [vmem:[%s1531 + $0x14] sm:$0xf]
        %v1538 = vld [vmem:[%s1531 + $0x18] sm:$0xf]
        %v1539 = vld [vmem:[%s1531 + $0x1c] sm:$0xf]
        %v1540 = vld [vmem:[%s1531 + $0x20] sm:$0xf]
        %v1541 = vld [vmem:[%s1531 + $0x24] sm:$0xf]
        %v1542 = vld [vmem:[%s1531 + $0x28] sm:$0xf]
        %v1543 = vld [vmem:[%s1531 + $0x2c] sm:$0xf]
        %v1544 = vld [vmem:[%s1531 + $0x30] sm:$0xf]
        %v1545 = vld [vmem:[%s1531 + $0x34] sm:$0xf]
        %v1546 = vld [vmem:[%s1531 + $0x38] sm:$0xf]
        %v1547 = vld [vmem:[%s1531 + $0x3c] sm:$0xf]
        %v1564 = vunpack.c.l.b16 %v1532
        %v1565 = vunpack.c.l.b16 %v1533
        %v1566 = vunpack.c.l.b16 %v1534
        %v1567 = vunpack.c.l.b16 %v1535
        %v1568 = vunpack.c.l.b16 %v1536
        %v1569 = vunpack.c.l.b16 %v1537
        %v1570 = vunpack.c.l.b16 %v1538
        %v1571 = vunpack.c.l.b16 %v1539
        %v1572 = vunpack.c.l.b16 %v1540
        %v1573 = vunpack.c.l.b16 %v1541
        %v1574 = vunpack.c.l.b16 %v1542
        %v1575 = vunpack.c.l.b16 %v1543
        %v1576 = vunpack.c.l.b16 %v1544
        %v1577 = vunpack.c.l.b16 %v1545
        %v1578 = vunpack.c.l.b16 %v1546
        %v1579 = vunpack.c.l.b16 %v1547
        %v1580 = vpack.c.b16 %v1565, %v1564
        %v1581 = vpack.c.b16 %v1567, %v1566
        %v1582 = vpack.c.b16 %v1569, %v1568
        %v1583 = vpack.c.b16 %v1571, %v1570
        %v1584 = vpack.c.b16 %v1573, %v1572
        %v1585 = vpack.c.b16 %v1575, %v1574
        %v1586 = vpack.c.b16 %v1577, %v1576
        %v1587 = vpack.c.b16 %v1579, %v1578
        %1596 = vmatprep.subr.bf16.mxu0 0
        %1597 = vmatpush1.bf16.msra.mxu0 %v1580
        %1598 = vmatprep.subr.bf16.mxu0 0
        %1599 = vmatpush1.bf16.msra.mxu0 %v1581
        %1600 = vmatprep.subr.bf16.mxu0 0
        %1601 = vmatpush1.bf16.msra.mxu0 %v1582
        %1602 = vmatprep.subr.bf16.mxu0 0
        %1603 = vmatpush1.bf16.msra.mxu0 %v1583
        %1604 = vmatprep.subr.bf16.mxu0 0
        %1605 = vmatpush1.bf16.msra.mxu0 %v1584
        %1606 = vmatprep.subr.bf16.mxu0 0
        %1607 = vmatpush1.bf16.msra.mxu0 %v1585
        %1608 = vmatprep.subr.bf16.mxu0 0
        %1609 = vmatpush1.bf16.msra.mxu0 %v1586
        %1610 = vmatprep.subr.bf16.mxu0 0
        %1611 = vmatpush1.bf16.msra.mxu0 %v1587
        %1612 = vmatprep.subr.bf16.mxu0 0
        %1613 = vmatpush1.bf16.msra.mxu0 0
        %1614 = vmatprep.subr.bf16.mxu0 0
        %1615 = vmatpush1.bf16.msra.mxu0 0
        %1616 = vmatprep.subr.bf16.mxu0 0
        %1617 = vmatpush1.bf16.msra.mxu0 0
        %1618 = vmatprep.subr.bf16.mxu0 0
        %1619 = vmatpush1.bf16.msra.mxu0 0
        %1620 = vmatprep.subr.bf16.mxu0 0
        %1621 = vmatpush1.bf16.msra.mxu0 0
        %1622 = vmatprep.subr.bf16.mxu0 0
        %1623 = vmatpush1.bf16.msra.mxu0 0
        %1624 = vmatprep.subr.bf16.mxu0 0
        %1625 = vmatpush1.bf16.msra.mxu0 0
        %1626 = vmatprep.subr.bf16.mxu0 0
        %1627 = vmatpush1.bf16.msra.mxu0 0
        %1628 = vmatprep.mubr.bf16.mxu0 0
        %1629 = vmatmul.mubr.bf16.gmra.mrb[0].mxu0 %v1530
        %v1630 = vpop.f32.mrb[0].mxu0
        %v1631 = vadd.f32 0.0, %v1630
        %v1632 = vpop.f32.mrb[0].mxu0
        %v1633 = vpop.f32.mrb[0].mxu0
        %v1634 = vadd.f32 0.0, %v1633
        %v1635 = vpop.f32.mrb[0].mxu0
        %1636 = vdwg.mxu0
        %v1653 = vunpack.c.l.b16 %v1512
        %v1654 = vunpack.c.l.b16 %v1513
        %v1655 = vunpack.c.l.b16 %v1514
        %v1656 = vunpack.c.l.b16 %v1515
        %v1657 = vunpack.c.l.b16 %v1516
        %v1658 = vunpack.c.l.b16 %v1517
        %v1659 = vunpack.c.l.b16 %v1518
        %v1660 = vunpack.c.l.b16 %v1519
        %v1661 = vunpack.c.l.b16 %v1520
        %v1662 = vunpack.c.l.b16 %v1521
        %v1663 = vunpack.c.l.b16 %v1522
        %v1664 = vunpack.c.l.b16 %v1523
        %v1665 = vunpack.c.l.b16 %v1524
        %v1666 = vunpack.c.l.b16 %v1525
        %v1667 = vunpack.c.l.b16 %v1526
        %v1668 = vunpack.c.l.b16 %v1527
        %v1669 = vpack.c.b16 %v1654, %v1653
        %v1670 = vpack.c.b16 %v1656, %v1655
        %v1671 = vpack.c.b16 %v1658, %v1657
        %v1672 = vpack.c.b16 %v1660, %v1659
        %v1673 = vpack.c.b16 %v1662, %v1661
        %v1674 = vpack.c.b16 %v1664, %v1663
        %v1675 = vpack.c.b16 %v1666, %v1665
        %v1676 = vpack.c.b16 %v1668, %v1667
        %1685 = vmatprep.subr.bf16.mxu0 0
        %1686 = vmatpush1.bf16.msra.mxu0 %v1669
        %1687 = vmatprep.subr.bf16.mxu0 0
        %1688 = vmatpush1.bf16.msra.mxu0 %v1670
        %1689 = vmatprep.subr.bf16.mxu0 0
        %1690 = vmatpush1.bf16.msra.mxu0 %v1671
        %1691 = vmatprep.subr.bf16.mxu0 0
        %1692 = vmatpush1.bf16.msra.mxu0 %v1672
        %1693 = vmatprep.subr.bf16.mxu0 0
        %1694 = vmatpush1.bf16.msra.mxu0 %v1673
        %1695 = vmatprep.subr.bf16.mxu0 0
        %1696 = vmatpush1.bf16.msra.mxu0 %v1674
        %1697 = vmatprep.subr.bf16.mxu0 0
        %1698 = vmatpush1.bf16.msra.mxu0 %v1675
        %1699 = vmatprep.subr.bf16.mxu0 0
        %1700 = vmatpush1.bf16.msra.mxu0 %v1676
        %1701 = vmatprep.subr.bf16.mxu0 0
        %1702 = vmatpush1.bf16.msra.mxu0 0
        %1703 = vmatprep.subr.bf16.mxu0 0
        %1704 = vmatpush1.bf16.msra.mxu0 0
        %1705 = vmatprep.subr.bf16.mxu0 0
        %1706 = vmatpush1.bf16.msra.mxu0 0
        %1707 = vmatprep.subr.bf16.mxu0 0
        %1708 = vmatpush1.bf16.msra.mxu0 0
        %1709 = vmatprep.subr.bf16.mxu0 0
        %1710 = vmatpush1.bf16.msra.mxu0 0
        %1711 = vmatprep.subr.bf16.mxu0 0
        %1712 = vmatpush1.bf16.msra.mxu0 0
        %1713 = vmatprep.subr.bf16.mxu0 0
        %1714 = vmatpush1.bf16.msra.mxu0 0
        %1715 = vmatprep.subr.bf16.mxu0 0
        %1716 = vmatpush1.bf16.msra.mxu0 0
        %1717 = vmatprep.mubr.bf16.mxu0 0
        %1718 = vmatmul.mubr.bf16.gmra.mrb[0].mxu0 %v1510
        %v1719 = vpop.f32.mrb[0].mxu0
        %v1720 = vadd.f32 %v1631, %v1719
        %v1721 = vpop.f32.mrb[0].mxu0
        %v1722 = vpop.f32.mrb[0].mxu0
        %v1723 = vadd.f32 %v1634, %v1722
        %v1724 = vpop.f32.mrb[0].mxu0
        %1725 = vdwg.mxu0
        %v1726 = vld [vmem:[#allocation2 + $0xa] sm:$0xff]
        %v1727 = vld [vmem:[#allocation2 + $0x12] sm:$0xff]
        %v1728 = vpack.c.bf16 %v1727, %v1726
        %s1729 = scalar_lea.vmem [#allocation8], 320
        %v1730 = vld [vmem:[%s1729] sm:$0xf]
        %v1731 = vld [vmem:[%s1729 + $0x4] sm:$0xf]
        %v1732 = vld [vmem:[%s1729 + $0x8] sm:$0xf]
        %v1733 = vld [vmem:[%s1729 + $0xc] sm:$0xf]
        %v1734 = vld [vmem:[%s1729 + $0x10] sm:$0xf]
        %v1735 = vld [vmem:[%s1729 + $0x14] sm:$0xf]
        %v1736 = vld [vmem:[%s1729 + $0x18] sm:$0xf]
        %v1737 = vld [vmem:[%s1729 + $0x1c] sm:$0xf]
        %v1738 = vld [vmem:[%s1729 + $0x20] sm:$0xf]
        %v1739 = vld [vmem:[%s1729 + $0x24] sm:$0xf]
        %v1740 = vld [vmem:[%s1729 + $0x28] sm:$0xf]
        %v1741 = vld [vmem:[%s1729 + $0x2c] sm:$0xf]
        %v1742 = vld [vmem:[%s1729 + $0x30] sm:$0xf]
        %v1743 = vld [vmem:[%s1729 + $0x34] sm:$0xf]
        %v1744 = vld [vmem:[%s1729 + $0x38] sm:$0xf]
        %v1745 = vld [vmem:[%s1729 + $0x3c] sm:$0xf]
        %v1762 = vunpack.c.l.b16 %v1730
        %v1763 = vunpack.c.l.b16 %v1731
        %v1764 = vunpack.c.l.b16 %v1732
        %v1765 = vunpack.c.l.b16 %v1733
        %v1766 = vunpack.c.l.b16 %v1734
        %v1767 = vunpack.c.l.b16 %v1735
        %v1768 = vunpack.c.l.b16 %v1736
        %v1769 = vunpack.c.l.b16 %v1737
        %v1770 = vunpack.c.l.b16 %v1738
        %v1771 = vunpack.c.l.b16 %v1739
        %v1772 = vunpack.c.l.b16 %v1740
        %v1773 = vunpack.c.l.b16 %v1741
        %v1774 = vunpack.c.l.b16 %v1742
        %v1775 = vunpack.c.l.b16 %v1743
        %v1776 = vunpack.c.l.b16 %v1744
        %v1777 = vunpack.c.l.b16 %v1745
        %v1778 = vpack.c.b16 %v1763, %v1762
        %v1779 = vpack.c.b16 %v1765, %v1764
        %v1780 = vpack.c.b16 %v1767, %v1766
        %v1781 = vpack.c.b16 %v1769, %v1768
        %v1782 = vpack.c.b16 %v1771, %v1770
        %v1783 = vpack.c.b16 %v1773, %v1772
        %v1784 = vpack.c.b16 %v1775, %v1774
        %v1785 = vpack.c.b16 %v1777, %v1776
        %1794 = vmatprep.subr.bf16.mxu0 0
        %1795 = vmatpush1.bf16.msra.mxu0 %v1778
        %1796 = vmatprep.subr.bf16.mxu0 0
        %1797 = vmatpush1.bf16.msra.mxu0 %v1779
        %1798 = vmatprep.subr.bf16.mxu0 0
        %1799 = vmatpush1.bf16.msra.mxu0 %v1780
        %1800 = vmatprep.subr.bf16.mxu0 0
        %1801 = vmatpush1.bf16.msra.mxu0 %v1781
        %1802 = vmatprep.subr.bf16.mxu0 0
        %1803 = vmatpush1.bf16.msra.mxu0 %v1782
        %1804 = vmatprep.subr.bf16.mxu0 0
        %1805 = vmatpush1.bf16.msra.mxu0 %v1783
        %1806 = vmatprep.subr.bf16.mxu0 0
        %1807 = vmatpush1.bf16.msra.mxu0 %v1784
        %1808 = vmatprep.subr.bf16.mxu0 0
        %1809 = vmatpush1.bf16.msra.mxu0 %v1785
        %1810 = vmatprep.subr.bf16.mxu0 0
        %1811 = vmatpush1.bf16.msra.mxu0 0
        %1812 = vmatprep.subr.bf16.mxu0 0
        %1813 = vmatpush1.bf16.msra.mxu0 0
        %1814 = vmatprep.subr.bf16.mxu0 0
        %1815 = vmatpush1.bf16.msra.mxu0 0
        %1816 = vmatprep.subr.bf16.mxu0 0
        %1817 = vmatpush1.bf16.msra.mxu0 0
        %1818 = vmatprep.subr.bf16.mxu0 0
        %1819 = vmatpush1.bf16.msra.mxu0 0
        %1820 = vmatprep.subr.bf16.mxu0 0
        %1821 = vmatpush1.bf16.msra.mxu0 0
        %1822 = vmatprep.subr.bf16.mxu0 0
        %1823 = vmatpush1.bf16.msra.mxu0 0
        %1824 = vmatprep.subr.bf16.mxu0 0
        %1825 = vmatpush1.bf16.msra.mxu0 0
        %1826 = vmatprep.mubr.bf16.mxu0 0
        %1827 = vmatmul.mubr.bf16.gmra.mrb[0].mxu0 %v1728
        %v1828 = vpop.f32.mrb[0].mxu0
        %v1829 = vadd.f32 0.0, %v1828
        %v1830 = vpop.f32.mrb[0].mxu0
        %v1831 = vpop.f32.mrb[0].mxu0
        %v1832 = vadd.f32 0.0, %v1831
        %v1833 = vpop.f32.mrb[0].mxu0
        %1834 = vdwg.mxu0
        %v1835 = vadd.f32 %v1720, %v1829
        %v1836 = vadd.f32 %v1723, %v1832
        %s1837 = scalar_lea.vmem %s4, 1
        %v1838 = vld [vmem:[%s1837] sm:$0x1]
        %v1840 = vlaneseq
        %v1841 = vshrl.u32 %v1840, 7
        %v1842 = vsub.s32 0, %v1841
        %v1843 = vrot.slane %v1838, %v1842
        %v1845 = vadd.f32 %v1835, %v1843
        %v1846 = vadd.f32 %v1836, %v1843
        %vm1847 = vcmp.gt.f32.partialorder %v1845, 0.0
        %vm1848 = vcmp.gt.f32.partialorder %v1846, 0.0
        %v1849 = vmul.f32 %v1845, 0.25
        %v1850 = vmul.f32 %v1846, 0.25
        %v1851 = vsel %vm1847, %v1845, %v1849
        %v1852 = vsel %vm1848, %v1846, %v1850
        %vm1853 = vcmp.gt.f32.partialorder %v1851, 0.0
        %vm1854 = vcmp.gt.f32.partialorder %v1852, 0.0
        %v1855 = vmul.f32 %v1851, 0.25
        %v1856 = vmul.f32 %v1852, 0.25
        %v1857 = vsel %vm1853, %v1851, %v1855
        %v1858 = vsel %vm1854, %v1852, %v1856
        %v1859 = vadd.f32 %v1157, %v1857
        %v1860 = vadd.f32 %v1158, %v1858
        %1861 = vst [vmem:[#allocation2 + $0x8] sm:$0xff] %v1859
        %1862 = vst [vmem:[#allocation2 + $0x10] sm:$0xff] %v1860
        %v1863 = vld [vmem:[#allocation2 + $0x4] sm:$0xff]
        %v1864 = vld [vmem:[#allocation2 + $0xc] sm:$0xff]
        %v1865 = vpack.c.bf16 %v1864, %v1863
        %s1866 = scalar_lea.vmem [#allocation6], 384
        %v1867 = vld [vmem:[%s1866] sm:$0xf]
        %v1868 = vld [vmem:[%s1866 + $0x4] sm:$0xf]
        %v1869 = vld [vmem:[%s1866 + $0x8] sm:$0xf]
        %v1870 = vld [vmem:[%s1866 + $0xc] sm:$0xf]
        %v1871 = vld [vmem:[%s1866 + $0x10] sm:$0xf]
        %v1872 = vld [vmem:[%s1866 + $0x14] sm:$0xf]
        %v1873 = vld [vmem:[%s1866 + $0x18] sm:$0xf]
        %v1874 = vld [vmem:[%s1866 + $0x1c] sm:$0xf]
        %v1875 = vld [vmem:[%s1866 + $0x20] sm:$0xf]
        %v1876 = vld [vmem:[%s1866 + $0x24] sm:$0xf]
        %v1877 = vld [vmem:[%s1866 + $0x28] sm:$0xf]
        %v1878 = vld [vmem:[%s1866 + $0x2c] sm:$0xf]
        %v1879 = vld [vmem:[%s1866 + $0x30] sm:$0xf]
        %v1880 = vld [vmem:[%s1866 + $0x34] sm:$0xf]
        %v1881 = vld [vmem:[%s1866 + $0x38] sm:$0xf]
        %v1882 = vld [vmem:[%s1866 + $0x3c] sm:$0xf]
        %v1883 = vld [vmem:[#allocation2 + $0x8] sm:$0xff]
        %v1884 = vld [vmem:[#allocation2 + $0x10] sm:$0xff]
        %v1885 = vpack.c.bf16 %v1884, %v1883
        %s1886 = scalar_lea.vmem [#allocation6], 448
        %v1887 = vld [vmem:[%s1886] sm:$0xf]
        %v1888 = vld [vmem:[%s1886 + $0x4] sm:$0xf]
        %v1889 = vld [vmem:[%s1886 + $0x8] sm:$0xf]
        %v1890 = vld [vmem:[%s1886 + $0xc] sm:$0xf]
        %v1891 = vld [vmem:[%s1886 + $0x10] sm:$0xf]
        %v1892 = vld [vmem:[%s1886 + $0x14] sm:$0xf]
        %v1893 = vld [vmem:[%s1886 + $0x18] sm:$0xf]
        %v1894 = vld [vmem:[%s1886 + $0x1c] sm:$0xf]
        %v1895 = vld [vmem:[%s1886 + $0x20] sm:$0xf]
        %v1896 = vld [vmem:[%s1886 + $0x24] sm:$0xf]
        %v1897 = vld [vmem:[%s1886 + $0x28] sm:$0xf]
        %v1898 = vld [vmem:[%s1886 + $0x2c] sm:$0xf]
        %v1899 = vld [vmem:[%s1886 + $0x30] sm:$0xf]
        %v1900 = vld [vmem:[%s1886 + $0x34] sm:$0xf]
        %v1901 = vld [vmem:[%s1886 + $0x38] sm:$0xf]
        %v1902 = vld [vmem:[%s1886 + $0x3c] sm:$0xf]
        %v1919 = vunpack.c.l.b16 %v1887
        %v1920 = vunpack.c.l.b16 %v1888
        %v1921 = vunpack.c.l.b16 %v1889
        %v1922 = vunpack.c.l.b16 %v1890
        %v1923 = vunpack.c.l.b16 %v1891
        %v1924 = vunpack.c.l.b16 %v1892
        %v1925 = vunpack.c.l.b16 %v1893
        %v1926 = vunpack.c.l.b16 %v1894
        %v1927 = vunpack.c.l.b16 %v1895
        %v1928 = vunpack.c.l.b16 %v1896
        %v1929 = vunpack.c.l.b16 %v1897
        %v1930 = vunpack.c.l.b16 %v1898
        %v1931 = vunpack.c.l.b16 %v1899
        %v1932 = vunpack.c.l.b16 %v1900
        %v1933 = vunpack.c.l.b16 %v1901
        %v1934 = vunpack.c.l.b16 %v1902
        %v1935 = vpack.c.b16 %v1920, %v1919
        %v1936 = vpack.c.b16 %v1922, %v1921
        %v1937 = vpack.c.b16 %v1924, %v1923
        %v1938 = vpack.c.b16 %v1926, %v1925
        %v1939 = vpack.c.b16 %v1928, %v1927
        %v1940 = vpack.c.b16 %v1930, %v1929
        %v1941 = vpack.c.b16 %v1932, %v1931
        %v1942 = vpack.c.b16 %v1934, %v1933
        %1951 = vmatprep.subr.bf16.mxu0 0
        %1952 = vmatpush1.bf16.msra.mxu0 %v1935
        %1953 = vmatprep.subr.bf16.mxu0 0
        %1954 = vmatpush1.bf16.msra.mxu0 %v1936
        %1955 = vmatprep.subr.bf16.mxu0 0
        %1956 = vmatpush1.bf16.msra.mxu0 %v1937
        %1957 = vmatprep.subr.bf16.mxu0 0
        %1958 = vmatpush1.bf16.msra.mxu0 %v1938
        %1959 = vmatprep.subr.bf16.mxu0 0
        %1960 = vmatpush1.bf16.msra.mxu0 %v1939
        %1961 = vmatprep.subr.bf16.mxu0 0
        %1962 = vmatpush1.bf16.msra.mxu0 %v1940
        %1963 = vmatprep.subr.bf16.mxu0 0
        %1964 = vmatpush1.bf16.msra.mxu0 %v1941
        %1965 = vmatprep.subr.bf16.mxu0 0
        %1966 = vmatpush1.bf16.msra.mxu0 %v1942
        %1967 = vmatprep.subr.bf16.mxu0 0
        %1968 = vmatpush1.bf16.msra.mxu0 0
        %1969 = vmatprep.subr.bf16.mxu0 0
        %1970 = vmatpush1.bf16.msra.mxu0 0
        %1971 = vmatprep.subr.bf16.mxu0 0
        %1972 = vmatpush1.bf16.msra.mxu0 0
        %1973 = vmatprep.subr.bf16.mxu0 0
        %1974 = vmatpush1.bf16.msra.mxu0 0
        %1975 = vmatprep.subr.bf16.mxu0 0
        %1976 = vmatpush1.bf16.msra.mxu0 0
        %1977 = vmatprep.subr.bf16.mxu0 0
        %1978 = vmatpush1.bf16.msra.mxu0 0
        %1979 = vmatprep.subr.bf16.mxu0 0
        %1980 = vmatpush1.bf16.msra.mxu0 0
        %1981 = vmatprep.subr.bf16.mxu0 0
        %1982 = vmatpush1.bf16.msra.mxu0 0
        %1983 = vmatprep.mubr.bf16.mxu0 0
        %1984 = vmatmul.mubr.bf16.gmra.mrb[0].mxu0 %v1885
        %v1985 = vpop.f32.mrb[0].mxu0
        %v1986 = vadd.f32 0.0, %v1985
        %v1987 = vpop.f32.mrb[0].mxu0
        %v1988 = vpop.f32.mrb[0].mxu0
        %v1989 = vadd.f32 0.0, %v1988
        %v1990 = vpop.f32.mrb[0].mxu0
        %1991 = vdwg.mxu0
        %v2008 = vunpack.c.l.b16 %v1867
        %v2009 = vunpack.c.l.b16 %v1868
        %v2010 = vunpack.c.l.b16 %v1869
        %v2011 = vunpack.c.l.b16 %v1870
        %v2012 = vunpack.c.l.b16 %v1871
        %v2013 = vunpack.c.l.b16 %v1872
        %v2014 = vunpack.c.l.b16 %v1873
        %v2015 = vunpack.c.l.b16 %v1874
        %v2016 = vunpack.c.l.b16 %v1875
        %v2017 = vunpack.c.l.b16 %v1876
        %v2018 = vunpack.c.l.b16 %v1877
        %v2019 = vunpack.c.l.b16 %v1878
        %v2020 = vunpack.c.l.b16 %v1879
        %v2021 = vunpack.c.l.b16 %v1880
        %v2022 = vunpack.c.l.b16 %v1881
        %v2023 = vunpack.c.l.b16 %v1882
        %v2024 = vpack.c.b16 %v2009, %v2008
        %v2025 = vpack.c.b16 %v2011, %v2010
        %v2026 = vpack.c.b16 %v2013, %v2012
        %v2027 = vpack.c.b16 %v2015, %v2014
        %v2028 = vpack.c.b16 %v2017, %v2016
        %v2029 = vpack.c.b16 %v2019, %v2018
        %v2030 = vpack.c.b16 %v2021, %v2020
        %v2031 = vpack.c.b16 %v2023, %v2022
        %2040 = vmatprep.subr.bf16.mxu0 0
        %2041 = vmatpush1.bf16.msra.mxu0 %v2024
        %2042 = vmatprep.subr.bf16.mxu0 0
        %2043 = vmatpush1.bf16.msra.mxu0 %v2025
        %2044 = vmatprep.subr.bf16.mxu0 0
        %2045 = vmatpush1.bf16.msra.mxu0 %v2026
        %2046 = vmatprep.subr.bf16.mxu0 0
        %2047 = vmatpush1.bf16.msra.mxu0 %v2027
        %2048 = vmatprep.subr.bf16.mxu0 0
        %2049 = vmatpush1.bf16.msra.mxu0 %v2028
        %2050 = vmatprep.subr.bf16.mxu0 0
        %2051 = vmatpush1.bf16.msra.mxu0 %v2029
        %2052 = vmatprep.subr.bf16.mxu0 0
        %2053 = vmatpush1.bf16.msra.mxu0 %v2030
        %2054 = vmatprep.subr.bf16.mxu0 0
        %2055 = vmatpush1.bf16.msra.mxu0 %v2031
        %2056 = vmatprep.subr.bf16.mxu0 0
        %2057 = vmatpush1.bf16.msra.mxu0 0
        %2058 = vmatprep.subr.bf16.mxu0 0
        %2059 = vmatpush1.bf16.msra.mxu0 0
        %2060 = vmatprep.subr.bf16.mxu0 0
        %2061 = vmatpush1.bf16.msra.mxu0 0
        %2062 = vmatprep.subr.bf16.mxu0 0
        %2063 = vmatpush1.bf16.msra.mxu0 0
        %2064 = vmatprep.subr.bf16.mxu0 0
        %2065 = vmatpush1.bf16.msra.mxu0 0
        %2066 = vmatprep.subr.bf16.mxu0 0
        %2067 = vmatpush1.bf16.msra.mxu0 0
        %2068 = vmatprep.subr.bf16.mxu0 0
        %2069 = vmatpush1.bf16.msra.mxu0 0
        %2070 = vmatprep.subr.bf16.mxu0 0
        %2071 = vmatpush1.bf16.msra.mxu0 0
        %2072 = vmatprep.mubr.bf16.mxu0 0
        %2073 = vmatmul.mubr.bf16.gmra.mrb[0].mxu0 %v1865
        %v2074 = vpop.f32.mrb[0].mxu0
        %v2075 = vadd.f32 %v1986, %v2074
        %v2076 = vpop.f32.mrb[0].mxu0
        %v2077 = vpop.f32.mrb[0].mxu0
        %v2078 = vadd.f32 %v1989, %v2077
        %v2079 = vpop.f32.mrb[0].mxu0
        %2080 = vdwg.mxu0
        %v2081 = vld [vmem:[#allocation2 + $0xc] sm:$0xff]
        %v2082 = vld [vmem:[#allocation2 + $0x14] sm:$0xff]
        %v2083 = vpack.c.bf16 %v2082, %v2081
        %s2084 = scalar_lea.vmem [#allocation6], 512
        %v2085 = vld [vmem:[%s2084] sm:$0xf]
        %v2086 = vld [vmem:[%s2084 + $0x4] sm:$0xf]
        %v2087 = vld [vmem:[%s2084 + $0x8] sm:$0xf]
        %v2088 = vld [vmem:[%s2084 + $0xc] sm:$0xf]
        %v2089 = vld [vmem:[%s2084 + $0x10] sm:$0xf]
        %v2090 = vld [vmem:[%s2084 + $0x14] sm:$0xf]
        %v2091 = vld [vmem:[%s2084 + $0x18] sm:$0xf]
        %v2092 = vld [vmem:[%s2084 + $0x1c] sm:$0xf]
        %v2093 = vld [vmem:[%s2084 + $0x20] sm:$0xf]
        %v2094 = vld [vmem:[%s2084 + $0x24] sm:$0xf]
        %v2095 = vld [vmem:[%s2084 + $0x28] sm:$0xf]
        %v2096 = vld [vmem:[%s2084 + $0x2c] sm:$0xf]
        %v2097 = vld [vmem:[%s2084 + $0x30] sm:$0xf]
        %v2098 = vld [vmem:[%s2084 + $0x34] sm:$0xf]
        %v2099 = vld [vmem:[%s2084 + $0x38] sm:$0xf]
        %v2100 = vld [vmem:[%s2084 + $0x3c] sm:$0xf]
        %v2117 = vunpack.c.l.b16 %v2085
        %v2118 = vunpack.c.l.b16 %v2086
        %v2119 = vunpack.c.l.b16 %v2087
        %v2120 = vunpack.c.l.b16 %v2088
        %v2121 = vunpack.c.l.b16 %v2089
        %v2122 = vunpack.c.l.b16 %v2090
        %v2123 = vunpack.c.l.b16 %v2091
        %v2124 = vunpack.c.l.b16 %v2092
        %v2125 = vunpack.c.l.b16 %v2093
        %v2126 = vunpack.c.l.b16 %v2094
        %v2127 = vunpack.c.l.b16 %v2095
        %v2128 = vunpack.c.l.b16 %v2096
        %v2129 = vunpack.c.l.b16 %v2097
        %v2130 = vunpack.c.l.b16 %v2098
        %v2131 = vunpack.c.l.b16 %v2099
        %v2132 = vunpack.c.l.b16 %v2100
        %v2133 = vpack.c.b16 %v2118, %v2117
        %v2134 = vpack.c.b16 %v2120, %v2119
        %v2135 = vpack.c.b16 %v2122, %v2121
        %v2136 = vpack.c.b16 %v2124, %v2123
        %v2137 = vpack.c.b16 %v2126, %v2125
        %v2138 = vpack.c.b16 %v2128, %v2127
        %v2139 = vpack.c.b16 %v2130, %v2129
        %v2140 = vpack.c.b16 %v2132, %v2131
        %2149 = vmatprep.subr.bf16.mxu0 0
        %2150 = vmatpush1.bf16.msra.mxu0 %v2133
        %2151 = vmatprep.subr.bf16.mxu0 0
        %2152 = vmatpush1.bf16.msra.mxu0 %v2134
        %2153 = vmatprep.subr.bf16.mxu0 0
        %2154 = vmatpush1.bf16.msra.mxu0 %v2135
        %2155 = vmatprep.subr.bf16.mxu0 0
        %2156 = vmatpush1.bf16.msra.mxu0 %v2136
        %2157 = vmatprep.subr.bf16.mxu0 0
        %2158 = vmatpush1.bf16.msra.mxu0 %v2137
        %2159 = vmatprep.subr.bf16.mxu0 0
        %2160 = vmatpush1.bf16.msra.mxu0 %v2138
        %2161 = vmatprep.subr.bf16.mxu0 0
        %2162 = vmatpush1.bf16.msra.mxu0 %v2139
        %2163 = vmatprep.subr.bf16.mxu0 0
        %2164 = vmatpush1.bf16.msra.mxu0 %v2140
        %2165 = vmatprep.subr.bf16.mxu0 0
        %2166 = vmatpush1.bf16.msra.mxu0 0
        %2167 = vmatprep.subr.bf16.mxu0 0
        %2168 = vmatpush1.bf16.msra.mxu0 0
        %2169 = vmatprep.subr.bf16.mxu0 0
        %2170 = vmatpush1.bf16.msra.mxu0 0
        %2171 = vmatprep.subr.bf16.mxu0 0
        %2172 = vmatpush1.bf16.msra.mxu0 0
        %2173 = vmatprep.subr.bf16.mxu0 0
        %2174 = vmatpush1.bf16.msra.mxu0 0
        %2175 = vmatprep.subr.bf16.mxu0 0
        %2176 = vmatpush1.bf16.msra.mxu0 0
        %2177 = vmatprep.subr.bf16.mxu0 0
        %2178 = vmatpush1.bf16.msra.mxu0 0
        %2179 = vmatprep.subr.bf16.mxu0 0
        %2180 = vmatpush1.bf16.msra.mxu0 0
        %2181 = vmatprep.mubr.bf16.mxu0 0
        %2182 = vmatmul.mubr.bf16.gmra.mrb[0].mxu0 %v2083
        %v2183 = vpop.f32.mrb[0].mxu0
        %v2184 = vadd.f32 0.0, %v2183
        %v2185 = vpop.f32.mrb[0].mxu0
        %v2186 = vpop.f32.mrb[0].mxu0
        %v2187 = vadd.f32 0.0, %v2186
        %v2188 = vpop.f32.mrb[0].mxu0
        %2189 = vdwg.mxu0
        %v2190 = vadd.f32 %v2075, %v2184
        %v2191 = vadd.f32 %v2078, %v2187
        %s2192 = scalar_lea.vmem %s3, 2
        %v2193 = vld [vmem:[%s2192] sm:$0x1]
        %v2195 = vlaneseq
        %v2196 = vshrl.u32 %v2195, 7
        %v2197 = vsub.s32 0, %v2196
        %v2198 = vrot.slane %v2193, %v2197
        %v2200 = vadd.f32 %v2190, %v2198
        %v2201 = vadd.f32 %v2191, %v2198
        %vm2202 = vcmp.gt.f32.partialorder %v2200, 0.0
        %vm2203 = vcmp.gt.f32.partialorder %v2201, 0.0
        %v2204 = vmul.f32 %v2200, 0.25
        %v2205 = vmul.f32 %v2201, 0.25
        %v2206 = vsel %vm2202, %v2200, %v2204
        %v2207 = vsel %vm2203, %v2201, %v2205
        %2208 = vst [vmem:[#allocation2 + $0x8] sm:$0xff] %v2206
        %2209 = vst [vmem:[#allocation2 + $0x10] sm:$0xff] %v2207
        %v2210 = vld [vmem:[#allocation2 + $0x4] sm:$0xff]
        %v2211 = vld [vmem:[#allocation2 + $0xc] sm:$0xff]
        %v2212 = vpack.c.bf16 %v2211, %v2210
        %s2213 = scalar_lea.vmem [#allocation8], 384
        %v2214 = vld [vmem:[%s2213] sm:$0xf]
        %v2215 = vld [vmem:[%s2213 + $0x4] sm:$0xf]
        %v2216 = vld [vmem:[%s2213 + $0x8] sm:$0xf]
        %v2217 = vld [vmem:[%s2213 + $0xc] sm:$0xf]
        %v2218 = vld [vmem:[%s2213 + $0x10] sm:$0xf]
        %v2219 = vld [vmem:[%s2213 + $0x14] sm:$0xf]
        %v2220 = vld [vmem:[%s2213 + $0x18] sm:$0xf]
        %v2221 = vld [vmem:[%s2213 + $0x1c] sm:$0xf]
        %v2222 = vld [vmem:[%s2213 + $0x20] sm:$0xf]
        %v2223 = vld [vmem:[%s2213 + $0x24] sm:$0xf]
        %v2224 = vld [vmem:[%s2213 + $0x28] sm:$0xf]
        %v2225 = vld [vmem:[%s2213 + $0x2c] sm:$0xf]
        %v2226 = vld [vmem:[%s2213 + $0x30] sm:$0xf]
        %v2227 = vld [vmem:[%s2213 + $0x34] sm:$0xf]
        %v2228 = vld [vmem:[%s2213 + $0x38] sm:$0xf]
        %v2229 = vld [vmem:[%s2213 + $0x3c] sm:$0xf]
        %v2230 = vld [vmem:[#allocation2 + $0x8] sm:$0xff]
        %v2231 = vld [vmem:[#allocation2 + $0x10] sm:$0xff]
        %v2232 = vpack.c.bf16 %v2231, %v2230
        %s2233 = scalar_lea.vmem [#allocation8], 448
        %v2234 = vld [vmem:[%s2233] sm:$0xf]
        %v2235 = vld [vmem:[%s2233 + $0x4] sm:$0xf]
        %v2236 = vld [vmem:[%s2233 + $0x8] sm:$0xf]
        %v2237 = vld [vmem:[%s2233 + $0xc] sm:$0xf]
        %v2238 = vld [vmem:[%s2233 + $0x10] sm:$0xf]
        %v2239 = vld [vmem:[%s2233 + $0x14] sm:$0xf]
        %v2240 = vld [vmem:[%s2233 + $0x18] sm:$0xf]
        %v2241 = vld [vmem:[%s2233 + $0x1c] sm:$0xf]
        %v2242 = vld [vmem:[%s2233 + $0x20] sm:$0xf]
        %v2243 = vld [vmem:[%s2233 + $0x24] sm:$0xf]
        %v2244 = vld [vmem:[%s2233 + $0x28] sm:$0xf]
        %v2245 = vld [vmem:[%s2233 + $0x2c] sm:$0xf]
        %v2246 = vld [vmem:[%s2233 + $0x30] sm:$0xf]
        %v2247 = vld [vmem:[%s2233 + $0x34] sm:$0xf]
        %v2248 = vld [vmem:[%s2233 + $0x38] sm:$0xf]
        %v2249 = vld [vmem:[%s2233 + $0x3c] sm:$0xf]
        %v2266 = vunpack.c.l.b16 %v2234
        %v2267 = vunpack.c.l.b16 %v2235
        %v2268 = vunpack.c.l.b16 %v2236
        %v2269 = vunpack.c.l.b16 %v2237
        %v2270 = vunpack.c.l.b16 %v2238
        %v2271 = vunpack.c.l.b16 %v2239
        %v2272 = vunpack.c.l.b16 %v2240
        %v2273 = vunpack.c.l.b16 %v2241
        %v2274 = vunpack.c.l.b16 %v2242
        %v2275 = vunpack.c.l.b16 %v2243
        %v2276 = vunpack.c.l.b16 %v2244
        %v2277 = vunpack.c.l.b16 %v2245
        %v2278 = vunpack.c.l.b16 %v2246
        %v2279 = vunpack.c.l.b16 %v2247
        %v2280 = vunpack.c.l.b16 %v2248
        %v2281 = vunpack.c.l.b16 %v2249
        %v2282 = vpack.c.b16 %v2267, %v2266
        %v2283 = vpack.c.b16 %v2269, %v2268
        %v2284 = vpack.c.b16 %v2271, %v2270
        %v2285 = vpack.c.b16 %v2273, %v2272
        %v2286 = vpack.c.b16 %v2275, %v2274
        %v2287 = vpack.c.b16 %v2277, %v2276
        %v2288 = vpack.c.b16 %v2279, %v2278
        %v2289 = vpack.c.b16 %v2281, %v2280
        %2298 = vmatprep.subr.bf16.mxu0 0
        %2299 = vmatpush1.bf16.msra.mxu0 %v2282
        %2300 = vmatprep.subr.bf16.mxu0 0
        %2301 = vmatpush1.bf16.msra.mxu0 %v2283
        %2302 = vmatprep.subr.bf16.mxu0 0
        %2303 = vmatpush1.bf16.msra.mxu0 %v2284
        %2304 = vmatprep.subr.bf16.mxu0 0
        %2305 = vmatpush1.bf16.msra.mxu0 %v2285
        %2306 = vmatprep.subr.bf16.mxu0 0
        %2307 = vmatpush1.bf16.msra.mxu0 %v2286
        %2308 = vmatprep.subr.bf16.mxu0 0
        %2309 = vmatpush1.bf16.msra.mxu0 %v2287
        %2310 = vmatprep.subr.bf16.mxu0 0
        %2311 = vmatpush1.bf16.msra.mxu0 %v2288
        %2312 = vmatprep.subr.bf16.mxu0 0
        %2313 = vmatpush1.bf16.msra.mxu0 %v2289
        %2314 = vmatprep.subr.bf16.mxu0 0
        %2315 = vmatpush1.bf16.msra.mxu0 0
        %2316 = vmatprep.subr.bf16.mxu0 0
        %2317 = vmatpush1.bf16.msra.mxu0 0
        %2318 = vmatprep.subr.bf16.mxu0 0
        %2319 = vmatpush1.bf16.msra.mxu0 0
        %2320 = vmatprep.subr.bf16.mxu0 0
        %2321 = vmatpush1.bf16.msra.mxu0 0
        %2322 = vmatprep.subr.bf16.mxu0 0
        %2323 = vmatpush1.bf16.msra.mxu0 0
        %2324 = vmatprep.subr.bf16.mxu0 0
        %2325 = vmatpush1.bf16.msra.mxu0 0
        %2326 = vmatprep.subr.bf16.mxu0 0
        %2327 = vmatpush1.bf16.msra.mxu0 0
        %2328 = vmatprep.subr.bf16.mxu0 0
        %2329 = vmatpush1.bf16.msra.mxu0 0
        %2330 = vmatprep.mubr.bf16.mxu0 0
        %2331 = vmatmul.mubr.bf16.gmra.mrb[0].mxu0 %v2232
        %v2332 = vpop.f32.mrb[0].mxu0
        %v2333 = vadd.f32 0.0, %v2332
        %v2334 = vpop.f32.mrb[0].mxu0
        %v2335 = vpop.f32.mrb[0].mxu0
        %v2336 = vadd.f32 0.0, %v2335
        %v2337 = vpop.f32.mrb[0].mxu0
        %2338 = vdwg.mxu0
        %v2355 = vunpack.c.l.b16 %v2214
        %v2356 = vunpack.c.l.b16 %v2215
        %v2357 = vunpack.c.l.b16 %v2216
        %v2358 = vunpack.c.l.b16 %v2217
        %v2359 = vunpack.c.l.b16 %v2218
        %v2360 = vunpack.c.l.b16 %v2219
        %v2361 = vunpack.c.l.b16 %v2220
        %v2362 = vunpack.c.l.b16 %v2221
        %v2363 = vunpack.c.l.b16 %v2222
        %v2364 = vunpack.c.l.b16 %v2223
        %v2365 = vunpack.c.l.b16 %v2224
        %v2366 = vunpack.c.l.b16 %v2225
        %v2367 = vunpack.c.l.b16 %v2226
        %v2368 = vunpack.c.l.b16 %v2227
        %v2369 = vunpack.c.l.b16 %v2228
        %v2370 = vunpack.c.l.b16 %v2229
        %v2371 = vpack.c.b16 %v2356, %v2355
        %v2372 = vpack.c.b16 %v2358, %v2357
        %v2373 = vpack.c.b16 %v2360, %v2359
        %v2374 = vpack.c.b16 %v2362, %v2361
        %v2375 = vpack.c.b16 %v2364, %v2363
        %v2376 = vpack.c.b16 %v2366, %v2365
        %v2377 = vpack.c.b16 %v2368, %v2367
        %v2378 = vpack.c.b16 %v2370, %v2369
        %2387 = vmatprep.subr.bf16.mxu0 0
        %2388 = vmatpush1.bf16.msra.mxu0 %v2371
        %2389 = vmatprep.subr.bf16.mxu0 0
        %2390 = vmatpush1.bf16.msra.mxu0 %v2372
        %2391 = vmatprep.subr.bf16.mxu0 0
        %2392 = vmatpush1.bf16.msra.mxu0 %v2373
        %2393 = vmatprep.subr.bf16.mxu0 0
        %2394 = vmatpush1.bf16.msra.mxu0 %v2374
        %2395 = vmatprep.subr.bf16.mxu0 0
        %2396 = vmatpush1.bf16.msra.mxu0 %v2375
        %2397 = vmatprep.subr.bf16.mxu0 0
        %2398 = vmatpush1.bf16.msra.mxu0 %v2376
        %2399 = vmatprep.subr.bf16.mxu0 0
        %2400 = vmatpush1.bf16.msra.mxu0 %v2377
        %2401 = vmatprep.subr.bf16.mxu0 0
        %2402 = vmatpush1.bf16.msra.mxu0 %v2378
        %2403 = vmatprep.subr.bf16.mxu0 0
        %2404 = vmatpush1.bf16.msra.mxu0 0
        %2405 = vmatprep.subr.bf16.mxu0 0
        %2406 = vmatpush1.bf16.msra.mxu0 0
        %2407 = vmatprep.subr.bf16.mxu0 0
        %2408 = vmatpush1.bf16.msra.mxu0 0
        %2409 = vmatprep.subr.bf16.mxu0 0
        %2410 = vmatpush1.bf16.msra.mxu0 0
        %2411 = vmatprep.subr.bf16.mxu0 0
        %2412 = vmatpush1.bf16.msra.mxu0 0
        %2413 = vmatprep.subr.bf16.mxu0 0
        %2414 = vmatpush1.bf16.msra.mxu0 0
        %2415 = vmatprep.subr.bf16.mxu0 0
        %2416 = vmatpush1.bf16.msra.mxu0 0
        %2417 = vmatprep.subr.bf16.mxu0 0
        %2418 = vmatpush1.bf16.msra.mxu0 0
        %2419 = vmatprep.mubr.bf16.mxu0 0
        %2420 = vmatmul.mubr.bf16.gmra.mrb[0].mxu0 %v2212
        %v2421 = vpop.f32.mrb[0].mxu0
        %v2422 = vadd.f32 %v2333, %v2421
        %v2423 = vpop.f32.mrb[0].mxu0
        %v2424 = vpop.f32.mrb[0].mxu0
        %v2425 = vadd.f32 %v2336, %v2424
        %v2426 = vpop.f32.mrb[0].mxu0
        %2427 = vdwg.mxu0
        %v2428 = vld [vmem:[#allocation2 + $0xc] sm:$0xff]
        %v2429 = vld [vmem:[#allocation2 + $0x14] sm:$0xff]
        %v2430 = vpack.c.bf16 %v2429, %v2428
        %s2431 = scalar_lea.vmem [#allocation8], 512
        %v2432 = vld [vmem:[%s2431] sm:$0xf]
        %v2433 = vld [vmem:[%s2431 + $0x4] sm:$0xf]
        %v2434 = vld [vmem:[%s2431 + $0x8] sm:$0xf]
        %v2435 = vld [vmem:[%s2431 + $0xc] sm:$0xf]
        %v2436 = vld [vmem:[%s2431 + $0x10] sm:$0xf]
        %v2437 = vld [vmem:[%s2431 + $0x14] sm:$0xf]
        %v2438 = vld [vmem:[%s2431 + $0x18] sm:$0xf]
        %v2439 = vld [vmem:[%s2431 + $0x1c] sm:$0xf]
        %v2440 = vld [vmem:[%s2431 + $0x20] sm:$0xf]
        %v2441 = vld [vmem:[%s2431 + $0x24] sm:$0xf]
        %v2442 = vld [vmem:[%s2431 + $0x28] sm:$0xf]
        %v2443 = vld [vmem:[%s2431 + $0x2c] sm:$0xf]
        %v2444 = vld [vmem:[%s2431 + $0x30] sm:$0xf]
        %v2445 = vld [vmem:[%s2431 + $0x34] sm:$0xf]
        %v2446 = vld [vmem:[%s2431 + $0x38] sm:$0xf]
        %v2447 = vld [vmem:[%s2431 + $0x3c] sm:$0xf]
        %v2464 = vunpack.c.l.b16 %v2432
        %v2465 = vunpack.c.l.b16 %v2433
        %v2466 = vunpack.c.l.b16 %v2434
        %v2467 = vunpack.c.l.b16 %v2435
        %v2468 = vunpack.c.l.b16 %v2436
        %v2469 = vunpack.c.l.b16 %v2437
        %v2470 = vunpack.c.l.b16 %v2438
        %v2471 = vunpack.c.l.b16 %v2439
        %v2472 = vunpack.c.l.b16 %v2440
        %v2473 = vunpack.c.l.b16 %v2441
        %v2474 = vunpack.c.l.b16 %v2442
        %v2475 = vunpack.c.l.b16 %v2443
        %v2476 = vunpack.c.l.b16 %v2444
        %v2477 = vunpack.c.l.b16 %v2445
        %v2478 = vunpack.c.l.b16 %v2446
        %v2479 = vunpack.c.l.b16 %v2447
        %v2480 = vpack.c.b16 %v2465, %v2464
        %v2481 = vpack.c.b16 %v2467, %v2466
        %v2482 = vpack.c.b16 %v2469, %v2468
        %v2483 = vpack.c.b16 %v2471, %v2470
        %v2484 = vpack.c.b16 %v2473, %v2472
        %v2485 = vpack.c.b16 %v2475, %v2474
        %v2486 = vpack.c.b16 %v2477, %v2476
        %v2487 = vpack.c.b16 %v2479, %v2478
        %2496 = vmatprep.subr.bf16.mxu0 0
        %2497 = vmatpush1.bf16.msra.mxu0 %v2480
        %2498 = vmatprep.subr.bf16.mxu0 0
        %2499 = vmatpush1.bf16.msra.mxu0 %v2481
        %2500 = vmatprep.subr.bf16.mxu0 0
        %2501 = vmatpush1.bf16.msra.mxu0 %v2482
        %2502 = vmatprep.subr.bf16.mxu0 0
        %2503 = vmatpush1.bf16.msra.mxu0 %v2483
        %2504 = vmatprep.subr.bf16.mxu0 0
        %2505 = vmatpush1.bf16.msra.mxu0 %v2484
        %2506 = vmatprep.subr.bf16.mxu0 0
        %2507 = vmatpush1.bf16.msra.mxu0 %v2485
        %2508 = vmatprep.subr.bf16.mxu0 0
        %2509 = vmatpush1.bf16.msra.mxu0 %v2486
        %2510 = vmatprep.subr.bf16.mxu0 0
        %2511 = vmatpush1.bf16.msra.mxu0 %v2487
        %2512 = vmatprep.subr.bf16.mxu0 0
        %2513 = vmatpush1.bf16.msra.mxu0 0
        %2514 = vmatprep.subr.bf16.mxu0 0
        %2515 = vmatpush1.bf16.msra.mxu0 0
        %2516 = vmatprep.subr.bf16.mxu0 0
        %2517 = vmatpush1.bf16.msra.mxu0 0
        %2518 = vmatprep.subr.bf16.mxu0 0
        %2519 = vmatpush1.bf16.msra.mxu0 0
        %2520 = vmatprep.subr.bf16.mxu0 0
        %2521 = vmatpush1.bf16.msra.mxu0 0
        %2522 = vmatprep.subr.bf16.mxu0 0
        %2523 = vmatpush1.bf16.msra.mxu0 0
        %2524 = vmatprep.subr.bf16.mxu0 0
        %2525 = vmatpush1.bf16.msra.mxu0 0
        %2526 = vmatprep.subr.bf16.mxu0 0
        %2527 = vmatpush1.bf16.msra.mxu0 0
        %2528 = vmatprep.mubr.bf16.mxu0 0
        %2529 = vmatmul.mubr.bf16.gmra.mrb[0].mxu0 %v2430
        %v2530 = vpop.f32.mrb[0].mxu0
        %v2531 = vadd.f32 0.0, %v2530
        %v2532 = vpop.f32.mrb[0].mxu0
        %v2533 = vpop.f32.mrb[0].mxu0
        %v2534 = vadd.f32 0.0, %v2533
        %v2535 = vpop.f32.mrb[0].mxu0
        %2536 = vdwg.mxu0
        %v2537 = vadd.f32 %v2422, %v2531
        %v2538 = vadd.f32 %v2425, %v2534
        %s2539 = scalar_lea.vmem %s4, 2
        %v2540 = vld [vmem:[%s2539] sm:$0x1]
        %v2542 = vlaneseq
        %v2543 = vshrl.u32 %v2542, 7
        %v2544 = vsub.s32 0, %v2543
        %v2545 = vrot.slane %v2540, %v2544
        %v2547 = vadd.f32 %v2537, %v2545
        %v2548 = vadd.f32 %v2538, %v2545
        %vm2549 = vcmp.gt.f32.partialorder %v2547, 0.0
        %vm2550 = vcmp.gt.f32.partialorder %v2548, 0.0
        %v2551 = vmul.f32 %v2547, 0.25
        %v2552 = vmul.f32 %v2548, 0.25
        %v2553 = vsel %vm2549, %v2547, %v2551
        %v2554 = vsel %vm2550, %v2548, %v2552
        %vm2555 = vcmp.gt.f32.partialorder %v2553, 0.0
        %vm2556 = vcmp.gt.f32.partialorder %v2554, 0.0
        %v2557 = vmul.f32 %v2553, 0.25
        %v2558 = vmul.f32 %v2554, 0.25
        %v2559 = vsel %vm2555, %v2553, %v2557
        %v2560 = vsel %vm2556, %v2554, %v2558
        %v2561 = vadd.f32 %v1859, %v2559
        %v2562 = vadd.f32 %v1860, %v2560
        %2563 = vst [vmem:[#allocation2 + $0x8] sm:$0xff] %v2561
        %2564 = vst [vmem:[#allocation2 + $0x10] sm:$0xff] %v2562
        %v2565 = vld [vmem:[#allocation2] sm:$0xff]
        %v2566 = vld [vmem:[#allocation2 + $0x8] sm:$0xff]
        %v2567 = vpack.c.bf16 %v2566, %v2565
        %s2568 = scalar_lea.vmem [#allocation6], 576
        %v2569 = vld [vmem:[%s2568] sm:$0xf]
        %v2570 = vld [vmem:[%s2568 + $0x4] sm:$0xf]
        %v2571 = vld [vmem:[%s2568 + $0x8] sm:$0xf]
        %v2572 = vld [vmem:[%s2568 + $0xc] sm:$0xf]
        %v2573 = vld [vmem:[%s2568 + $0x10] sm:$0xf]
        %v2574 = vld [vmem:[%s2568 + $0x14] sm:$0xf]
        %v2575 = vld [vmem:[%s2568 + $0x18] sm:$0xf]
        %v2576 = vld [vmem:[%s2568 + $0x1c] sm:$0xf]
        %v2577 = vld [vmem:[%s2568 + $0x20] sm:$0xf]
        %v2578 = vld [vmem:[%s2568 + $0x24] sm:$0xf]
        %v2579 = vld [vmem:[%s2568 + $0x28] sm:$0xf]
        %v2580 = vld [vmem:[%s2568 + $0x2c] sm:$0xf]
        %v2581 = vld [vmem:[%s2568 + $0x30] sm:$0xf]
        %v2582 = vld [vmem:[%s2568 + $0x34] sm:$0xf]
        %v2583 = vld [vmem:[%s2568 + $0x38] sm:$0xf]
        %v2584 = vld [vmem:[%s2568 + $0x3c] sm:$0xf]
        %v2585 = vld [vmem:[#allocation2 + $0x10] sm:$0xff]
        %v2586 = vpack.c.bf16 %v2585, %v2566
        %s2587 = scalar_lea.vmem [#allocation6], 640
        %v2588 = vld [vmem:[%s2587] sm:$0xf]
        %v2589 = vld [vmem:[%s2587 + $0x4] sm:$0xf]
        %v2590 = vld [vmem:[%s2587 + $0x8] sm:$0xf]
        %v2591 = vld [vmem:[%s2587 + $0xc] sm:$0xf]
        %v2592 = vld [vmem:[%s2587 + $0x10] sm:$0xf]
        %v2593 = vld [vmem:[%s2587 + $0x14] sm:$0xf]
        %v2594 = vld [vmem:[%s2587 + $0x18] sm:$0xf]
        %v2595 = vld [vmem:[%s2587 + $0x1c] sm:$0xf]
        %v2596 = vld [vmem:[%s2587 + $0x20] sm:$0xf]
        %v2597 = vld [vmem:[%s2587 + $0x24] sm:$0xf]
        %v2598 = vld [vmem:[%s2587 + $0x28] sm:$0xf]
        %v2599 = vld [vmem:[%s2587 + $0x2c] sm:$0xf]
        %v2600 = vld [vmem:[%s2587 + $0x30] sm:$0xf]
        %v2601 = vld [vmem:[%s2587 + $0x34] sm:$0xf]
        %v2602 = vld [vmem:[%s2587 + $0x38] sm:$0xf]
        %v2603 = vld [vmem:[%s2587 + $0x3c] sm:$0xf]
        %v2620 = vunpack.c.l.b16 %v2588
        %v2621 = vunpack.c.l.b16 %v2589
        %v2622 = vunpack.c.l.b16 %v2590
        %v2623 = vunpack.c.l.b16 %v2591
        %v2624 = vunpack.c.l.b16 %v2592
        %v2625 = vunpack.c.l.b16 %v2593
        %v2626 = vunpack.c.l.b16 %v2594
        %v2627 = vunpack.c.l.b16 %v2595
        %v2628 = vunpack.c.l.b16 %v2596
        %v2629 = vunpack.c.l.b16 %v2597
        %v2630 = vunpack.c.l.b16 %v2598
        %v2631 = vunpack.c.l.b16 %v2599
        %v2632 = vunpack.c.l.b16 %v2600
        %v2633 = vunpack.c.l.b16 %v2601
        %v2634 = vunpack.c.l.b16 %v2602
        %v2635 = vunpack.c.l.b16 %v2603
        %v2636 = vpack.c.b16 %v2621, %v2620
        %v2637 = vpack.c.b16 %v2623, %v2622
        %v2638 = vpack.c.b16 %v2625, %v2624
        %v2639 = vpack.c.b16 %v2627, %v2626
        %v2640 = vpack.c.b16 %v2629, %v2628
        %v2641 = vpack.c.b16 %v2631, %v2630
        %v2642 = vpack.c.b16 %v2633, %v2632
        %v2643 = vpack.c.b16 %v2635, %v2634
        %2652 = vmatprep.subr.bf16.mxu0 0
        %2653 = vmatpush1.bf16.msra.mxu0 %v2636
        %2654 = vmatprep.subr.bf16.mxu0 0
        %2655 = vmatpush1.bf16.msra.mxu0 %v2637
        %2656 = vmatprep.subr.bf16.mxu0 0
        %2657 = vmatpush1.bf16.msra.mxu0 %v2638
        %2658 = vmatprep.subr.bf16.mxu0 0
        %2659 = vmatpush1.bf16.msra.mxu0 %v2639
        %2660 = vmatprep.subr.bf16.mxu0 0
        %2661 = vmatpush1.bf16.msra.mxu0 %v2640
        %2662 = vmatprep.subr.bf16.mxu0 0
        %2663 = vmatpush1.bf16.msra.mxu0 %v2641
        %2664 = vmatprep.subr.bf16.mxu0 0
        %2665 = vmatpush1.bf16.msra.mxu0 %v2642
        %2666 = vmatprep.subr.bf16.mxu0 0
        %2667 = vmatpush1.bf16.msra.mxu0 %v2643
        %2668 = vmatprep.subr.bf16.mxu0 0
        %2669 = vmatpush1.bf16.msra.mxu0 0
        %2670 = vmatprep.subr.bf16.mxu0 0
        %2671 = vmatpush1.bf16.msra.mxu0 0
        %2672 = vmatprep.subr.bf16.mxu0 0
        %2673 = vmatpush1.bf16.msra.mxu0 0
        %2674 = vmatprep.subr.bf16.mxu0 0
        %2675 = vmatpush1.bf16.msra.mxu0 0
        %2676 = vmatprep.subr.bf16.mxu0 0
        %2677 = vmatpush1.bf16.msra.mxu0 0
        %2678 = vmatprep.subr.bf16.mxu0 0
        %2679 = vmatpush1.bf16.msra.mxu0 0
        %2680 = vmatprep.subr.bf16.mxu0 0
        %2681 = vmatpush1.bf16.msra.mxu0 0
        %2682 = vmatprep.subr.bf16.mxu0 0
        %2683 = vmatpush1.bf16.msra.mxu0 0
        %2684 = vmatprep.mubr.bf16.mxu0 0
        %2685 = vmatmul.mubr.bf16.gmra.mrb[0].mxu0 %v2586
        %v2686 = vpop.f32.mrb[0].mxu0
        %v2687 = vadd.f32 0.0, %v2686
        %v2688 = vpop.f32.mrb[0].mxu0
        %v2689 = vpop.f32.mrb[0].mxu0
        %v2690 = vadd.f32 0.0, %v2689
        %v2691 = vpop.f32.mrb[0].mxu0
        %2692 = vdwg.mxu0
        %v2709 = vunpack.c.l.b16 %v2569
        %v2710 = vunpack.c.l.b16 %v2570
        %v2711 = vunpack.c.l.b16 %v2571
        %v2712 = vunpack.c.l.b16 %v2572
        %v2713 = vunpack.c.l.b16 %v2573
        %v2714 = vunpack.c.l.b16 %v2574
        %v2715 = vunpack.c.l.b16 %v2575
        %v2716 = vunpack.c.l.b16 %v2576
        %v2717 = vunpack.c.l.b16 %v2577
        %v2718 = vunpack.c.l.b16 %v2578
        %v2719 = vunpack.c.l.b16 %v2579
        %v2720 = vunpack.c.l.b16 %v2580
        %v2721 = vunpack.c.l.b16 %v2581
        %v2722 = vunpack.c.l.b16 %v2582
        %v2723 = vunpack.c.l.b16 %v2583
        %v2724 = vunpack.c.l.b16 %v2584
        %v2725 = vpack.c.b16 %v2710, %v2709
        %v2726 = vpack.c.b16 %v2712, %v2711
        %v2727 = vpack.c.b16 %v2714, %v2713
        %v2728 = vpack.c.b16 %v2716, %v2715
        %v2729 = vpack.c.b16 %v2718, %v2717
        %v2730 = vpack.c.b16 %v2720, %v2719
        %v2731 = vpack.c.b16 %v2722, %v2721
        %v2732 = vpack.c.b16 %v2724, %v2723
        %2741 = vmatprep.subr.bf16.mxu0 0
        %2742 = vmatpush1.bf16.msra.mxu0 %v2725
        %2743 = vmatprep.subr.bf16.mxu0 0
        %2744 = vmatpush1.bf16.msra.mxu0 %v2726
        %2745 = vmatprep.subr.bf16.mxu0 0
        %2746 = vmatpush1.bf16.msra.mxu0 %v2727
        %2747 = vmatprep.subr.bf16.mxu0 0
        %2748 = vmatpush1.bf16.msra.mxu0 %v2728
        %2749 = vmatprep.subr.bf16.mxu0 0
        %2750 = vmatpush1.bf16.msra.mxu0 %v2729
        %2751 = vmatprep.subr.bf16.mxu0 0
        %2752 = vmatpush1.bf16.msra.mxu0 %v2730
        %2753 = vmatprep.subr.bf16.mxu0 0
        %2754 = vmatpush1.bf16.msra.mxu0 %v2731
        %2755 = vmatprep.subr.bf16.mxu0 0
        %2756 = vmatpush1.bf16.msra.mxu0 %v2732
        %2757 = vmatprep.subr.bf16.mxu0 0
        %2758 = vmatpush1.bf16.msra.mxu0 0
        %2759 = vmatprep.subr.bf16.mxu0 0
        %2760 = vmatpush1.bf16.msra.mxu0 0
        %2761 = vmatprep.subr.bf16.mxu0 0
        %2762 = vmatpush1.bf16.msra.mxu0 0
        %2763 = vmatprep.subr.bf16.mxu0 0
        %2764 = vmatpush1.bf16.msra.mxu0 0
        %2765 = vmatprep.subr.bf16.mxu0 0
        %2766 = vmatpush1.bf16.msra.mxu0 0
        %2767 = vmatprep.subr.bf16.mxu0 0
        %2768 = vmatpush1.bf16.msra.mxu0 0
        %2769 = vmatprep.subr.bf16.mxu0 0
        %2770 = vmatpush1.bf16.msra.mxu0 0
        %2771 = vmatprep.subr.bf16.mxu0 0
        %2772 = vmatpush1.bf16.msra.mxu0 0
        %2773 = vmatprep.mubr.bf16.mxu0 0
        %2774 = vmatmul.mubr.bf16.gmra.mrb[0].mxu0 %v2567
        %v2775 = vpop.f32.mrb[0].mxu0
        %v2776 = vadd.f32 %v2687, %v2775
        %v2777 = vpop.f32.mrb[0].mxu0
        %v2778 = vpop.f32.mrb[0].mxu0
        %v2779 = vadd.f32 %v2690, %v2778
        %v2780 = vpop.f32.mrb[0].mxu0
        %2781 = vdwg.mxu0
        %v2782 = vld [vmem:[#allocation2 + $0x10] sm:$0xff]
        %v2783 = vld [vmem:[#allocation2 + $0x18] sm:$0xff]
        %v2784 = vpack.c.bf16 %v2783, %v2782
        %s2785 = scalar_lea.vmem [#allocation6], 704
        %v2786 = vld [vmem:[%s2785] sm:$0xf]
        %v2787 = vld [vmem:[%s2785 + $0x4] sm:$0xf]
        %v2788 = vld [vmem:[%s2785 + $0x8] sm:$0xf]
        %v2789 = vld [vmem:[%s2785 + $0xc] sm:$0xf]
        %v2790 = vld [vmem:[%s2785 + $0x10] sm:$0xf]
        %v2791 = vld [vmem:[%s2785 + $0x14] sm:$0xf]
        %v2792 = vld [vmem:[%s2785 + $0x18] sm:$0xf]
        %v2793 = vld [vmem:[%s2785 + $0x1c] sm:$0xf]
        %v2794 = vld [vmem:[%s2785 + $0x20] sm:$0xf]
        %v2795 = vld [vmem:[%s2785 + $0x24] sm:$0xf]
        %v2796 = vld [vmem:[%s2785 + $0x28] sm:$0xf]
        %v2797 = vld [vmem:[%s2785 + $0x2c] sm:$0xf]
        %v2798 = vld [vmem:[%s2785 + $0x30] sm:$0xf]
        %v2799 = vld [vmem:[%s2785 + $0x34] sm:$0xf]
        %v2800 = vld [vmem:[%s2785 + $0x38] sm:$0xf]
        %v2801 = vld [vmem:[%s2785 + $0x3c] sm:$0xf]
        %v2818 = vunpack.c.l.b16 %v2786
        %v2819 = vunpack.c.l.b16 %v2787
        %v2820 = vunpack.c.l.b16 %v2788
        %v2821 = vunpack.c.l.b16 %v2789
        %v2822 = vunpack.c.l.b16 %v2790
        %v2823 = vunpack.c.l.b16 %v2791
        %v2824 = vunpack.c.l.b16 %v2792
        %v2825 = vunpack.c.l.b16 %v2793
        %v2826 = vunpack.c.l.b16 %v2794
        %v2827 = vunpack.c.l.b16 %v2795
        %v2828 = vunpack.c.l.b16 %v2796
        %v2829 = vunpack.c.l.b16 %v2797
        %v2830 = vunpack.c.l.b16 %v2798
        %v2831 = vunpack.c.l.b16 %v2799
        %v2832 = vunpack.c.l.b16 %v2800
        %v2833 = vunpack.c.l.b16 %v2801
        %v2834 = vpack.c.b16 %v2819, %v2818
        %v2835 = vpack.c.b16 %v2821, %v2820
        %v2836 = vpack.c.b16 %v2823, %v2822
        %v2837 = vpack.c.b16 %v2825, %v2824
        %v2838 = vpack.c.b16 %v2827, %v2826
        %v2839 = vpack.c.b16 %v2829, %v2828
        %v2840 = vpack.c.b16 %v2831, %v2830
        %v2841 = vpack.c.b16 %v2833, %v2832
        %2850 = vmatprep.subr.bf16.mxu0 0
        %2851 = vmatpush1.bf16.msra.mxu0 %v2834
        %2852 = vmatprep.subr.bf16.mxu0 0
        %2853 = vmatpush1.bf16.msra.mxu0 %v2835
        %2854 = vmatprep.subr.bf16.mxu0 0
        %2855 = vmatpush1.bf16.msra.mxu0 %v2836
        %2856 = vmatprep.subr.bf16.mxu0 0
        %2857 = vmatpush1.bf16.msra.mxu0 %v2837
        %2858 = vmatprep.subr.bf16.mxu0 0
        %2859 = vmatpush1.bf16.msra.mxu0 %v2838
        %2860 = vmatprep.subr.bf16.mxu0 0
        %2861 = vmatpush1.bf16.msra.mxu0 %v2839
        %2862 = vmatprep.subr.bf16.mxu0 0
        %2863 = vmatpush1.bf16.msra.mxu0 %v2840
        %2864 = vmatprep.subr.bf16.mxu0 0
        %2865 = vmatpush1.bf16.msra.mxu0 %v2841
        %2866 = vmatprep.subr.bf16.mxu0 0
        %2867 = vmatpush1.bf16.msra.mxu0 0
        %2868 = vmatprep.subr.bf16.mxu0 0
        %2869 = vmatpush1.bf16.msra.mxu0 0
        %2870 = vmatprep.subr.bf16.mxu0 0
        %2871 = vmatpush1.bf16.msra.mxu0 0
        %2872 = vmatprep.subr.bf16.mxu0 0
        %2873 = vmatpush1.bf16.msra.mxu0 0
        %2874 = vmatprep.subr.bf16.mxu0 0
        %2875 = vmatpush1.bf16.msra.mxu0 0
        %2876 = vmatprep.subr.bf16.mxu0 0
        %2877 = vmatpush1.bf16.msra.mxu0 0
        %2878 = vmatprep.subr.bf16.mxu0 0
        %2879 = vmatpush1.bf16.msra.mxu0 0
        %2880 = vmatprep.subr.bf16.mxu0 0
        %2881 = vmatpush1.bf16.msra.mxu0 0
        %2882 = vmatprep.mubr.bf16.mxu0 0
        %2883 = vmatmul.mubr.bf16.gmra.mrb[0].mxu0 %v2784
        %v2884 = vpop.f32.mrb[0].mxu0
        %v2885 = vadd.f32 0.0, %v2884
        %v2886 = vpop.f32.mrb[0].mxu0
        %v2887 = vpop.f32.mrb[0].mxu0
        %v2888 = vadd.f32 0.0, %v2887
        %v2889 = vpop.f32.mrb[0].mxu0
        %2890 = vdwg.mxu0
        %v2891 = vadd.f32 %v2776, %v2885
        %v2892 = vadd.f32 %v2779, %v2888
        %s2893 = scalar_lea.vmem %s3, 3
        %v2894 = vld [vmem:[%s2893] sm:$0x1]
        %v2896 = vlaneseq
        %v2897 = vshrl.u32 %v2896, 7
        %v2898 = vsub.s32 0, %v2897
        %v2899 = vrot.slane %v2894, %v2898
        %v2901 = vadd.f32 %v2891, %v2899
        %v2902 = vadd.f32 %v2892, %v2899
        %vm2903 = vcmp.gt.f32.partialorder %v2901, 0.0
        %vm2904 = vcmp.gt.f32.partialorder %v2902, 0.0
        %v2905 = vmul.f32 %v2901, 0.25
        %v2906 = vmul.f32 %v2902, 0.25
        %v2907 = vsel %vm2903, %v2901, %v2905
        %v2908 = vsel %vm2904, %v2902, %v2906
        %2909 = vst [vmem:[#allocation2 + $0x8] sm:$0xff] %v2907
        %2910 = vst [vmem:[#allocation2 + $0x10] sm:$0xff] %v2908
        %v2911 = vld [vmem:[#allocation2] sm:$0xff]
        %v2912 = vld [vmem:[#allocation2 + $0x8] sm:$0xff]
        %v2913 = vpack.c.bf16 %v2912, %v2911
        %s2914 = scalar_lea.vmem [#allocation8], 576
        %v2915 = vld [vmem:[%s2914] sm:$0xf]
        %v2916 = vld [vmem:[%s2914 + $0x4] sm:$0xf]
        %v2917 = vld [vmem:[%s2914 + $0x8] sm:$0xf]
        %v2918 = vld [vmem:[%s2914 + $0xc] sm:$0xf]
        %v2919 = vld [vmem:[%s2914 + $0x10] sm:$0xf]
        %v2920 = vld [vmem:[%s2914 + $0x14] sm:$0xf]
        %v2921 = vld [vmem:[%s2914 + $0x18] sm:$0xf]
        %v2922 = vld [vmem:[%s2914 + $0x1c] sm:$0xf]
        %v2923 = vld [vmem:[%s2914 + $0x20] sm:$0xf]
        %v2924 = vld [vmem:[%s2914 + $0x24] sm:$0xf]
        %v2925 = vld [vmem:[%s2914 + $0x28] sm:$0xf]
        %v2926 = vld [vmem:[%s2914 + $0x2c] sm:$0xf]
        %v2927 = vld [vmem:[%s2914 + $0x30] sm:$0xf]
        %v2928 = vld [vmem:[%s2914 + $0x34] sm:$0xf]
        %v2929 = vld [vmem:[%s2914 + $0x38] sm:$0xf]
        %v2930 = vld [vmem:[%s2914 + $0x3c] sm:$0xf]
        %v2931 = vld [vmem:[#allocation2 + $0x10] sm:$0xff]
        %v2932 = vpack.c.bf16 %v2931, %v2912
        %s2933 = scalar_lea.vmem [#allocation8], 640
        %v2934 = vld [vmem:[%s2933] sm:$0xf]
        %v2935 = vld [vmem:[%s2933 + $0x4] sm:$0xf]
        %v2936 = vld [vmem:[%s2933 + $0x8] sm:$0xf]
        %v2937 = vld [vmem:[%s2933 + $0xc] sm:$0xf]
        %v2938 = vld [vmem:[%s2933 + $0x10] sm:$0xf]
        %v2939 = vld [vmem:[%s2933 + $0x14] sm:$0xf]
        %v2940 = vld [vmem:[%s2933 + $0x18] sm:$0xf]
        %v2941 = vld [vmem:[%s2933 + $0x1c] sm:$0xf]
        %v2942 = vld [vmem:[%s2933 + $0x20] sm:$0xf]
        %v2943 = vld [vmem:[%s2933 + $0x24] sm:$0xf]
        %v2944 = vld [vmem:[%s2933 + $0x28] sm:$0xf]
        %v2945 = vld [vmem:[%s2933 + $0x2c] sm:$0xf]
        %v2946 = vld [vmem:[%s2933 + $0x30] sm:$0xf]
        %v2947 = vld [vmem:[%s2933 + $0x34] sm:$0xf]
        %v2948 = vld [vmem:[%s2933 + $0x38] sm:$0xf]
        %v2949 = vld [vmem:[%s2933 + $0x3c] sm:$0xf]
        %v2966 = vunpack.c.l.b16 %v2934
        %v2967 = vunpack.c.l.b16 %v2935
        %v2968 = vunpack.c.l.b16 %v2936
        %v2969 = vunpack.c.l.b16 %v2937
        %v2970 = vunpack.c.l.b16 %v2938
        %v2971 = vunpack.c.l.b16 %v2939
        %v2972 = vunpack.c.l.b16 %v2940
        %v2973 = vunpack.c.l.b16 %v2941
        %v2974 = vunpack.c.l.b16 %v2942
        %v2975 = vunpack.c.l.b16 %v2943
        %v2976 = vunpack.c.l.b16 %v2944
        %v2977 = vunpack.c.l.b16 %v2945
        %v2978 = vunpack.c.l.b16 %v2946
        %v2979 = vunpack.c.l.b16 %v2947
        %v2980 = vunpack.c.l.b16 %v2948
        %v2981 = vunpack.c.l.b16 %v2949
        %v2982 = vpack.c.b16 %v2967, %v2966
        %v2983 = vpack.c.b16 %v2969, %v2968
        %v2984 = vpack.c.b16 %v2971, %v2970
        %v2985 = vpack.c.b16 %v2973, %v2972
        %v2986 = vpack.c.b16 %v2975, %v2974
        %v2987 = vpack.c.b16 %v2977, %v2976
        %v2988 = vpack.c.b16 %v2979, %v2978
        %v2989 = vpack.c.b16 %v2981, %v2980
        %2998 = vmatprep.subr.bf16.mxu0 0
        %2999 = vmatpush1.bf16.msra.mxu0 %v2982
        %3000 = vmatprep.subr.bf16.mxu0 0
        %3001 = vmatpush1.bf16.msra.mxu0 %v2983
        %3002 = vmatprep.subr.bf16.mxu0 0
        %3003 = vmatpush1.bf16.msra.mxu0 %v2984
        %3004 = vmatprep.subr.bf16.mxu0 0
        %3005 = vmatpush1.bf16.msra.mxu0 %v2985
        %3006 = vmatprep.subr.bf16.mxu0 0
        %3007 = vmatpush1.bf16.msra.mxu0 %v2986
        %3008 = vmatprep.subr.bf16.mxu0 0
        %3009 = vmatpush1.bf16.msra.mxu0 %v2987
        %3010 = vmatprep.subr.bf16.mxu0 0
        %3011 = vmatpush1.bf16.msra.mxu0 %v2988
        %3012 = vmatprep.subr.bf16.mxu0 0
        %3013 = vmatpush1.bf16.msra.mxu0 %v2989
        %3014 = vmatprep.subr.bf16.mxu0 0
        %3015 = vmatpush1.bf16.msra.mxu0 0
        %3016 = vmatprep.subr.bf16.mxu0 0
        %3017 = vmatpush1.bf16.msra.mxu0 0
        %3018 = vmatprep.subr.bf16.mxu0 0
        %3019 = vmatpush1.bf16.msra.mxu0 0
        %3020 = vmatprep.subr.bf16.mxu0 0
        %3021 = vmatpush1.bf16.msra.mxu0 0
        %3022 = vmatprep.subr.bf16.mxu0 0
        %3023 = vmatpush1.bf16.msra.mxu0 0
        %3024 = vmatprep.subr.bf16.mxu0 0
        %3025 = vmatpush1.bf16.msra.mxu0 0
        %3026 = vmatprep.subr.bf16.mxu0 0
        %3027 = vmatpush1.bf16.msra.mxu0 0
        %3028 = vmatprep.subr.bf16.mxu0 0
        %3029 = vmatpush1.bf16.msra.mxu0 0
        %3030 = vmatprep.mubr.bf16.mxu0 0
        %3031 = vmatmul.mubr.bf16.gmra.mrb[0].mxu0 %v2932
        %v3032 = vpop.f32.mrb[0].mxu0
        %v3033 = vadd.f32 0.0, %v3032
        %v3034 = vpop.f32.mrb[0].mxu0
        %v3035 = vpop.f32.mrb[0].mxu0
        %v3036 = vadd.f32 0.0, %v3035
        %v3037 = vpop.f32.mrb[0].mxu0
        %3038 = vdwg.mxu0
        %v3055 = vunpack.c.l.b16 %v2915
        %v3056 = vunpack.c.l.b16 %v2916
        %v3057 = vunpack.c.l.b16 %v2917
        %v3058 = vunpack.c.l.b16 %v2918
        %v3059 = vunpack.c.l.b16 %v2919
        %v3060 = vunpack.c.l.b16 %v2920
        %v3061 = vunpack.c.l.b16 %v2921
        %v3062 = vunpack.c.l.b16 %v2922
        %v3063 = vunpack.c.l.b16 %v2923
        %v3064 = vunpack.c.l.b16 %v2924
        %v3065 = vunpack.c.l.b16 %v2925
        %v3066 = vunpack.c.l.b16 %v2926
        %v3067 = vunpack.c.l.b16 %v2927
        %v3068 = vunpack.c.l.b16 %v2928
        %v3069 = vunpack.c.l.b16 %v2929
        %v3070 = vunpack.c.l.b16 %v2930
        %v3071 = vpack.c.b16 %v3056, %v3055
        %v3072 = vpack.c.b16 %v3058, %v3057
        %v3073 = vpack.c.b16 %v3060, %v3059
        %v3074 = vpack.c.b16 %v3062, %v3061
        %v3075 = vpack.c.b16 %v3064, %v3063
        %v3076 = vpack.c.b16 %v3066, %v3065
        %v3077 = vpack.c.b16 %v3068, %v3067
        %v3078 = vpack.c.b16 %v3070, %v3069
        %3087 = vmatprep.subr.bf16.mxu0 0
        %3088 = vmatpush1.bf16.msra.mxu0 %v3071
        %3089 = vmatprep.subr.bf16.mxu0 0
        %3090 = vmatpush1.bf16.msra.mxu0 %v3072
        %3091 = vmatprep.subr.bf16.mxu0 0
        %3092 = vmatpush1.bf16.msra.mxu0 %v3073
        %3093 = vmatprep.subr.bf16.mxu0 0
        %3094 = vmatpush1.bf16.msra.mxu0 %v3074
        %3095 = vmatprep.subr.bf16.mxu0 0
        %3096 = vmatpush1.bf16.msra.mxu0 %v3075
        %3097 = vmatprep.subr.bf16.mxu0 0
        %3098 = vmatpush1.bf16.msra.mxu0 %v3076
        %3099 = vmatprep.subr.bf16.mxu0 0
        %3100 = vmatpush1.bf16.msra.mxu0 %v3077
        %3101 = vmatprep.subr.bf16.mxu0 0
        %3102 = vmatpush1.bf16.msra.mxu0 %v3078
        %3103 = vmatprep.subr.bf16.mxu0 0
        %3104 = vmatpush1.bf16.msra.mxu0 0
        %3105 = vmatprep.subr.bf16.mxu0 0
        %3106 = vmatpush1.bf16.msra.mxu0 0
        %3107 = vmatprep.subr.bf16.mxu0 0
        %3108 = vmatpush1.bf16.msra.mxu0 0
        %3109 = vmatprep.subr.bf16.mxu0 0
        %3110 = vmatpush1.bf16.msra.mxu0 0
        %3111 = vmatprep.subr.bf16.mxu0 0
        %3112 = vmatpush1.bf16.msra.mxu0 0
        %3113 = vmatprep.subr.bf16.mxu0 0
        %3114 = vmatpush1.bf16.msra.mxu0 0
        %3115 = vmatprep.subr.bf16.mxu0 0
        %3116 = vmatpush1.bf16.msra.mxu0 0
        %3117 = vmatprep.subr.bf16.mxu0 0
        %3118 = vmatpush1.bf16.msra.mxu0 0
        %3119 = vmatprep.mubr.bf16.mxu0 0
        %3120 = vmatmul.mubr.bf16.gmra.mrb[0].mxu0 %v2913
        %v3121 = vpop.f32.mrb[0].mxu0
        %v3122 = vadd.f32 %v3033, %v3121
        %v3123 = vpop.f32.mrb[0].mxu0
        %v3124 = vpop.f32.mrb[0].mxu0
        %v3125 = vadd.f32 %v3036, %v3124
        %v3126 = vpop.f32.mrb[0].mxu0
        %3127 = vdwg.mxu0
        %v3128 = vld [vmem:[#allocation2 + $0x10] sm:$0xff]
        %v3129 = vld [vmem:[#allocation2 + $0x18] sm:$0xff]
        %v3130 = vpack.c.bf16 %v3129, %v3128
        %s3131 = scalar_lea.vmem [#allocation8], 704
        %v3132 = vld [vmem:[%s3131] sm:$0xf]
        %v3133 = vld [vmem:[%s3131 + $0x4] sm:$0xf]
        %v3134 = vld [vmem:[%s3131 + $0x8] sm:$0xf]
        %v3135 = vld [vmem:[%s3131 + $0xc] sm:$0xf]
        %v3136 = vld [vmem:[%s3131 + $0x10] sm:$0xf]
        %v3137 = vld [vmem:[%s3131 + $0x14] sm:$0xf]
        %v3138 = vld [vmem:[%s3131 + $0x18] sm:$0xf]
        %v3139 = vld [vmem:[%s3131 + $0x1c] sm:$0xf]
        %v3140 = vld [vmem:[%s3131 + $0x20] sm:$0xf]
        %v3141 = vld [vmem:[%s3131 + $0x24] sm:$0xf]
        %v3142 = vld [vmem:[%s3131 + $0x28] sm:$0xf]
        %v3143 = vld [vmem:[%s3131 + $0x2c] sm:$0xf]
        %v3144 = vld [vmem:[%s3131 + $0x30] sm:$0xf]
        %v3145 = vld [vmem:[%s3131 + $0x34] sm:$0xf]
        %v3146 = vld [vmem:[%s3131 + $0x38] sm:$0xf]
        %v3147 = vld [vmem:[%s3131 + $0x3c] sm:$0xf]
        %v3164 = vunpack.c.l.b16 %v3132
        %v3165 = vunpack.c.l.b16 %v3133
        %v3166 = vunpack.c.l.b16 %v3134
        %v3167 = vunpack.c.l.b16 %v3135
        %v3168 = vunpack.c.l.b16 %v3136
        %v3169 = vunpack.c.l.b16 %v3137
        %v3170 = vunpack.c.l.b16 %v3138
        %v3171 = vunpack.c.l.b16 %v3139
        %v3172 = vunpack.c.l.b16 %v3140
        %v3173 = vunpack.c.l.b16 %v3141
        %v3174 = vunpack.c.l.b16 %v3142
        %v3175 = vunpack.c.l.b16 %v3143
        %v3176 = vunpack.c.l.b16 %v3144
        %v3177 = vunpack.c.l.b16 %v3145
        %v3178 = vunpack.c.l.b16 %v3146
        %v3179 = vunpack.c.l.b16 %v3147
        %v3180 = vpack.c.b16 %v3165, %v3164
        %v3181 = vpack.c.b16 %v3167, %v3166
        %v3182 = vpack.c.b16 %v3169, %v3168
        %v3183 = vpack.c.b16 %v3171, %v3170
        %v3184 = vpack.c.b16 %v3173, %v3172
        %v3185 = vpack.c.b16 %v3175, %v3174
        %v3186 = vpack.c.b16 %v3177, %v3176
        %v3187 = vpack.c.b16 %v3179, %v3178
        %3196 = vmatprep.subr.bf16.mxu0 0
        %3197 = vmatpush1.bf16.msra.mxu0 %v3180
        %3198 = vmatprep.subr.bf16.mxu0 0
        %3199 = vmatpush1.bf16.msra.mxu0 %v3181
        %3200 = vmatprep.subr.bf16.mxu0 0
        %3201 = vmatpush1.bf16.msra.mxu0 %v3182
        %3202 = vmatprep.subr.bf16.mxu0 0
        %3203 = vmatpush1.bf16.msra.mxu0 %v3183
        %3204 = vmatprep.subr.bf16.mxu0 0
        %3205 = vmatpush1.bf16.msra.mxu0 %v3184
        %3206 = vmatprep.subr.bf16.mxu0 0
        %3207 = vmatpush1.bf16.msra.mxu0 %v3185
        %3208 = vmatprep.subr.bf16.mxu0 0
        %3209 = vmatpush1.bf16.msra.mxu0 %v3186
        %3210 = vmatprep.subr.bf16.mxu0 0
        %3211 = vmatpush1.bf16.msra.mxu0 %v3187
        %3212 = vmatprep.subr.bf16.mxu0 0
        %3213 = vmatpush1.bf16.msra.mxu0 0
        %3214 = vmatprep.subr.bf16.mxu0 0
        %3215 = vmatpush1.bf16.msra.mxu0 0
        %3216 = vmatprep.subr.bf16.mxu0 0
        %3217 = vmatpush1.bf16.msra.mxu0 0
        %3218 = vmatprep.subr.bf16.mxu0 0
        %3219 = vmatpush1.bf16.msra.mxu0 0
        %3220 = vmatprep.subr.bf16.mxu0 0
        %3221 = vmatpush1.bf16.msra.mxu0 0
        %3222 = vmatprep.subr.bf16.mxu0 0
        %3223 = vmatpush1.bf16.msra.mxu0 0
        %3224 = vmatprep.subr.bf16.mxu0 0
        %3225 = vmatpush1.bf16.msra.mxu0 0
        %3226 = vmatprep.subr.bf16.mxu0 0
        %3227 = vmatpush1.bf16.msra.mxu0 0
        %3228 = vmatprep.mubr.bf16.mxu0 0
        %3229 = vmatmul.mubr.bf16.gmra.mrb[0].mxu0 %v3130
        %v3230 = vpop.f32.mrb[0].mxu0
        %v3231 = vadd.f32 0.0, %v3230
        %v3232 = vpop.f32.mrb[0].mxu0
        %v3233 = vpop.f32.mrb[0].mxu0
        %v3234 = vadd.f32 0.0, %v3233
        %v3235 = vpop.f32.mrb[0].mxu0
        %3236 = vdwg.mxu0
        %v3237 = vadd.f32 %v3122, %v3231
        %v3238 = vadd.f32 %v3125, %v3234
        %s3239 = scalar_lea.vmem %s4, 3
        %v3240 = vld [vmem:[%s3239] sm:$0x1]
        %v3242 = vlaneseq
        %v3243 = vshrl.u32 %v3242, 7
        %v3244 = vsub.s32 0, %v3243
        %v3245 = vrot.slane %v3240, %v3244
        %v3247 = vadd.f32 %v3237, %v3245
        %v3248 = vadd.f32 %v3238, %v3245
        %vm3249 = vcmp.gt.f32.partialorder %v3247, 0.0
        %vm3250 = vcmp.gt.f32.partialorder %v3248, 0.0
        %v3251 = vmul.f32 %v3247, 0.25
        %v3252 = vmul.f32 %v3248, 0.25
        %v3253 = vsel %vm3249, %v3247, %v3251
        %v3254 = vsel %vm3250, %v3248, %v3252
        %vm3255 = vcmp.gt.f32.partialorder %v3253, 0.0
        %vm3256 = vcmp.gt.f32.partialorder %v3254, 0.0
        %v3257 = vmul.f32 %v3253, 0.25
        %v3258 = vmul.f32 %v3254, 0.25
        %v3259 = vsel %vm3255, %v3253, %v3257
        %v3260 = vsel %vm3256, %v3254, %v3258
        %v3261 = vadd.f32 %v2561, %v3259
        %v3262 = vadd.f32 %v2562, %v3260
        %3263 = vst [vmem:[%s340] sm:$0xff] %v3261
        %3264 = vst [vmem:[%s340 + $0x8] sm:$0xff] %v3262
        %s3265 = sand.u32 %s186, 1
        %s3266 = scalar_lea.sflag [#allocation5], %s3265
        %s3267 = sand.u32 %s186, 1
        %s3268 = smul.addr %s3267, 16
        %s3269 = scalar_lea.vmem [#allocation11], %s3268
        // Predicated region
        $region65: #{tpu_custom_call.1} parent=47 // pred_check
          %p3270 = pneg %p196
        $region66: #{tpu_custom_call.1} parent=47 // pred_check_branch
          %3272 = sbr.rel (%p3270) target = $region68
        $region67: #{tpu_custom_call.1} parent=47 // pred_region
          %s3274 = ssub.s32 256, 256
          %3275 = vsyncadd %s3266, %s3274
          %s3276 = smul.addr %s26, 2
          %s3277 = smul.addr %s3276, 128
          %s3278 = scalar_lea.hbm %s7, %s3277
          %s3279 = sshll.u32 %s3269, 4
          %s3280 = int_to_ptr.vmem [resolvable:$true] %s3279
          %3285 = dma.vmem_to_hbm [thread:$0]  %s3280, 256, %s3278, %s3266, 128, 128, 8
        $region68: #{tpu_custom_call.1} parent=47 // pred_fallthru
          _
      $region48: #{tpu_custom_call.1} parent=5 // pred_fallthru
        _
      %p3286 = scmp.le.s32.totalorder 2, %s21
      // Predicated region
      $region69: #{tpu_custom_call.1} parent=5 // pred_check
        %p3287 = pneg %p3286
      $region70: #{tpu_custom_call.1} parent=5 // pred_check_branch
        %3289 = sbr.rel (%p3287) target = $region72
      $region71: #{tpu_custom_call.1} parent=5 // pred_region
        %s3290 = ssub.s32 %s21, 2
        // Predicated region
        $region73: #{tpu_custom_call.1} parent=71 // pred_check
          %p3291 = pneg %p202
        $region74: #{tpu_custom_call.1} parent=71 // pred_check_branch
          %3293 = sbr.rel (%p3291) target = $region76
        $region75: #{tpu_custom_call.1} parent=71 // pred_region
          %s3294 = sand.u32 %s187, 1
          %s3295 = scalar_lea.sflag [#allocation5], %s3294
          %s3296 = sand.u32 %s187, 1
          %s3297 = smul.addr %s3296, 16
          %s3298 = scalar_lea.vmem [#allocation11], %s3297
          %3299 = dma.done %s3295, 256
        $region76: #{tpu_custom_call.1} parent=71 // pred_fallthru
          _
      $region72: #{tpu_custom_call.1} parent=5 // pred_fallthru
        _
    $region6: #{tpu_custom_call.1} parent=1 // loop_footer
      %s25 = sadd.s32 1, %s21
    $region7: #{tpu_custom_call.1} parent=1 // loop_footer_branch
      %20 = sbr.rel target = $region3
    $region8: #{tpu_custom_call.1} parent=1 // loop_exit
      _
    %3300 = vsyncpa [#allocation4], 1
    %s3301 = scalar_lea.sflag [#allocation4], 1
    %3302 = vsyncpa %s3301, 1
    %3303 = vsyncpa [#allocation7], 1
    %3304 = vsyncpa [#allocation10], 1
    %3305 = vsyncpa [#allocation5], 1
    %s3306 = scalar_lea.sflag [#allocation5], 1
    %3307 = vsyncpa %s3306, 1

</llo_original>
